<compile_context>
chip_gen: v7x
topology: tpu7x:2x2x1
jax: 0.10.0
libtpu: 0.0.40
codegen_flags: <defaults>
</compile_context>

<pallas_src>
import functools
import math

import jax
import jax.numpy as jnp
from jax.experimental import pallas as pl
from jax.experimental.pallas import tpu as pltpu

EPS = 1e-6
_NEG_INF = jnp.float32(-1e9)


# ----------------------------------------------------------- TPU capability --
@functools.lru_cache(maxsize=None)
def _vmem_limit():
    """Generation-aware scoped-VMEM limit: half of physical, capped at 96 MiB."""
    try:
        cap = pltpu.get_tpu_info().vmem_capacity_bytes
        return int(max(32 * 1024 * 1024, min(96 * 1024 * 1024, cap // 2)))
    except Exception:
        return 64 * 1024 * 1024


_SINGLE_BUFFER_OK = None


def _probe_single_buffering():
    """Check whether pipeline_mode=pl.Buffered(1) is supported on this stack."""
    def k(x_ref, o_ref):
        o_ref[...] = x_ref[...] + 1.0
    try:
        fn = pl.pallas_call(
            k,
            out_shape=jax.ShapeDtypeStruct((16, 128), jnp.float32),
            grid=(2,),
            in_specs=[pl.BlockSpec((8, 128), lambda i: (0, 0),
                                   pipeline_mode=pl.Buffered(1))],
            out_specs=pl.BlockSpec((8, 128), lambda i: (i, 0)),
        )
        jax.block_until_ready(fn(jnp.zeros((16, 128), jnp.float32)))
        return True
    except Exception:
        return False


def _ensure_capabilities():
    global _SINGLE_BUFFER_OK
    if _SINGLE_BUFFER_OK is None:
        _SINGLE_BUFFER_OK = _probe_single_buffering()
    _vmem_limit()  # populate the cache outside of jit tracing


def _const_spec(shape):
    """BlockSpec for grid-invariant blocks (weights / biases / LN params).

    Single-buffered when supported: the block index never changes, so default
    double-buffering only doubles the resident weight footprint (fatal within
    v7x's 64 MiB VMEM at large D/DFF)."""
    index_map = lambda *_: (0,) * len(shape)
    if _SINGLE_BUFFER_OK:
        return pl.BlockSpec(shape, index_map, pipeline_mode=pl.Buffered(1))
    return pl.BlockSpec(shape, index_map)


def _compiler_params(n_parallel_axes):
    return pltpu.CompilerParams(
        dimension_semantics=("parallel",) * n_parallel_axes,
        vmem_limit_bytes=_vmem_limit(),
    )


# ------------------------------------------------------------------- tiling --
def _row_tile(rows, d_model, d_ff):
    """Largest row tile (multiple of 8, <=1024) whose double-buffered f32
    activations fit next to the resident bf16 weights in the VMEM budget."""
    if rows <= 8:
        return rows
    budget = _vmem_limit()
    weight_bytes = 2 * 2 * (d_model * d_ff + d_ff * d_model)   # bf16, 2 bufs worst case
    avail = max(budget - weight_bytes - (4 << 20), 4 << 20)
    per_row = 2 * 2 * d_model * 4 + d_ff * 4 + 2 * d_model * 4  # dbl-buf io + hidden + temps
    tile = int(min(rows, 1024, max(8, avail // per_row)))
    return max(8, (tile // 8) * 8)


def _q_tile(seq_len):
    """Query-row tile for attention: bounds the [tq, Sk] f32 score block and
    gives the (B, Sq-tiles) grid enough parallel steps for two TensorCores."""
    if seq_len <= 512:
        return seq_len          # single tile; block == full dim is always legal
    return 512                  # multiple of 8; trailing partial tile is masked


# ------------------------------------------------------------ in-kernel math --
def _layernorm(x, a, b):
    """Torch-reference LayerNorm: unbiased std (n-1), normalize by (std + eps)."""
    d = x.shape[-1]
    mean = jnp.mean(x, axis=-1, keepdims=True)
    diff = x - mean
    var = jnp.sum(diff * diff, axis=-1, keepdims=True) / (d - 1)
    return a * diff / (jnp.sqrt(var) + EPS) + b


def _mha_ctx(q, k, v, bias, n_heads):
    """Per-head softmax(q k^T + bias) v, heads concatenated to [Sq, D].

    q is pre-scaled by 1/sqrt(dk); bias is the additive mask [Sq, Sk] (f32).
    The output projection is done by the caller as ONE [Sq,D]@[D,D] matmul."""
    d = q.shape[-1]
    dk = d // n_heads
    ctxs = []
    for h in range(n_heads):                       # static unroll, H is small
        lo, hi = h * dk, (h + 1) * dk
        qh = q[:, lo:hi].astype(jnp.bfloat16)
        kh = k[:, lo:hi].astype(jnp.bfloat16)
        vh = v[:, lo:hi].astype(jnp.bfloat16)
        s = jax.lax.dot_general(qh, kh, (((1,), (1,)), ((), ())),
                                preferred_element_type=jnp.float32) + bias
        s = s - jnp.max(s, axis=-1, keepdims=True)
        p = jnp.exp(s)
        p = p * pl.reciprocal(jnp.sum(p, axis=-1, keepdims=True), approx=True)
        ctxs.append(jnp.dot(p.astype(jnp.bfloat16), vh,
                            preferred_element_type=jnp.float32))
    # TODO(synk): a head-major, lane-aligned QKV layout would avoid the
    # sub-128-lane slices above when dk < 128; kept row-major for simplicity.
    return jnp.concatenate(ctxs, axis=-1)          # [Sq, D]


# ----------------------------------------------------------- attention kernel --
def _make_attn_kernel(n_heads, ln_kv):
    """Fused pre-norm attention sublayer (self-attn if ln_kv else cross-attn)."""

    def kernel(xq_ref, src_ref, bias_ref, la_ref, lb_ref, wq_ref, bq_ref,
               wkv_ref, bkv_ref, wo_ref, bo_ref, o_ref):
        xq = xq_ref[0]                             # [tq, D] f32 (query rows)
        src = src_ref[0]                           # [Sk, D] f32 (K/V source)
        d = xq.shape[-1]
        scale = 1.0 / math.sqrt(d // n_heads)
        la, lb = la_ref[...], lb_ref[...]
        yq = _layernorm(xq, la, lb)
        ysrc = _layernorm(src, la, lb) if ln_kv else src     # raw memory for cross
        q = (jnp.dot(yq.astype(jnp.bfloat16), wq_ref[...],
                     preferred_element_type=jnp.float32) + bq_ref[...]) * scale
        kv = jnp.dot(ysrc.astype(jnp.bfloat16), wkv_ref[...],
                     preferred_element_type=jnp.float32) + bkv_ref[...]
        k = kv[:, :d]
        v = kv[:, d:]
        bias = bias_ref[0].astype(jnp.float32)     # [tq, Sk] additive mask
        ctx = _mha_ctx(q, k, v, bias, n_heads)     # [tq, D]
        attn = jnp.dot(ctx.astype(jnp.bfloat16), wo_ref[...],
                       preferred_element_type=jnp.float32) + bo_ref[...]
        o_ref[0] = xq + attn                       # fused residual add
    return kernel


def _attn_sublayer(x, kv_src, bias, p, n_heads, *, ln_kv):
    """x: [B,S,D]; kv_src: [B,Sk,D]; bias: [B,S,Sk] bf16 additive mask."""
    B, S, D = x.shape
    Sk = kv_src.shape[1]
    tq = _q_tile(S)
    grid = (B, pl.cdiv(S, tq))
    return pl.pallas_call(
        _make_attn_kernel(n_heads, ln_kv),
        out_shape=jax.ShapeDtypeStruct((B, S, D), jnp.float32),
        grid=grid,
        in_specs=[
            pl.BlockSpec((1, tq, D), lambda b, q: (b, q, 0)),    # query rows
            pl.BlockSpec((1, Sk, D), lambda b, q: (b, 0, 0)),    # K/V source (full)
            pl.BlockSpec((1, tq, Sk), lambda b, q: (b, q, 0)),   # additive bias (bf16)
            _const_spec((1, D)),         # ln_a
            _const_spec((1, D)),         # ln_b
            _const_spec((D, D)),         # wq   (bf16, [in,out])
            _const_spec((1, D)),         # bq
            _const_spec((D, 2 * D)),     # wkv  (bf16, K|V stacked)
            _const_spec((1, 2 * D)),     # bkv
            _const_spec((D, D)),         # wo   (bf16, flat -> single matmul)
            _const_spec((1, D)),         # bo
        ],
        out_specs=pl.BlockSpec((1, tq, D), lambda b, q: (b, q, 0)),
        compiler_params=_compiler_params(2),
    )(x, kv_src, bias, p['ln_a'], p['ln_b'], p['wq'], p['bq'],
      p['wkv'], p['bkv'], p['wo'], p['bo'])


# ----------------------------------------------------------------- FFN kernel --
def _make_ffn_kernel(fuse_final_norm):
    def body(x, la, lb, w1, b1, w2, b2):
        y = _layernorm(x, la, lb)
        h = jnp.dot(y.astype(jnp.bfloat16), w1,
                    preferred_element_type=jnp.float32) + b1
        h = jnp.maximum(h, 0.0)                                 # ReLU
        out = jnp.dot(h.astype(jnp.bfloat16), w2,
                      preferred_element_type=jnp.float32) + b2
        return x + out                                          # residual

    if fuse_final_norm:
        def kernel(x_ref, la_ref, lb_ref, w1_ref, b1_ref, w2_ref, b2_ref,
                   na_ref, nb_ref, o_ref):
            r = body(x_ref[...], la_ref[...], lb_ref[...], w1_ref[...],
                     b1_ref[...], w2_ref[...], b2_ref[...])
            o_ref[...] = _layernorm(r, na_ref[...], nb_ref[...])
        return kernel

    def kernel(x_ref, la_ref, lb_ref, w1_ref, b1_ref, w2_ref, b2_ref, o_ref):
        o_ref[...] = body(x_ref[...], la_ref[...], lb_ref[...], w1_ref[...],
                          b1_ref[...], w2_ref[...], b2_ref[...])
    return kernel


def _ffn_sublayer(x2d, p, final_norm=None):
    R, D = x2d.shape
    DFF = p['w1'].shape[1]
    tile = _row_tile(R, D, DFF)
    fuse = final_norm is not None
    in_specs = [
        pl.BlockSpec((tile, D), lambda i: (i, 0)),
        _const_spec((1, D)), _const_spec((1, D)),
        _const_spec((D, DFF)), _const_spec((1, DFF)),
        _const_spec((DFF, D)), _const_spec((1, D)),
    ]
    args = [x2d, p['ln_a'], p['ln_b'], p['w1'], p['b1'], p['w2'], p['b2']]
    if fuse:
        in_specs += [_const_spec((1, D)), _const_spec((1, D))]
        args += [final_norm[0], final_norm[1]]
    return pl.pallas_call(
        _make_ffn_kernel(fuse),
        out_shape=jax.ShapeDtypeStruct((R, D), jnp.float32),
        grid=(pl.cdiv(R, tile),),
        in_specs=in_specs,
        out_specs=pl.BlockSpec((tile, D), lambda i: (i, 0)),
        compiler_params=_compiler_params(1),
    )(*args)


# ------------------------------------------------- standalone final LayerNorm --
def _final_norm_kernel(x_ref, a_ref, b_ref, o_ref):
    o_ref[...] = _layernorm(x_ref[...], a_ref[...], b_ref[...])


def _final_norm(x2d, a, b):
    R, D = x2d.shape
    tile = _row_tile(R, D, D)
    return pl.pallas_call(
        _final_norm_kernel,
        out_shape=jax.ShapeDtypeStruct((R, D), jnp.float32),
        grid=(pl.cdiv(R, tile),),
        in_specs=[pl.BlockSpec((tile, D), lambda i: (i, 0)),
                  _const_spec((1, D)), _const_spec((1, D))],
        out_specs=pl.BlockSpec((tile, D), lambda i: (i, 0)),
        compiler_params=_compiler_params(1),
    )(x2d, a, b)


# ------------------------------------------------------------------ Decoder --
@functools.partial(jax.jit, static_argnames=("n_heads",))
def _decoder_forward_jit(x, memory, src_mask, tgt_mask, params, *, n_heads):
    B, S, D = x.shape
    # Masks -> bf16 additive biases ONCE (shared by all N layers): halves mask
    # HBM traffic and removes the per-head compare+select inside the kernels.
    tgt_bias = jnp.where(tgt_mask == 0, _NEG_INF, jnp.float32(0.0)).astype(jnp.bfloat16)
    src_bias = jnp.where(src_mask == 0, _NEG_INF, jnp.float32(0.0)).astype(jnp.bfloat16)

    layers = params['layers']
    final = (params['norm_a'], params['norm_b'])
    n_layers = len(layers)
    for li, lp in enumerate(layers):
        x = _attn_sublayer(x, x, tgt_bias, lp['self_attn'], n_heads, ln_kv=True)
        x = _attn_sublayer(x, memory, src_bias, lp['cross_attn'], n_heads, ln_kv=False)
        fuse = final if li == n_layers - 1 else None   # fuse final LN into last FFN
        x = _ffn_sublayer(x.reshape(B * S, D), lp['ffn'], fuse).reshape(B, S, D)
    if n_layers == 0:
        x = _final_norm(x.reshape(B * S, D), *final).reshape(B, S, D)
    return x


def decoder_forward(x, memory, src_mask, tgt_mask, params, *, n_heads):
    """x: [B,S,D]; memory: [B,Sm,D]; masks: [B,S_q,S_k] (1 = keep, 0 = mask)."""
    # TODO(synk): for very long sequences on v7x (64 MiB VMEM) a flash-style
    # Sk-tiled inner loop is needed so the [tq, Sk] score block stays bounded.
    _ensure_capabilities()   # probe Buffered(1) & VMEM size outside of tracing
    return _decoder_forward_jit(x, memory, src_mask, tgt_mask, params,
                                n_heads=n_heads)


# --------------------------------------------------------------- param init --
def init_params(key, d_model, d_ff, n_heads, n_layers):
    del n_heads  # head count is a static argument of decoder_forward

    def dense(k, out_dim, in_dim):
        # nn.Linear convention: W is [out, in], y = x @ W^T + b
        w = jax.random.normal(k, (out_dim, in_dim), jnp.float32) * 0.02
        b = jnp.zeros((out_dim,), jnp.float32)
        return w, b

    def ln():
        return (jnp.ones((1, d_model), jnp.float32),
                jnp.zeros((1, d_model), jnp.float32))

    def attn(ks):
        wq, bq = dense(ks[0], d_model, d_model)
        wk, bk = dense(ks[1], d_model, d_model)
        wv, bv = dense(ks[2], d_model, d_model)
        wo, bo = dense(ks[3], d_model, d_model)
        a, b = ln()
        return dict(
            ln_a=a, ln_b=b,
            wq=wq.T.astype(jnp.bfloat16), bq=bq.reshape(1, -1),
            wkv=jnp.concatenate([wk, wv], axis=0).T.astype(jnp.bfloat16),
            bkv=jnp.concatenate([bk, bv]).reshape(1, -1),
            wo=wo.T.astype(jnp.bfloat16),       # flat [D, D] -> single matmul
            bo=bo.reshape(1, -1),
        )

    layers = []
    for i in range(n_layers):
        ks = jax.random.split(jax.random.fold_in(key, i), 10)
        w1, b1 = dense(ks[8], d_ff, d_model)
        w2, b2 = dense(ks[9], d_model, d_ff)
        a3, b3 = ln()
        layers.append({
            'self_attn': attn(ks[0:4]),
            'cross_attn': attn(ks[4:8]),
            'ffn': dict(ln_a=a3, ln_b=b3,
                        w1=w1.T.astype(jnp.bfloat16), b1=b1.reshape(1, -1),
                        w2=w2.T.astype(jnp.bfloat16), b2=b2.reshape(1, -1)),
        })
    return {'layers': layers,
            'norm_a': jnp.ones((1, d_model), jnp.float32),
            'norm_b': jnp.zeros((1, d_model), jnp.float32)}


if __name__ == "__main__":
    B, S_TGT, S_SRC, D, H, D_FF, N = 2, 8, 16, 32, 4, 64, 2

    key = jax.random.PRNGKey(0)
    k_x, k_m, k_p = jax.random.split(key, 3)

    x = jax.random.normal(k_x, (B, S_TGT, D), jnp.float32)        # decoder input
    memory = jax.random.normal(k_m, (B, S_SRC, D), jnp.float32)   # encoder output

    # tgt mask: causal AND target padding (last position of batch 1 is padding)
    tgt_valid = jnp.ones((B, S_TGT), jnp.float32).at[1, S_TGT - 1:].set(0.0)
    causal = jnp.tril(jnp.ones((S_TGT, S_TGT), jnp.float32))
    tgt_mask = causal[None, :, :] * tgt_valid[:, None, :]         # [B, Sq, Sq]

    # src mask: source padding (last 3 positions of batch 1 are padding)
    src_valid = jnp.ones((B, S_SRC), jnp.float32).at[1, S_SRC - 3:].set(0.0)
    src_mask = jnp.broadcast_to(src_valid[:, None, :], (B, S_TGT, S_SRC))

    params = init_params(k_p, D, D_FF, H, N)

    out = decoder_forward(x, memory, src_mask, tgt_mask, params, n_heads=H)
    jax.block_until_ready(out)

    assert out.shape == (B, S_TGT, D) and out.dtype == jnp.float32
    assert bool(jnp.all(jnp.isfinite(out)))
    print("KERNEL_OK")
</pallas_src>

<mosaic_0001>
module attributes {stable_mosaic.version = 11 : i64} {
  func.func @k(%arg0: i32, %arg1: memref<8x128xf32, #tpu.memory_space<vmem>>, %arg2: memref<8x128xf32, #tpu.memory_space<vmem>>) attributes {dimension_semantics = [#tpu.dimension_semantics<arbitrary>], iteration_bounds = array<i64: 2>, scalar_prefetch = 0 : i64, scratch_operands = 0 : i64, tpu.core_type = #tpu.core_type<tc>, window_params = [{pipeline_mode = #tpu.pipeline_mode<synchronous>, transform_indices = @transform_0, window_bounds = array<i64: 8, 128>}, {transform_indices = @transform_1, window_bounds = array<i64: 8, 128>}]} {
    %c0 = arith.constant 0 : index
    %c0_0 = arith.constant 0 : index
    %0 = vector.load %arg1[%c0, %c0_0] : memref<8x128xf32, #tpu.memory_space<vmem>>, vector<8x128xf32>
    %cst = arith.constant 1.000000e+00 : f32
    %1 = vector.broadcast %cst : f32 to vector<8x128xf32>
    %2 = arith.addf %0, %1 : vector<8x128xf32>
    %c0_1 = arith.constant 0 : index
    %c0_2 = arith.constant 0 : index
    %3 = vector.load %arg2[%c0_1, %c0_2] : memref<8x128xf32, #tpu.memory_space<vmem>>, vector<8x128xf32>
    tpu.vector_store %arg2[%c0_1, %c0_2], %2 {strides = array<i32>} : memref<8x128xf32, #tpu.memory_space<vmem>>, vector<8x128xf32>,
    return
  }
  func.func @transform_0(%arg0: i32) -> (i32, i32) {
    %c0_i32 = arith.constant 0 : i32
    %c0_i32_0 = arith.constant 0 : i32
    %c0_i32_1 = arith.constant 0 : i32
    return %c0_i32, %c0_i32_0 : i32, i32
  }
  func.func @transform_1(%arg0: i32) -> (i32, i32) {
    %c0_i32 = arith.constant 0 : i32
    %c0_i32_0 = arith.constant 0 : i32
    return %arg0, %c0_i32 : i32, i32
  }
}

module attributes {stable_mosaic.version = 11 : i64} {
  func.func @kernel(%arg0: i32, %arg1: i32, %arg2: memref<1x8x32xf32, #tpu.memory_space<vmem>>, %arg3: memref<1x16x32xf32, #tpu.memory_space<vmem>>, %arg4: memref<1x8x16xbf16, #tpu.memory_space<vmem>>, %arg5: memref<1x32xf32, #tpu.memory_space<vmem>>, %arg6: memref<1x32xf32, #tpu.memory_space<vmem>>, %arg7: memref<32x32xbf16, #tpu.memory_space<vmem>>, %arg8: memref<1x32xf32, #tpu.memory_space<vmem>>, %arg9: memref<32x64xbf16, #tpu.memory_space<vmem>>, %arg10: memref<1x64xf32, #tpu.memory_space<vmem>>, %arg11: memref<32x32xbf16, #tpu.memory_space<vmem>>, %arg12: memref<1x32xf32, #tpu.memory_space<vmem>>, %arg13: memref<1x8x32xf32, #tpu.memory_space<vmem>>) attributes {dimension_semantics = [#tpu.dimension_semantics<parallel>, #tpu.dimension_semantics<parallel>], iteration_bounds = array<i64: 2, 1>, scalar_prefetch = 0 : i64, scratch_operands = 0 : i64, tpu.core_type = #tpu.core_type<tc>, window_params = [{transform_indices = @transform_0, window_bounds = array<i64: 1, 8, 32>}, {transform_indices = @transform_1, window_bounds = array<i64: 1, 16, 32>}, {transform_indices = @transform_2, window_bounds = array<i64: 1, 8, 16>}, {pipeline_mode = #tpu.pipeline_mode<synchronous>, transform_indices = @transform_3, window_bounds = array<i64: 1, 32>}, {pipeline_mode = #tpu.pipeline_mode<synchronous>, transform_indices = @transform_4, window_bounds = array<i64: 1, 32>}, {pipeline_mode = #tpu.pipeline_mode<synchronous>, transform_indices = @transform_5, window_bounds = array<i64: 32, 32>}, {pipeline_mode = #tpu.pipeline_mode<synchronous>, transform_indices = @transform_6, window_bounds = array<i64: 1, 32>}, {pipeline_mode = #tpu.pipeline_mode<synchronous>, transform_indices = @transform_7, window_bounds = array<i64: 32, 64>}, {pipeline_mode = #tpu.pipeline_mode<synchronous>, transform_indices = @transform_8, window_bounds = array<i64: 1, 64>}, {pipeline_mode = #tpu.pipeline_mode<synchronous>, transform_indices = @transform_9, window_bounds = array<i64: 32, 32>}, {pipeline_mode = #tpu.pipeline_mode<synchronous>, transform_indices = @transform_10, window_bounds = array<i64: 1, 32>}, {transform_indices = @transform_11, window_bounds = array<i64: 1, 8, 32>}]} {
    %c0 = arith.constant 0 : index
    %c0_0 = arith.constant 0 : index
    %c0_1 = arith.constant 0 : index
    %0 = vector.load %arg2[%c0, %c0_0, %c0_1] : memref<1x8x32xf32, #tpu.memory_space<vmem>>, vector<1x8x32xf32>
    %1 = vector.shape_cast %0 : vector<1x8x32xf32> to vector<8x32xf32>
    %c0_2 = arith.constant 0 : index
    %c0_3 = arith.constant 0 : index
    %c0_4 = arith.constant 0 : index
    %2 = vector.load %arg3[%c0_2, %c0_3, %c0_4] : memref<1x16x32xf32, #tpu.memory_space<vmem>>, vector<1x16x32xf32>
    %3 = vector.shape_cast %2 : vector<1x16x32xf32> to vector<16x32xf32>
    %c0_5 = arith.constant 0 : index
    %c0_6 = arith.constant 0 : index
    %4 = vector.load %arg5[%c0_5, %c0_6] : memref<1x32xf32, #tpu.memory_space<vmem>>, vector<1x32xf32>
    %c0_7 = arith.constant 0 : index
    %c0_8 = arith.constant 0 : index
    %5 = vector.load %arg6[%c0_7, %c0_8] : memref<1x32xf32, #tpu.memory_space<vmem>>, vector<1x32xf32>
    %cst = arith.constant dense<0.000000e+00> : vector<8xf32>
    %6 = vector.multi_reduction <add>, %1, %cst [1] : vector<8x32xf32> to vector<8xf32>
    %7 = vector.shape_cast %6 : vector<8xf32> to vector<8x1xf32>
    %cst_9 = arith.constant 3.200000e+01 : f32
    %8 = vector.broadcast %cst_9 : f32 to vector<8x1xf32>
    %9 = arith.divf %7, %8 : vector<8x1xf32>
    %10 = vector.broadcast %9 : vector<8x1xf32> to vector<8x32xf32>
    %11 = arith.subf %1, %10 : vector<8x32xf32>
    %12 = arith.mulf %11, %11 : vector<8x32xf32>
    %cst_10 = arith.constant dense<0.000000e+00> : vector<8xf32>
    %13 = vector.multi_reduction <add>, %12, %cst_10 [1] : vector<8x32xf32> to vector<8xf32>
    %14 = vector.shape_cast %13 : vector<8xf32> to vector<8x1xf32>
    %cst_11 = arith.constant 3.100000e+01 : f32
    %15 = vector.broadcast %cst_11 : f32 to vector<8x1xf32>
    %16 = arith.divf %14, %15 : vector<8x1xf32>
    %17 = vector.broadcast %4 : vector<1x32xf32> to vector<8x32xf32>
    %18 = arith.mulf %17, %11 : vector<8x32xf32>
    %19 = math.sqrt %16 : vector<8x1xf32>
    %cst_12 = arith.constant 9.99999997E-7 : f32
    %20 = vector.broadcast %cst_12 : f32 to vector<8x1xf32>
    %21 = arith.addf %19, %20 : vector<8x1xf32>
    %22 = vector.broadcast %21 : vector<8x1xf32> to vector<8x32xf32>
    %23 = arith.divf %18, %22 : vector<8x32xf32>
    %24 = vector.broadcast %5 : vector<1x32xf32> to vector<8x32xf32>
    %25 = arith.addf %23, %24 : vector<8x32xf32>
    %26 = arith.truncf %25 : vector<8x32xf32> to vector<8x32xbf16>
    %c0_13 = arith.constant 0 : index
    %c0_14 = arith.constant 0 : index
    %27 = vector.load %arg7[%c0_13, %c0_14] : memref<32x32xbf16, #tpu.memory_space<vmem>>, vector<32x32xbf16>
    %cst_15 = arith.constant dense<0.000000e+00> : vector<8x32xf32>
    %28 = tpu.matmul %26, %27, %cst_15 {dimension_numbers = #tpu.dot_dimension_numbers<[1], [0], [0], [1], [0, 0, 1, 1], [], []>} : vector<8x32xbf16>, vector<32x32xbf16>, vector<8x32xf32> -> vector<8x32xf32>
    %c0_16 = arith.constant 0 : index
    %c0_17 = arith.constant 0 : index
    %29 = vector.load %arg8[%c0_16, %c0_17] : memref<1x32xf32, #tpu.memory_space<vmem>>, vector<1x32xf32>
    %30 = vector.broadcast %29 : vector<1x32xf32> to vector<8x32xf32>
    %31 = arith.addf %28, %30 : vector<8x32xf32>
    %cst_18 = arith.constant 0.353553385 : f32
    %32 = vector.broadcast %cst_18 : f32 to vector<8x32xf32>
    %33 = arith.mulf %31, %32 : vector<8x32xf32>
    %34 = arith.truncf %3 : vector<16x32xf32> to vector<16x32xbf16>
    %c0_19 = arith.constant 0 : index
    %c0_20 = arith.constant 0 : index
    %35 = vector.load %arg9[%c0_19, %c0_20] : memref<32x64xbf16, #tpu.memory_space<vmem>>, vector<32x64xbf16>
    %cst_21 = arith.constant dense<0.000000e+00> : vector<16x64xf32>
    %36 = tpu.matmul %34, %35, %cst_21 {dimension_numbers = #tpu.dot_dimension_numbers<[1], [0], [0], [1], [0, 0, 1, 1], [], []>} : vector<16x32xbf16>, vector<32x64xbf16>, vector<16x64xf32> -> vector<16x64xf32>
    %c0_22 = arith.constant 0 : index
    %c0_23 = arith.constant 0 : index
    %37 = vector.load %arg10[%c0_22, %c0_23] : memref<1x64xf32, #tpu.memory_space<vmem>>, vector<1x64xf32>
    %38 = vector.broadcast %37 : vector<1x64xf32> to vector<16x64xf32>
    %39 = arith.addf %36, %38 : vector<16x64xf32>
    %40 = vector.extract_strided_slice %39 {offsets = [0, 0], sizes = [16, 32], strides = [1, 1]} : vector<16x64xf32> to vector<16x32xf32>
    %41 = vector.extract_strided_slice %39 {offsets = [0, 32], sizes = [16, 32], strides = [1, 1]} : vector<16x64xf32> to vector<16x32xf32>
    %c0_24 = arith.constant 0 : index
    %c0_25 = arith.constant 0 : index
    %c0_26 = arith.constant 0 : index
    %42 = vector.load %arg4[%c0_24, %c0_25, %c0_26] : memref<1x8x16xbf16, #tpu.memory_space<vmem>>, vector<1x8x16xbf16>
    %43 = vector.shape_cast %42 : vector<1x8x16xbf16> to vector<8x16xbf16>
    %44 = arith.extf %43 : vector<8x16xbf16> to vector<8x16xf32>
    %45 = vector.extract_strided_slice %33 {offsets = [0, 0], sizes = [8, 8], strides = [1, 1]} : vector<8x32xf32> to vector<8x8xf32>
    %46 = arith.truncf %45 : vector<8x8xf32> to vector<8x8xbf16>
    %47 = vector.extract_strided_slice %40 {offsets = [0, 0], sizes = [16, 8], strides = [1, 1]} : vector<16x32xf32> to vector<16x8xf32>
    %48 = arith.truncf %47 : vector<16x8xf32> to vector<16x8xbf16>
    %49 = vector.extract_strided_slice %41 {offsets = [0, 0], sizes = [16, 8], strides = [1, 1]} : vector<16x32xf32> to vector<16x8xf32>
    %50 = arith.truncf %49 : vector<16x8xf32> to vector<16x8xbf16>
    %cst_27 = arith.constant dense<0.000000e+00> : vector<8x16xf32>
    %51 = tpu.matmul %46, %48, %cst_27 {dimension_numbers = #tpu.dot_dimension_numbers<[1], [1], [0], [0], [0, 0, 1, 0], [], []>} : vector<8x8xbf16>, vector<16x8xbf16>, vector<8x16xf32> -> vector<8x16xf32>
    %52 = arith.addf %51, %44 : vector<8x16xf32>
    %cst_28 = arith.constant dense<0xFF800000> : vector<8xf32>
    %53 = vector.multi_reduction <maximumf>, %52, %cst_28 [1] : vector<8x16xf32> to vector<8xf32>
    %54 = vector.shape_cast %53 : vector<8xf32> to vector<8x1xf32>
    %55 = vector.broadcast %54 : vector<8x1xf32> to vector<8x16xf32>
    %56 = arith.subf %52, %55 : vector<8x16xf32>
    %57 = math.exp %56 : vector<8x16xf32>
    %cst_29 = arith.constant dense<0.000000e+00> : vector<8xf32>
    %58 = vector.multi_reduction <add>, %57, %cst_29 [1] : vector<8x16xf32> to vector<8xf32>
    %59 = vector.shape_cast %58 : vector<8xf32> to vector<8x1xf32>
    %60 = tpu.reciprocal %59 {approx = true} : vector<8x1xf32> -> vector<8x1xf32>
    %61 = vector.broadcast %60 : vector<8x1xf32> to vector<8x16xf32>
    %62 = arith.mulf %57, %61 : vector<8x16xf32>
    %63 = arith.truncf %62 : vector<8x16xf32> to vector<8x16xbf16>
    %cst_30 = arith.constant dense<0.000000e+00> : vector<8x8xf32>
    %64 = tpu.matmul %63, %50, %cst_30 {dimension_numbers = #tpu.dot_dimension_numbers<[1], [0], [0], [1], [0, 0, 1, 1], [], []>} : vector<8x16xbf16>, vector<16x8xbf16>, vector<8x8xf32> -> vector<8x8xf32>
    %65 = vector.extract_strided_slice %33 {offsets = [0, 8], sizes = [8, 8], strides = [1, 1]} : vector<8x32xf32> to vector<8x8xf32>
    %66 = arith.truncf %65 : vector<8x8xf32> to vector<8x8xbf16>
    %67 = vector.extract_strided_slice %40 {offsets = [0, 8], sizes = [16, 8], strides = [1, 1]} : vector<16x32xf32> to vector<16x8xf32>
    %68 = arith.truncf %67 : vector<16x8xf32> to vector<16x8xbf16>
    %69 = vector.extract_strided_slice %41 {offsets = [0, 8], sizes = [16, 8], strides = [1, 1]} : vector<16x32xf32> to vector<16x8xf32>
    %70 = arith.truncf %69 : vector<16x8xf32> to vector<16x8xbf16>
    %cst_31 = arith.constant dense<0.000000e+00> : vector<8x16xf32>
    %71 = tpu.matmul %66, %68, %cst_31 {dimension_numbers = #tpu.dot_dimension_numbers<[1], [1], [0], [0], [0, 0, 1, 0], [], []>} : vector<8x8xbf16>, vector<16x8xbf16>, vector<8x16xf32> -> vector<8x16xf32>
    %72 = arith.addf %71, %44 : vector<8x16xf32>
    %cst_32 = arith.constant dense<0xFF800000> : vector<8xf32>
    %73 = vector.multi_reduction <maximumf>, %72, %cst_32 [1] : vector<8x16xf32> to vector<8xf32>
    %74 = vector.shape_cast %73 : vector<8xf32> to vector<8x1xf32>
    %75 = vector.broadcast %74 : vector<8x1xf32> to vector<8x16xf32>
    %76 = arith.subf %72, %75 : vector<8x16xf32>
    %77 = math.exp %76 : vector<8x16xf32>
    %cst_33 = arith.constant dense<0.000000e+00> : vector<8xf32>
    %78 = vector.multi_reduction <add>, %77, %cst_33 [1] : vector<8x16xf32> to vector<8xf32>
    %79 = vector.shape_cast %78 : vector<8xf32> to vector<8x1xf32>
    %80 = tpu.reciprocal %79 {approx = true} : vector<8x1xf32> -> vector<8x1xf32>
    %81 = vector.broadcast %80 : vector<8x1xf32> to vector<8x16xf32>
    %82 = arith.mulf %77, %81 : vector<8x16xf32>
    %83 = arith.truncf %82 : vector<8x16xf32> to vector<8x16xbf16>
    %cst_34 = arith.constant dense<0.000000e+00> : vector<8x8xf32>
    %84 = tpu.matmul %83, %70, %cst_34 {dimension_numbers = #tpu.dot_dimension_numbers<[1], [0], [0], [1], [0, 0, 1, 1], [], []>} : vector<8x16xbf16>, vector<16x8xbf16>, vector<8x8xf32> -> vector<8x8xf32>
    %85 = vector.extract_strided_slice %33 {offsets = [0, 16], sizes = [8, 8], strides = [1, 1]} : vector<8x32xf32> to vector<8x8xf32>
    %86 = arith.truncf %85 : vector<8x8xf32> to vector<8x8xbf16>
    %87 = vector.extract_strided_slice %40 {offsets = [0, 16], sizes = [16, 8], strides = [1, 1]} : vector<16x32xf32> to vector<16x8xf32>
    %88 = arith.truncf %87 : vector<16x8xf32> to vector<16x8xbf16>
    %89 = vector.extract_strided_slice %41 {offsets = [0, 16], sizes = [16, 8], strides = [1, 1]} : vector<16x32xf32> to vector<16x8xf32>
    %90 = arith.truncf %89 : vector<16x8xf32> to vector<16x8xbf16>
    %cst_35 = arith.constant dense<0.000000e+00> : vector<8x16xf32>
    %91 = tpu.matmul %86, %88, %cst_35 {dimension_numbers = #tpu.dot_dimension_numbers<[1], [1], [0], [0], [0, 0, 1, 0], [], []>} : vector<8x8xbf16>, vector<16x8xbf16>, vector<8x16xf32> -> vector<8x16xf32>
    %92 = arith.addf %91, %44 : vector<8x16xf32>
    %cst_36 = arith.constant dense<0xFF800000> : vector<8xf32>
    %93 = vector.multi_reduction <maximumf>, %92, %cst_36 [1] : vector<8x16xf32> to vector<8xf32>
    %94 = vector.shape_cast %93 : vector<8xf32> to vector<8x1xf32>
    %95 = vector.broadcast %94 : vector<8x1xf32> to vector<8x16xf32>
    %96 = arith.subf %92, %95 : vector<8x16xf32>
    %97 = math.exp %96 : vector<8x16xf32>
    %cst_37 = arith.constant dense<0.000000e+00> : vector<8xf32>
    %98 = vector.multi_reduction <add>, %97, %cst_37 [1] : vector<8x16xf32> to vector<8xf32>
    %99 = vector.shape_cast %98 : vector<8xf32> to vector<8x1xf32>
    %100 = tpu.reciprocal %99 {approx = true} : vector<8x1xf32> -> vector<8x1xf32>
    %101 = vector.broadcast %100 : vector<8x1xf32> to vector<8x16xf32>
    %102 = arith.mulf %97, %101 : vector<8x16xf32>
    %103 = arith.truncf %102 : vector<8x16xf32> to vector<8x16xbf16>
    %cst_38 = arith.constant dense<0.000000e+00> : vector<8x8xf32>
    %104 = tpu.matmul %103, %90, %cst_38 {dimension_numbers = #tpu.dot_dimension_numbers<[1], [0], [0], [1], [0, 0, 1, 1], [], []>} : vector<8x16xbf16>, vector<16x8xbf16>, vector<8x8xf32> -> vector<8x8xf32>
    %105 = vector.extract_strided_slice %33 {offsets = [0, 24], sizes = [8, 8], strides = [1, 1]} : vector<8x32xf32> to vector<8x8xf32>
    %106 = arith.truncf %105 : vector<8x8xf32> to vector<8x8xbf16>
    %107 = vector.extract_strided_slice %40 {offsets = [0, 24], sizes = [16, 8], strides = [1, 1]} : vector<16x32xf32> to vector<16x8xf32>
    %108 = arith.truncf %107 : vector<16x8xf32> to vector<16x8xbf16>
    %109 = vector.extract_strided_slice %41 {offsets = [0, 24], sizes = [16, 8], strides = [1, 1]} : vector<16x32xf32> to vector<16x8xf32>
    %110 = arith.truncf %109 : vector<16x8xf32> to vector<16x8xbf16>
    %cst_39 = arith.constant dense<0.000000e+00> : vector<8x16xf32>
    %111 = tpu.matmul %106, %108, %cst_39 {dimension_numbers = #tpu.dot_dimension_numbers<[1], [1], [0], [0], [0, 0, 1, 0], [], []>} : vector<8x8xbf16>, vector<16x8xbf16>, vector<8x16xf32> -> vector<8x16xf32>
    %112 = arith.addf %111, %44 : vector<8x16xf32>
    %cst_40 = arith.constant dense<0xFF800000> : vector<8xf32>
    %113 = vector.multi_reduction <maximumf>, %112, %cst_40 [1] : vector<8x16xf32> to vector<8xf32>
    %114 = vector.shape_cast %113 : vector<8xf32> to vector<8x1xf32>
    %115 = vector.broadcast %114 : vector<8x1xf32> to vector<8x16xf32>
    %116 = arith.subf %112, %115 : vector<8x16xf32>
    %117 = math.exp %116 : vector<8x16xf32>
    %cst_41 = arith.constant dense<0.000000e+00> : vector<8xf32>
    %118 = vector.multi_reduction <add>, %117, %cst_41 [1] : vector<8x16xf32> to vector<8xf32>
    %119 = vector.shape_cast %118 : vector<8xf32> to vector<8x1xf32>
    %120 = tpu.reciprocal %119 {approx = true} : vector<8x1xf32> -> vector<8x1xf32>
    %121 = vector.broadcast %120 : vector<8x1xf32> to vector<8x16xf32>
    %122 = arith.mulf %117, %121 : vector<8x16xf32>
    %123 = arith.truncf %122 : vector<8x16xf32> to vector<8x16xbf16>
    %cst_42 = arith.constant dense<0.000000e+00> : vector<8x8xf32>
    %124 = tpu.matmul %123, %110, %cst_42 {dimension_numbers = #tpu.dot_dimension_numbers<[1], [0], [0], [1], [0, 0, 1, 1], [], []>} : vector<8x16xbf16>, vector<16x8xbf16>, vector<8x8xf32> -> vector<8x8xf32>
    %125 = tpu.concatenate %64, %84, %104, %124 in 1 : vector<8x8xf32>, vector<8x8xf32>, vector<8x8xf32>, vector<8x8xf32> -> vector<8x32xf32>
    %126 = arith.truncf %125 : vector<8x32xf32> to vector<8x32xbf16>
    %c0_43 = arith.constant 0 : index
    %c0_44 = arith.constant 0 : index
    %127 = vector.load %arg11[%c0_43, %c0_44] : memref<32x32xbf16, #tpu.memory_space<vmem>>, vector<32x32xbf16>
    %cst_45 = arith.constant dense<0.000000e+00> : vector<8x32xf32>
    %128 = tpu.matmul %126, %127, %cst_45 {dimension_numbers = #tpu.dot_dimension_numbers<[1], [0], [0], [1], [0, 0, 1, 1], [], []>} : vector<8x32xbf16>, vector<32x32xbf16>, vector<8x32xf32> -> vector<8x32xf32>
    %c0_46 = arith.constant 0 : index
    %c0_47 = arith.constant 0 : index
    %129 = vector.load %arg12[%c0_46, %c0_47] : memref<1x32xf32, #tpu.memory_space<vmem>>, vector<1x32xf32>
    %130 = vector.broadcast %129 : vector<1x32xf32> to vector<8x32xf32>
    %131 = arith.addf %128, %130 : vector<8x32xf32>
    %132 = arith.addf %1, %131 : vector<8x32xf32>
    %c0_48 = arith.constant 0 : index
    %c0_49 = arith.constant 0 : index
    %c0_50 = arith.constant 0 : index
    %133 = vector.load %arg13[%c0_48, %c0_49, %c0_50] : memref<1x8x32xf32, #tpu.memory_space<vmem>>, vector<1x8x32xf32>
    %134 = vector.shape_cast %133 : vector<1x8x32xf32> to vector<8x32xf32>
    %135 = vector.shape_cast %132 : vector<8x32xf32> to vector<1x8x32xf32>
    tpu.vector_store %arg13[%c0_48, %c0_49, %c0_50], %135 {strides = array<i32>} : memref<1x8x32xf32, #tpu.memory_space<vmem>>, vector<1x8x32xf32>,
    return
  }
  func.func @transform_0(%arg0: i32, %arg1: i32) -> (i32, i32, i32) {
    %c0_i32 = arith.constant 0 : i32
    %c0_i32_0 = arith.constant 0 : i32
    return %arg0, %arg1, %c0_i32 : i32, i32, i32
  }
  func.func @transform_1(%arg0: i32, %arg1: i32) -> (i32, i32, i32) {
    %c0_i32 = arith.constant 0 : i32
    %c0_i32_0 = arith.constant 0 : i32
    %c0_i32_1 = arith.constant 0 : i32
    return %arg0, %c0_i32, %c0_i32_0 : i32, i32, i32
  }
  func.func @transform_2(%arg0: i32, %arg1: i32) -> (i32, i32, i32) {
    %c0_i32 = arith.constant 0 : i32
    %c0_i32_0 = arith.constant 0 : i32
    return %arg0, %arg1, %c0_i32 : i32, i32, i32
  }
  func.func @transform_3(%arg0: i32, %arg1: i32) -> (i32, i32) {
    %c0_i32 = arith.constant 0 : i32
    %c0_i32_0 = arith.constant 0 : i32
    %c0_i32_1 = arith.constant 0 : i32
    return %c0_i32, %c0_i32_0 : i32, i32
  }
  func.func @transform_4(%arg0: i32, %arg1: i32) -> (i32, i32) {
    %c0_i32 = arith.constant 0 : i32
    %c0_i32_0 = arith.constant 0 : i32
    %c0_i32_1 = arith.constant 0 : i32
    return %c0_i32, %c0_i32_0 : i32, i32
  }
  func.func @transform_5(%arg0: i32, %arg1: i32) -> (i32, i32) {
    %c0_i32 = arith.constant 0 : i32
    %c0_i32_0 = arith.constant 0 : i32
    %c0_i32_1 = arith.constant 0 : i32
    return %c0_i32, %c0_i32_0 : i32, i32
  }
  func.func @transform_6(%arg0: i32, %arg1: i32) -> (i32, i32) {
    %c0_i32 = arith.constant 0 : i32
    %c0_i32_0 = arith.constant 0 : i32
    %c0_i32_1 = arith.constant 0 : i32
    return %c0_i32, %c0_i32_0 : i32, i32
  }
  func.func @transform_7(%arg0: i32, %arg1: i32) -> (i32, i32) {
    %c0_i32 = arith.constant 0 : i32
    %c0_i32_0 = arith.constant 0 : i32
    %c0_i32_1 = arith.constant 0 : i32
    return %c0_i32, %c0_i32_0 : i32, i32
  }
  func.func @transform_8(%arg0: i32, %arg1: i32) -> (i32, i32) {
    %c0_i32 = arith.constant 0 : i32
    %c0_i32_0 = arith.constant 0 : i32
    %c0_i32_1 = arith.constant 0 : i32
    return %c0_i32, %c0_i32_0 : i32, i32
  }
  func.func @transform_9(%arg0: i32, %arg1: i32) -> (i32, i32) {
    %c0_i32 = arith.constant 0 : i32
    %c0_i32_0 = arith.constant 0 : i32
    %c0_i32_1 = arith.constant 0 : i32
    return %c0_i32, %c0_i32_0 : i32, i32
  }
  func.func @transform_10(%arg0: i32, %arg1: i32) -> (i32, i32) {
    %c0_i32 = arith.constant 0 : i32
    %c0_i32_0 = arith.constant 0 : i32
    %c0_i32_1 = arith.constant 0 : i32
    return %c0_i32, %c0_i32_0 : i32, i32
  }
  func.func @transform_11(%arg0: i32, %arg1: i32) -> (i32, i32, i32) {
    %c0_i32 = arith.constant 0 : i32
    %c0_i32_0 = arith.constant 0 : i32
    return %arg0, %arg1, %c0_i32 : i32, i32, i32
  }
}

module attributes {stable_mosaic.version = 11 : i64} {
  func.func @kernel(%arg0: i32, %arg1: i32, %arg2: memref<1x8x32xf32, #tpu.memory_space<vmem>>, %arg3: memref<1x8x32xf32, #tpu.memory_space<vmem>>, %arg4: memref<1x8x8xbf16, #tpu.memory_space<vmem>>, %arg5: memref<1x32xf32, #tpu.memory_space<vmem>>, %arg6: memref<1x32xf32, #tpu.memory_space<vmem>>, %arg7: memref<32x32xbf16, #tpu.memory_space<vmem>>, %arg8: memref<1x32xf32, #tpu.memory_space<vmem>>, %arg9: memref<32x64xbf16, #tpu.memory_space<vmem>>, %arg10: memref<1x64xf32, #tpu.memory_space<vmem>>, %arg11: memref<32x32xbf16, #tpu.memory_space<vmem>>, %arg12: memref<1x32xf32, #tpu.memory_space<vmem>>, %arg13: memref<1x8x32xf32, #tpu.memory_space<vmem>>) attributes {dimension_semantics = [#tpu.dimension_semantics<parallel>, #tpu.dimension_semantics<parallel>], iteration_bounds = array<i64: 2, 1>, scalar_prefetch = 0 : i64, scratch_operands = 0 : i64, tpu.core_type = #tpu.core_type<tc>, window_params = [{transform_indices = @transform_0, window_bounds = array<i64: 1, 8, 32>}, {transform_indices = @transform_1, window_bounds = array<i64: 1, 8, 32>}, {transform_indices = @transform_2, window_bounds = array<i64: 1, 8, 8>}, {pipeline_mode = #tpu.pipeline_mode<synchronous>, transform_indices = @transform_3, window_bounds = array<i64: 1, 32>}, {pipeline_mode = #tpu.pipeline_mode<synchronous>, transform_indices = @transform_4, window_bounds = array<i64: 1, 32>}, {pipeline_mode = #tpu.pipeline_mode<synchronous>, transform_indices = @transform_5, window_bounds = array<i64: 32, 32>}, {pipeline_mode = #tpu.pipeline_mode<synchronous>, transform_indices = @transform_6, window_bounds = array<i64: 1, 32>}, {pipeline_mode = #tpu.pipeline_mode<synchronous>, transform_indices = @transform_7, window_bounds = array<i64: 32, 64>}, {pipeline_mode = #tpu.pipeline_mode<synchronous>, transform_indices = @transform_8, window_bounds = array<i64: 1, 64>}, {pipeline_mode = #tpu.pipeline_mode<synchronous>, transform_indices = @transform_9, window_bounds = array<i64: 32, 32>}, {pipeline_mode = #tpu.pipeline_mode<synchronous>, transform_indices = @transform_10, window_bounds = array<i64: 1, 32>}, {transform_indices = @transform_11, window_bounds = array<i64: 1, 8, 32>}]} {
    %c0 = arith.constant 0 : index
    %c0_0 = arith.constant 0 : index
    %c0_1 = arith.constant 0 : index
    %0 = vector.load %arg2[%c0, %c0_0, %c0_1] : memref<1x8x32xf32, #tpu.memory_space<vmem>>, vector<1x8x32xf32>
    %1 = vector.shape_cast %0 : vector<1x8x32xf32> to vector<8x32xf32>
    %c0_2 = arith.constant 0 : index
    %c0_3 = arith.constant 0 : index
    %c0_4 = arith.constant 0 : index
    %2 = vector.load %arg3[%c0_2, %c0_3, %c0_4] : memref<1x8x32xf32, #tpu.memory_space<vmem>>, vector<1x8x32xf32>
    %3 = vector.shape_cast %2 : vector<1x8x32xf32> to vector<8x32xf32>
    %c0_5 = arith.constant 0 : index
    %c0_6 = arith.constant 0 : index
    %4 = vector.load %arg5[%c0_5, %c0_6] : memref<1x32xf32, #tpu.memory_space<vmem>>, vector<1x32xf32>
    %c0_7 = arith.constant 0 : index
    %c0_8 = arith.constant 0 : index
    %5 = vector.load %arg6[%c0_7, %c0_8] : memref<1x32xf32, #tpu.memory_space<vmem>>, vector<1x32xf32>
    %cst = arith.constant dense<0.000000e+00> : vector<8xf32>
    %6 = vector.multi_reduction <add>, %1, %cst [1] : vector<8x32xf32> to vector<8xf32>
    %7 = vector.shape_cast %6 : vector<8xf32> to vector<8x1xf32>
    %cst_9 = arith.constant 3.200000e+01 : f32
    %8 = vector.broadcast %cst_9 : f32 to vector<8x1xf32>
    %9 = arith.divf %7, %8 : vector<8x1xf32>
    %10 = vector.broadcast %9 : vector<8x1xf32> to vector<8x32xf32>
    %11 = arith.subf %1, %10 : vector<8x32xf32>
    %12 = arith.mulf %11, %11 : vector<8x32xf32>
    %cst_10 = arith.constant dense<0.000000e+00> : vector<8xf32>
    %13 = vector.multi_reduction <add>, %12, %cst_10 [1] : vector<8x32xf32> to vector<8xf32>
    %14 = vector.shape_cast %13 : vector<8xf32> to vector<8x1xf32>
    %cst_11 = arith.constant 3.100000e+01 : f32
    %15 = vector.broadcast %cst_11 : f32 to vector<8x1xf32>
    %16 = arith.divf %14, %15 : vector<8x1xf32>
    %17 = vector.broadcast %4 : vector<1x32xf32> to vector<8x32xf32>
    %18 = arith.mulf %17, %11 : vector<8x32xf32>
    %19 = math.sqrt %16 : vector<8x1xf32>
    %cst_12 = arith.constant 9.99999997E-7 : f32
    %20 = vector.broadcast %cst_12 : f32 to vector<8x1xf32>
    %21 = arith.addf %19, %20 : vector<8x1xf32>
    %22 = vector.broadcast %21 : vector<8x1xf32> to vector<8x32xf32>
    %23 = arith.divf %18, %22 : vector<8x32xf32>
    %24 = vector.broadcast %5 : vector<1x32xf32> to vector<8x32xf32>
    %25 = arith.addf %23, %24 : vector<8x32xf32>
    %cst_13 = arith.constant dense<0.000000e+00> : vector<8xf32>
    %26 = vector.multi_reduction <add>, %3, %cst_13 [1] : vector<8x32xf32> to vector<8xf32>
    %27 = vector.shape_cast %26 : vector<8xf32> to vector<8x1xf32>
    %cst_14 = arith.constant 3.200000e+01 : f32
    %28 = vector.broadcast %cst_14 : f32 to vector<8x1xf32>
    %29 = arith.divf %27, %28 : vector<8x1xf32>
    %30 = vector.broadcast %29 : vector<8x1xf32> to vector<8x32xf32>
    %31 = arith.subf %3, %30 : vector<8x32xf32>
    %32 = arith.mulf %31, %31 : vector<8x32xf32>
    %cst_15 = arith.constant dense<0.000000e+00> : vector<8xf32>
    %33 = vector.multi_reduction <add>, %32, %cst_15 [1] : vector<8x32xf32> to vector<8xf32>
    %34 = vector.shape_cast %33 : vector<8xf32> to vector<8x1xf32>
    %cst_16 = arith.constant 3.100000e+01 : f32
    %35 = vector.broadcast %cst_16 : f32 to vector<8x1xf32>
    %36 = arith.divf %34, %35 : vector<8x1xf32>
    %37 = vector.broadcast %4 : vector<1x32xf32> to vector<8x32xf32>
    %38 = arith.mulf %37, %31 : vector<8x32xf32>
    %39 = math.sqrt %36 : vector<8x1xf32>
    %cst_17 = arith.constant 9.99999997E-7 : f32
    %40 = vector.broadcast %cst_17 : f32 to vector<8x1xf32>
    %41 = arith.addf %39, %40 : vector<8x1xf32>
    %42 = vector.broadcast %41 : vector<8x1xf32> to vector<8x32xf32>
    %43 = arith.divf %38, %42 : vector<8x32xf32>
    %44 = vector.broadcast %5 : vector<1x32xf32> to vector<8x32xf32>
    %45 = arith.addf %43, %44 : vector<8x32xf32>
    %46 = arith.truncf %25 : vector<8x32xf32> to vector<8x32xbf16>
    %c0_18 = arith.constant 0 : index
    %c0_19 = arith.constant 0 : index
    %47 = vector.load %arg7[%c0_18, %c0_19] : memref<32x32xbf16, #tpu.memory_space<vmem>>, vector<32x32xbf16>
    %cst_20 = arith.constant dense<0.000000e+00> : vector<8x32xf32>
    %48 = tpu.matmul %46, %47, %cst_20 {dimension_numbers = #tpu.dot_dimension_numbers<[1], [0], [0], [1], [0, 0, 1, 1], [], []>} : vector<8x32xbf16>, vector<32x32xbf16>, vector<8x32xf32> -> vector<8x32xf32>
    %c0_21 = arith.constant 0 : index
    %c0_22 = arith.constant 0 : index
    %49 = vector.load %arg8[%c0_21, %c0_22] : memref<1x32xf32, #tpu.memory_space<vmem>>, vector<1x32xf32>
    %50 = vector.broadcast %49 : vector<1x32xf32> to vector<8x32xf32>
    %51 = arith.addf %48, %50 : vector<8x32xf32>
    %cst_23 = arith.constant 0.353553385 : f32
    %52 = vector.broadcast %cst_23 : f32 to vector<8x32xf32>
    %53 = arith.mulf %51, %52 : vector<8x32xf32>
    %54 = arith.truncf %45 : vector<8x32xf32> to vector<8x32xbf16>
    %c0_24 = arith.constant 0 : index
    %c0_25 = arith.constant 0 : index
    %55 = vector.load %arg9[%c0_24, %c0_25] : memref<32x64xbf16, #tpu.memory_space<vmem>>, vector<32x64xbf16>
    %cst_26 = arith.constant dense<0.000000e+00> : vector<8x64xf32>
    %56 = tpu.matmul %54, %55, %cst_26 {dimension_numbers = #tpu.dot_dimension_numbers<[1], [0], [0], [1], [0, 0, 1, 1], [], []>} : vector<8x32xbf16>, vector<32x64xbf16>, vector<8x64xf32> -> vector<8x64xf32>
    %c0_27 = arith.constant 0 : index
    %c0_28 = arith.constant 0 : index
    %57 = vector.load %arg10[%c0_27, %c0_28] : memref<1x64xf32, #tpu.memory_space<vmem>>, vector<1x64xf32>
    %58 = vector.broadcast %57 : vector<1x64xf32> to vector<8x64xf32>
    %59 = arith.addf %56, %58 : vector<8x64xf32>
    %60 = vector.extract_strided_slice %59 {offsets = [0, 0], sizes = [8, 32], strides = [1, 1]} : vector<8x64xf32> to vector<8x32xf32>
    %61 = vector.extract_strided_slice %59 {offsets = [0, 32], sizes = [8, 32], strides = [1, 1]} : vector<8x64xf32> to vector<8x32xf32>
    %c0_29 = arith.constant 0 : index
    %c0_30 = arith.constant 0 : index
    %c0_31 = arith.constant 0 : index
    %62 = vector.load %arg4[%c0_29, %c0_30, %c0_31] : memref<1x8x8xbf16, #tpu.memory_space<vmem>>, vector<1x8x8xbf16>
    %63 = vector.shape_cast %62 : vector<1x8x8xbf16> to vector<8x8xbf16>
    %64 = arith.extf %63 : vector<8x8xbf16> to vector<8x8xf32>
    %65 = vector.extract_strided_slice %53 {offsets = [0, 0], sizes = [8, 8], strides = [1, 1]} : vector<8x32xf32> to vector<8x8xf32>
    %66 = arith.truncf %65 : vector<8x8xf32> to vector<8x8xbf16>
    %67 = vector.extract_strided_slice %60 {offsets = [0, 0], sizes = [8, 8], strides = [1, 1]} : vector<8x32xf32> to vector<8x8xf32>
    %68 = arith.truncf %67 : vector<8x8xf32> to vector<8x8xbf16>
    %69 = vector.extract_strided_slice %61 {offsets = [0, 0], sizes = [8, 8], strides = [1, 1]} : vector<8x32xf32> to vector<8x8xf32>
    %70 = arith.truncf %69 : vector<8x8xf32> to vector<8x8xbf16>
    %cst_32 = arith.constant dense<0.000000e+00> : vector<8x8xf32>
    %71 = tpu.matmul %66, %68, %cst_32 {dimension_numbers = #tpu.dot_dimension_numbers<[1], [1], [0], [0], [0, 0, 1, 0], [], []>} : vector<8x8xbf16>, vector<8x8xbf16>, vector<8x8xf32> -> vector<8x8xf32>
    %72 = arith.addf %71, %64 : vector<8x8xf32>
    %cst_33 = arith.constant dense<0xFF800000> : vector<8xf32>
    %73 = vector.multi_reduction <maximumf>, %72, %cst_33 [1] : vector<8x8xf32> to vector<8xf32>
    %74 = vector.shape_cast %73 : vector<8xf32> to vector<8x1xf32>
    %75 = vector.broadcast %74 : vector<8x1xf32> to vector<8x8xf32>
    %76 = arith.subf %72, %75 : vector<8x8xf32>
    %77 = math.exp %76 : vector<8x8xf32>
    %cst_34 = arith.constant dense<0.000000e+00> : vector<8xf32>
    %78 = vector.multi_reduction <add>, %77, %cst_34 [1] : vector<8x8xf32> to vector<8xf32>
    %79 = vector.shape_cast %78 : vector<8xf32> to vector<8x1xf32>
    %80 = tpu.reciprocal %79 {approx = true} : vector<8x1xf32> -> vector<8x1xf32>
    %81 = vector.broadcast %80 : vector<8x1xf32> to vector<8x8xf32>
    %82 = arith.mulf %77, %81 : vector<8x8xf32>
    %83 = arith.truncf %82 : vector<8x8xf32> to vector<8x8xbf16>
    %cst_35 = arith.constant dense<0.000000e+00> : vector<8x8xf32>
    %84 = tpu.matmul %83, %70, %cst_35 {dimension_numbers = #tpu.dot_dimension_numbers<[1], [0], [0], [1], [0, 0, 1, 1], [], []>} : vector<8x8xbf16>, vector<8x8xbf16>, vector<8x8xf32> -> vector<8x8xf32>
    %85 = vector.extract_strided_slice %53 {offsets = [0, 8], sizes = [8, 8], strides = [1, 1]} : vector<8x32xf32> to vector<8x8xf32>
    %86 = arith.truncf %85 : vector<8x8xf32> to vector<8x8xbf16>
    %87 = vector.extract_strided_slice %60 {offsets = [0, 8], sizes = [8, 8], strides = [1, 1]} : vector<8x32xf32> to vector<8x8xf32>
    %88 = arith.truncf %87 : vector<8x8xf32> to vector<8x8xbf16>
    %89 = vector.extract_strided_slice %61 {offsets = [0, 8], sizes = [8, 8], strides = [1, 1]} : vector<8x32xf32> to vector<8x8xf32>
    %90 = arith.truncf %89 : vector<8x8xf32> to vector<8x8xbf16>
    %cst_36 = arith.constant dense<0.000000e+00> : vector<8x8xf32>
    %91 = tpu.matmul %86, %88, %cst_36 {dimension_numbers = #tpu.dot_dimension_numbers<[1], [1], [0], [0], [0, 0, 1, 0], [], []>} : vector<8x8xbf16>, vector<8x8xbf16>, vector<8x8xf32> -> vector<8x8xf32>
    %92 = arith.addf %91, %64 : vector<8x8xf32>
    %cst_37 = arith.constant dense<0xFF800000> : vector<8xf32>
    %93 = vector.multi_reduction <maximumf>, %92, %cst_37 [1] : vector<8x8xf32> to vector<8xf32>
    %94 = vector.shape_cast %93 : vector<8xf32> to vector<8x1xf32>
    %95 = vector.broadcast %94 : vector<8x1xf32> to vector<8x8xf32>
    %96 = arith.subf %92, %95 : vector<8x8xf32>
    %97 = math.exp %96 : vector<8x8xf32>
    %cst_38 = arith.constant dense<0.000000e+00> : vector<8xf32>
    %98 = vector.multi_reduction <add>, %97, %cst_38 [1] : vector<8x8xf32> to vector<8xf32>
    %99 = vector.shape_cast %98 : vector<8xf32> to vector<8x1xf32>
    %100 = tpu.reciprocal %99 {approx = true} : vector<8x1xf32> -> vector<8x1xf32>
    %101 = vector.broadcast %100 : vector<8x1xf32> to vector<8x8xf32>
    %102 = arith.mulf %97, %101 : vector<8x8xf32>
    %103 = arith.truncf %102 : vector<8x8xf32> to vector<8x8xbf16>
    %cst_39 = arith.constant dense<0.000000e+00> : vector<8x8xf32>
    %104 = tpu.matmul %103, %90, %cst_39 {dimension_numbers = #tpu.dot_dimension_numbers<[1], [0], [0], [1], [0, 0, 1, 1], [], []>} : vector<8x8xbf16>, vector<8x8xbf16>, vector<8x8xf32> -> vector<8x8xf32>
    %105 = vector.extract_strided_slice %53 {offsets = [0, 16], sizes = [8, 8], strides = [1, 1]} : vector<8x32xf32> to vector<8x8xf32>
    %106 = arith.truncf %105 : vector<8x8xf32> to vector<8x8xbf16>
    %107 = vector.extract_strided_slice %60 {offsets = [0, 16], sizes = [8, 8], strides = [1, 1]} : vector<8x32xf32> to vector<8x8xf32>
    %108 = arith.truncf %107 : vector<8x8xf32> to vector<8x8xbf16>
    %109 = vector.extract_strided_slice %61 {offsets = [0, 16], sizes = [8, 8], strides = [1, 1]} : vector<8x32xf32> to vector<8x8xf32>
    %110 = arith.truncf %109 : vector<8x8xf32> to vector<8x8xbf16>
    %cst_40 = arith.constant dense<0.000000e+00> : vector<8x8xf32>
    %111 = tpu.matmul %106, %108, %cst_40 {dimension_numbers = #tpu.dot_dimension_numbers<[1], [1], [0], [0], [0, 0, 1, 0], [], []>} : vector<8x8xbf16>, vector<8x8xbf16>, vector<8x8xf32> -> vector<8x8xf32>
    %112 = arith.addf %111, %64 : vector<8x8xf32>
    %cst_41 = arith.constant dense<0xFF800000> : vector<8xf32>
    %113 = vector.multi_reduction <maximumf>, %112, %cst_41 [1] : vector<8x8xf32> to vector<8xf32>
    %114 = vector.shape_cast %113 : vector<8xf32> to vector<8x1xf32>
    %115 = vector.broadcast %114 : vector<8x1xf32> to vector<8x8xf32>
    %116 = arith.subf %112, %115 : vector<8x8xf32>
    %117 = math.exp %116 : vector<8x8xf32>
    %cst_42 = arith.constant dense<0.000000e+00> : vector<8xf32>
    %118 = vector.multi_reduction <add>, %117, %cst_42 [1] : vector<8x8xf32> to vector<8xf32>
    %119 = vector.shape_cast %118 : vector<8xf32> to vector<8x1xf32>
    %120 = tpu.reciprocal %119 {approx = true} : vector<8x1xf32> -> vector<8x1xf32>
    %121 = vector.broadcast %120 : vector<8x1xf32> to vector<8x8xf32>
    %122 = arith.mulf %117, %121 : vector<8x8xf32>
    %123 = arith.truncf %122 : vector<8x8xf32> to vector<8x8xbf16>
    %cst_43 = arith.constant dense<0.000000e+00> : vector<8x8xf32>
    %124 = tpu.matmul %123, %110, %cst_43 {dimension_numbers = #tpu.dot_dimension_numbers<[1], [0], [0], [1], [0, 0, 1, 1], [], []>} : vector<8x8xbf16>, vector<8x8xbf16>, vector<8x8xf32> -> vector<8x8xf32>
    %125 = vector.extract_strided_slice %53 {offsets = [0, 24], sizes = [8, 8], strides = [1, 1]} : vector<8x32xf32> to vector<8x8xf32>
    %126 = arith.truncf %125 : vector<8x8xf32> to vector<8x8xbf16>
    %127 = vector.extract_strided_slice %60 {offsets = [0, 24], sizes = [8, 8], strides = [1, 1]} : vector<8x32xf32> to vector<8x8xf32>
    %128 = arith.truncf %127 : vector<8x8xf32> to vector<8x8xbf16>
    %129 = vector.extract_strided_slice %61 {offsets = [0, 24], sizes = [8, 8], strides = [1, 1]} : vector<8x32xf32> to vector<8x8xf32>
    %130 = arith.truncf %129 : vector<8x8xf32> to vector<8x8xbf16>
    %cst_44 = arith.constant dense<0.000000e+00> : vector<8x8xf32>
    %131 = tpu.matmul %126, %128, %cst_44 {dimension_numbers = #tpu.dot_dimension_numbers<[1], [1], [0], [0], [0, 0, 1, 0], [], []>} : vector<8x8xbf16>, vector<8x8xbf16>, vector<8x8xf32> -> vector<8x8xf32>
    %132 = arith.addf %131, %64 : vector<8x8xf32>
    %cst_45 = arith.constant dense<0xFF800000> : vector<8xf32>
    %133 = vector.multi_reduction <maximumf>, %132, %cst_45 [1] : vector<8x8xf32> to vector<8xf32>
    %134 = vector.shape_cast %133 : vector<8xf32> to vector<8x1xf32>
    %135 = vector.broadcast %134 : vector<8x1xf32> to vector<8x8xf32>
    %136 = arith.subf %132, %135 : vector<8x8xf32>
    %137 = math.exp %136 : vector<8x8xf32>
    %cst_46 = arith.constant dense<0.000000e+00> : vector<8xf32>
    %138 = vector.multi_reduction <add>, %137, %cst_46 [1] : vector<8x8xf32> to vector<8xf32>
    %139 = vector.shape_cast %138 : vector<8xf32> to vector<8x1xf32>
    %140 = tpu.reciprocal %139 {approx = true} : vector<8x1xf32> -> vector<8x1xf32>
    %141 = vector.broadcast %140 : vector<8x1xf32> to vector<8x8xf32>
    %142 = arith.mulf %137, %141 : vector<8x8xf32>
    %143 = arith.truncf %142 : vector<8x8xf32> to vector<8x8xbf16>
    %cst_47 = arith.constant dense<0.000000e+00> : vector<8x8xf32>
    %144 = tpu.matmul %143, %130, %cst_47 {dimension_numbers = #tpu.dot_dimension_numbers<[1], [0], [0], [1], [0, 0, 1, 1], [], []>} : vector<8x8xbf16>, vector<8x8xbf16>, vector<8x8xf32> -> vector<8x8xf32>
    %145 = tpu.concatenate %84, %104, %124, %144 in 1 : vector<8x8xf32>, vector<8x8xf32>, vector<8x8xf32>, vector<8x8xf32> -> vector<8x32xf32>
    %146 = arith.truncf %145 : vector<8x32xf32> to vector<8x32xbf16>
    %c0_48 = arith.constant 0 : index
    %c0_49 = arith.constant 0 : index
    %147 = vector.load %arg11[%c0_48, %c0_49] : memref<32x32xbf16, #tpu.memory_space<vmem>>, vector<32x32xbf16>
    %cst_50 = arith.constant dense<0.000000e+00> : vector<8x32xf32>
    %148 = tpu.matmul %146, %147, %cst_50 {dimension_numbers = #tpu.dot_dimension_numbers<[1], [0], [0], [1], [0, 0, 1, 1], [], []>} : vector<8x32xbf16>, vector<32x32xbf16>, vector<8x32xf32> -> vector<8x32xf32>
    %c0_51 = arith.constant 0 : index
    %c0_52 = arith.constant 0 : index
    %149 = vector.load %arg12[%c0_51, %c0_52] : memref<1x32xf32, #tpu.memory_space<vmem>>, vector<1x32xf32>
    %150 = vector.broadcast %149 : vector<1x32xf32> to vector<8x32xf32>
    %151 = arith.addf %148, %150 : vector<8x32xf32>
    %152 = arith.addf %1, %151 : vector<8x32xf32>
    %c0_53 = arith.constant 0 : index
    %c0_54 = arith.constant 0 : index
    %c0_55 = arith.constant 0 : index
    %153 = vector.load %arg13[%c0_53, %c0_54, %c0_55] : memref<1x8x32xf32, #tpu.memory_space<vmem>>, vector<1x8x32xf32>
    %154 = vector.shape_cast %153 : vector<1x8x32xf32> to vector<8x32xf32>
    %155 = vector.shape_cast %152 : vector<8x32xf32> to vector<1x8x32xf32>
    tpu.vector_store %arg13[%c0_53, %c0_54, %c0_55], %155 {strides = array<i32>} : memref<1x8x32xf32, #tpu.memory_space<vmem>>, vector<1x8x32xf32>,
    return
  }
  func.func @transform_0(%arg0: i32, %arg1: i32) -> (i32, i32, i32) {
    %c0_i32 = arith.constant 0 : i32
    %c0_i32_0 = arith.constant 0 : i32
    return %arg0, %arg1, %c0_i32 : i32, i32, i32
  }
  func.func @transform_1(%arg0: i32, %arg1: i32) -> (i32, i32, i32) {
    %c0_i32 = arith.constant 0 : i32
    %c0_i32_0 = arith.constant 0 : i32
    %c0_i32_1 = arith.constant 0 : i32
    return %arg0, %c0_i32, %c0_i32_0 : i32, i32, i32
  }
  func.func @transform_2(%arg0: i32, %arg1: i32) -> (i32, i32, i32) {
    %c0_i32 = arith.constant 0 : i32
    %c0_i32_0 = arith.constant 0 : i32
    return %arg0, %arg1, %c0_i32 : i32, i32, i32
  }
  func.func @transform_3(%arg0: i32, %arg1: i32) -> (i32, i32) {
    %c0_i32 = arith.constant 0 : i32
    %c0_i32_0 = arith.constant 0 : i32
    %c0_i32_1 = arith.constant 0 : i32
    return %c0_i32, %c0_i32_0 : i32, i32
  }
  func.func @transform_4(%arg0: i32, %arg1: i32) -> (i32, i32) {
    %c0_i32 = arith.constant 0 : i32
    %c0_i32_0 = arith.constant 0 : i32
    %c0_i32_1 = arith.constant 0 : i32
    return %c0_i32, %c0_i32_0 : i32, i32
  }
  func.func @transform_5(%arg0: i32, %arg1: i32) -> (i32, i32) {
    %c0_i32 = arith.constant 0 : i32
    %c0_i32_0 = arith.constant 0 : i32
    %c0_i32_1 = arith.constant 0 : i32
    return %c0_i32, %c0_i32_0 : i32, i32
  }
  func.func @transform_6(%arg0: i32, %arg1: i32) -> (i32, i32) {
    %c0_i32 = arith.constant 0 : i32
    %c0_i32_0 = arith.constant 0 : i32
    %c0_i32_1 = arith.constant 0 : i32
    return %c0_i32, %c0_i32_0 : i32, i32
  }
  func.func @transform_7(%arg0: i32, %arg1: i32) -> (i32, i32) {
    %c0_i32 = arith.constant 0 : i32
    %c0_i32_0 = arith.constant 0 : i32
    %c0_i32_1 = arith.constant 0 : i32
    return %c0_i32, %c0_i32_0 : i32, i32
  }
  func.func @transform_8(%arg0: i32, %arg1: i32) -> (i32, i32) {
    %c0_i32 = arith.constant 0 : i32
    %c0_i32_0 = arith.constant 0 : i32
    %c0_i32_1 = arith.constant 0 : i32
    return %c0_i32, %c0_i32_0 : i32, i32
  }
  func.func @transform_9(%arg0: i32, %arg1: i32) -> (i32, i32) {
    %c0_i32 = arith.constant 0 : i32
    %c0_i32_0 = arith.constant 0 : i32
    %c0_i32_1 = arith.constant 0 : i32
    return %c0_i32, %c0_i32_0 : i32, i32
  }
  func.func @transform_10(%arg0: i32, %arg1: i32) -> (i32, i32) {
    %c0_i32 = arith.constant 0 : i32
    %c0_i32_0 = arith.constant 0 : i32
    %c0_i32_1 = arith.constant 0 : i32
    return %c0_i32, %c0_i32_0 : i32, i32
  }
  func.func @transform_11(%arg0: i32, %arg1: i32) -> (i32, i32, i32) {
    %c0_i32 = arith.constant 0 : i32
    %c0_i32_0 = arith.constant 0 : i32
    return %arg0, %arg1, %c0_i32 : i32, i32, i32
  }
}

module attributes {stable_mosaic.version = 11 : i64} {
  func.func @kernel(%arg0: i32, %arg1: memref<16x32xf32, #tpu.memory_space<vmem>>, %arg2: memref<1x32xf32, #tpu.memory_space<vmem>>, %arg3: memref<1x32xf32, #tpu.memory_space<vmem>>, %arg4: memref<32x64xbf16, #tpu.memory_space<vmem>>, %arg5: memref<1x64xf32, #tpu.memory_space<vmem>>, %arg6: memref<64x32xbf16, #tpu.memory_space<vmem>>, %arg7: memref<1x32xf32, #tpu.memory_space<vmem>>, %arg8: memref<16x32xf32, #tpu.memory_space<vmem>>) attributes {dimension_semantics = [#tpu.dimension_semantics<parallel>], iteration_bounds = array<i64: 1>, scalar_prefetch = 0 : i64, scratch_operands = 0 : i64, tpu.core_type = #tpu.core_type<tc>, window_params = [{transform_indices = @transform_0, window_bounds = array<i64: 16, 32>}, {pipeline_mode = #tpu.pipeline_mode<synchronous>, transform_indices = @transform_1, window_bounds = array<i64: 1, 32>}, {pipeline_mode = #tpu.pipeline_mode<synchronous>, transform_indices = @transform_2, window_bounds = array<i64: 1, 32>}, {pipeline_mode = #tpu.pipeline_mode<synchronous>, transform_indices = @transform_3, window_bounds = array<i64: 32, 64>}, {pipeline_mode = #tpu.pipeline_mode<synchronous>, transform_indices = @transform_4, window_bounds = array<i64: 1, 64>}, {pipeline_mode = #tpu.pipeline_mode<synchronous>, transform_indices = @transform_5, window_bounds = array<i64: 64, 32>}, {pipeline_mode = #tpu.pipeline_mode<synchronous>, transform_indices = @transform_6, window_bounds = array<i64: 1, 32>}, {transform_indices = @transform_7, window_bounds = array<i64: 16, 32>}]} {
    %c0 = arith.constant 0 : index
    %c0_0 = arith.constant 0 : index
    %0 = vector.load %arg1[%c0, %c0_0] : memref<16x32xf32, #tpu.memory_space<vmem>>, vector<16x32xf32>
    %c0_1 = arith.constant 0 : index
    %c0_2 = arith.constant 0 : index
    %1 = vector.load %arg2[%c0_1, %c0_2] : memref<1x32xf32, #tpu.memory_space<vmem>>, vector<1x32xf32>
    %c0_3 = arith.constant 0 : index
    %c0_4 = arith.constant 0 : index
    %2 = vector.load %arg3[%c0_3, %c0_4] : memref<1x32xf32, #tpu.memory_space<vmem>>, vector<1x32xf32>
    %c0_5 = arith.constant 0 : index
    %c0_6 = arith.constant 0 : index
    %3 = vector.load %arg4[%c0_5, %c0_6] : memref<32x64xbf16, #tpu.memory_space<vmem>>, vector<32x64xbf16>
    %c0_7 = arith.constant 0 : index
    %c0_8 = arith.constant 0 : index
    %4 = vector.load %arg5[%c0_7, %c0_8] : memref<1x64xf32, #tpu.memory_space<vmem>>, vector<1x64xf32>
    %c0_9 = arith.constant 0 : index
    %c0_10 = arith.constant 0 : index
    %5 = vector.load %arg6[%c0_9, %c0_10] : memref<64x32xbf16, #tpu.memory_space<vmem>>, vector<64x32xbf16>
    %c0_11 = arith.constant 0 : index
    %c0_12 = arith.constant 0 : index
    %6 = vector.load %arg7[%c0_11, %c0_12] : memref<1x32xf32, #tpu.memory_space<vmem>>, vector<1x32xf32>
    %cst = arith.constant dense<0.000000e+00> : vector<16xf32>
    %7 = vector.multi_reduction <add>, %0, %cst [1] : vector<16x32xf32> to vector<16xf32>
    %8 = vector.shape_cast %7 : vector<16xf32> to vector<16x1xf32>
    %cst_13 = arith.constant 3.200000e+01 : f32
    %9 = vector.broadcast %cst_13 : f32 to vector<16x1xf32>
    %10 = arith.divf %8, %9 : vector<16x1xf32>
    %11 = vector.broadcast %10 : vector<16x1xf32> to vector<16x32xf32>
    %12 = arith.subf %0, %11 : vector<16x32xf32>
    %13 = arith.mulf %12, %12 : vector<16x32xf32>
    %cst_14 = arith.constant dense<0.000000e+00> : vector<16xf32>
    %14 = vector.multi_reduction <add>, %13, %cst_14 [1] : vector<16x32xf32> to vector<16xf32>
    %15 = vector.shape_cast %14 : vector<16xf32> to vector<16x1xf32>
    %cst_15 = arith.constant 3.100000e+01 : f32
    %16 = vector.broadcast %cst_15 : f32 to vector<16x1xf32>
    %17 = arith.divf %15, %16 : vector<16x1xf32>
    %18 = vector.broadcast %1 : vector<1x32xf32> to vector<16x32xf32>
    %19 = arith.mulf %18, %12 : vector<16x32xf32>
    %20 = math.sqrt %17 : vector<16x1xf32>
    %cst_16 = arith.constant 9.99999997E-7 : f32
    %21 = vector.broadcast %cst_16 : f32 to vector<16x1xf32>
    %22 = arith.addf %20, %21 : vector<16x1xf32>
    %23 = vector.broadcast %22 : vector<16x1xf32> to vector<16x32xf32>
    %24 = arith.divf %19, %23 : vector<16x32xf32>
    %25 = vector.broadcast %2 : vector<1x32xf32> to vector<16x32xf32>
    %26 = arith.addf %24, %25 : vector<16x32xf32>
    %27 = arith.truncf %26 : vector<16x32xf32> to vector<16x32xbf16>
    %cst_17 = arith.constant dense<0.000000e+00> : vector<16x64xf32>
    %28 = tpu.matmul %27, %3, %cst_17 {dimension_numbers = #tpu.dot_dimension_numbers<[1], [0], [0], [1], [0, 0, 1, 1], [], []>} : vector<16x32xbf16>, vector<32x64xbf16>, vector<16x64xf32> -> vector<16x64xf32>
    %29 = vector.broadcast %4 : vector<1x64xf32> to vector<16x64xf32>
    %30 = arith.addf %28, %29 : vector<16x64xf32>
    %cst_18 = arith.constant 0.000000e+00 : f32
    %31 = vector.broadcast %cst_18 : f32 to vector<16x64xf32>
    %32 = arith.maximumf %30, %31 : vector<16x64xf32>
    %33 = arith.truncf %32 : vector<16x64xf32> to vector<16x64xbf16>
    %cst_19 = arith.constant dense<0.000000e+00> : vector<16x32xf32>
    %34 = tpu.matmul %33, %5, %cst_19 {dimension_numbers = #tpu.dot_dimension_numbers<[1], [0], [0], [1], [0, 0, 1, 1], [], []>} : vector<16x64xbf16>, vector<64x32xbf16>, vector<16x32xf32> -> vector<16x32xf32>
    %35 = vector.broadcast %6 : vector<1x32xf32> to vector<16x32xf32>
    %36 = arith.addf %34, %35 : vector<16x32xf32>
    %37 = arith.addf %0, %36 : vector<16x32xf32>
    %c0_20 = arith.constant 0 : index
    %c0_21 = arith.constant 0 : index
    %38 = vector.load %arg8[%c0_20, %c0_21] : memref<16x32xf32, #tpu.memory_space<vmem>>, vector<16x32xf32>
    tpu.vector_store %arg8[%c0_20, %c0_21], %37 {strides = array<i32>} : memref<16x32xf32, #tpu.memory_space<vmem>>, vector<16x32xf32>,
    return
  }
  func.func @transform_0(%arg0: i32) -> (i32, i32) {
    %c0_i32 = arith.constant 0 : i32
    %c0_i32_0 = arith.constant 0 : i32
    return %arg0, %c0_i32 : i32, i32
  }
  func.func @transform_1(%arg0: i32) -> (i32, i32) {
    %c0_i32 = arith.constant 0 : i32
    %c0_i32_0 = arith.constant 0 : i32
    %c0_i32_1 = arith.constant 0 : i32
    return %c0_i32, %c0_i32_0 : i32, i32
  }
  func.func @transform_2(%arg0: i32) -> (i32, i32) {
    %c0_i32 = arith.constant 0 : i32
    %c0_i32_0 = arith.constant 0 : i32
    %c0_i32_1 = arith.constant 0 : i32
    return %c0_i32, %c0_i32_0 : i32, i32
  }
  func.func @transform_3(%arg0: i32) -> (i32, i32) {
    %c0_i32 = arith.constant 0 : i32
    %c0_i32_0 = arith.constant 0 : i32
    %c0_i32_1 = arith.constant 0 : i32
    return %c0_i32, %c0_i32_0 : i32, i32
  }
  func.func @transform_4(%arg0: i32) -> (i32, i32) {
    %c0_i32 = arith.constant 0 : i32
    %c0_i32_0 = arith.constant 0 : i32
    %c0_i32_1 = arith.constant 0 : i32
    return %c0_i32, %c0_i32_0 : i32, i32
  }
  func.func @transform_5(%arg0: i32) -> (i32, i32) {
    %c0_i32 = arith.constant 0 : i32
    %c0_i32_0 = arith.constant 0 : i32
    %c0_i32_1 = arith.constant 0 : i32
    return %c0_i32, %c0_i32_0 : i32, i32
  }
  func.func @transform_6(%arg0: i32) -> (i32, i32) {
    %c0_i32 = arith.constant 0 : i32
    %c0_i32_0 = arith.constant 0 : i32
    %c0_i32_1 = arith.constant 0 : i32
    return %c0_i32, %c0_i32_0 : i32, i32
  }
  func.func @transform_7(%arg0: i32) -> (i32, i32) {
    %c0_i32 = arith.constant 0 : i32
    %c0_i32_0 = arith.constant 0 : i32
    return %arg0, %c0_i32 : i32, i32
  }
}

module attributes {stable_mosaic.version = 11 : i64} {
  func.func @kernel(%arg0: i32, %arg1: memref<16x32xf32, #tpu.memory_space<vmem>>, %arg2: memref<1x32xf32, #tpu.memory_space<vmem>>, %arg3: memref<1x32xf32, #tpu.memory_space<vmem>>, %arg4: memref<32x64xbf16, #tpu.memory_space<vmem>>, %arg5: memref<1x64xf32, #tpu.memory_space<vmem>>, %arg6: memref<64x32xbf16, #tpu.memory_space<vmem>>, %arg7: memref<1x32xf32, #tpu.memory_space<vmem>>, %arg8: memref<1x32xf32, #tpu.memory_space<vmem>>, %arg9: memref<1x32xf32, #tpu.memory_space<vmem>>, %arg10: memref<16x32xf32, #tpu.memory_space<vmem>>) attributes {dimension_semantics = [#tpu.dimension_semantics<parallel>], iteration_bounds = array<i64: 1>, scalar_prefetch = 0 : i64, scratch_operands = 0 : i64, tpu.core_type = #tpu.core_type<tc>, window_params = [{transform_indices = @transform_0, window_bounds = array<i64: 16, 32>}, {pipeline_mode = #tpu.pipeline_mode<synchronous>, transform_indices = @transform_1, window_bounds = array<i64: 1, 32>}, {pipeline_mode = #tpu.pipeline_mode<synchronous>, transform_indices = @transform_2, window_bounds = array<i64: 1, 32>}, {pipeline_mode = #tpu.pipeline_mode<synchronous>, transform_indices = @transform_3, window_bounds = array<i64: 32, 64>}, {pipeline_mode = #tpu.pipeline_mode<synchronous>, transform_indices = @transform_4, window_bounds = array<i64: 1, 64>}, {pipeline_mode = #tpu.pipeline_mode<synchronous>, transform_indices = @transform_5, window_bounds = array<i64: 64, 32>}, {pipeline_mode = #tpu.pipeline_mode<synchronous>, transform_indices = @transform_6, window_bounds = array<i64: 1, 32>}, {pipeline_mode = #tpu.pipeline_mode<synchronous>, transform_indices = @transform_7, window_bounds = array<i64: 1, 32>}, {pipeline_mode = #tpu.pipeline_mode<synchronous>, transform_indices = @transform_8, window_bounds = array<i64: 1, 32>}, {transform_indices = @transform_9, window_bounds = array<i64: 16, 32>}]} {
    %c0 = arith.constant 0 : index
    %c0_0 = arith.constant 0 : index
    %0 = vector.load %arg1[%c0, %c0_0] : memref<16x32xf32, #tpu.memory_space<vmem>>, vector<16x32xf32>
    %c0_1 = arith.constant 0 : index
    %c0_2 = arith.constant 0 : index
    %1 = vector.load %arg2[%c0_1, %c0_2] : memref<1x32xf32, #tpu.memory_space<vmem>>, vector<1x32xf32>
    %c0_3 = arith.constant 0 : index
    %c0_4 = arith.constant 0 : index
    %2 = vector.load %arg3[%c0_3, %c0_4] : memref<1x32xf32, #tpu.memory_space<vmem>>, vector<1x32xf32>
    %c0_5 = arith.constant 0 : index
    %c0_6 = arith.constant 0 : index
    %3 = vector.load %arg4[%c0_5, %c0_6] : memref<32x64xbf16, #tpu.memory_space<vmem>>, vector<32x64xbf16>
    %c0_7 = arith.constant 0 : index
    %c0_8 = arith.constant 0 : index
    %4 = vector.load %arg5[%c0_7, %c0_8] : memref<1x64xf32, #tpu.memory_space<vmem>>, vector<1x64xf32>
    %c0_9 = arith.constant 0 : index
    %c0_10 = arith.constant 0 : index
    %5 = vector.load %arg6[%c0_9, %c0_10] : memref<64x32xbf16, #tpu.memory_space<vmem>>, vector<64x32xbf16>
    %c0_11 = arith.constant 0 : index
    %c0_12 = arith.constant 0 : index
    %6 = vector.load %arg7[%c0_11, %c0_12] : memref<1x32xf32, #tpu.memory_space<vmem>>, vector<1x32xf32>
    %cst = arith.constant dense<0.000000e+00> : vector<16xf32>
    %7 = vector.multi_reduction <add>, %0, %cst [1] : vector<16x32xf32> to vector<16xf32>
    %8 = vector.shape_cast %7 : vector<16xf32> to vector<16x1xf32>
    %cst_13 = arith.constant 3.200000e+01 : f32
    %9 = vector.broadcast %cst_13 : f32 to vector<16x1xf32>
    %10 = arith.divf %8, %9 : vector<16x1xf32>
    %11 = vector.broadcast %10 : vector<16x1xf32> to vector<16x32xf32>
    %12 = arith.subf %0, %11 : vector<16x32xf32>
    %13 = arith.mulf %12, %12 : vector<16x32xf32>
    %cst_14 = arith.constant dense<0.000000e+00> : vector<16xf32>
    %14 = vector.multi_reduction <add>, %13, %cst_14 [1] : vector<16x32xf32> to vector<16xf32>
    %15 = vector.shape_cast %14 : vector<16xf32> to vector<16x1xf32>
    %cst_15 = arith.constant 3.100000e+01 : f32
    %16 = vector.broadcast %cst_15 : f32 to vector<16x1xf32>
    %17 = arith.divf %15, %16 : vector<16x1xf32>
    %18 = vector.broadcast %1 : vector<1x32xf32> to vector<16x32xf32>
    %19 = arith.mulf %18, %12 : vector<16x32xf32>
    %20 = math.sqrt %17 : vector<16x1xf32>
    %cst_16 = arith.constant 9.99999997E-7 : f32
    %21 = vector.broadcast %cst_16 : f32 to vector<16x1xf32>
    %22 = arith.addf %20, %21 : vector<16x1xf32>
    %23 = vector.broadcast %22 : vector<16x1xf32> to vector<16x32xf32>
    %24 = arith.divf %19, %23 : vector<16x32xf32>
    %25 = vector.broadcast %2 : vector<1x32xf32> to vector<16x32xf32>
    %26 = arith.addf %24, %25 : vector<16x32xf32>
    %27 = arith.truncf %26 : vector<16x32xf32> to vector<16x32xbf16>
    %cst_17 = arith.constant dense<0.000000e+00> : vector<16x64xf32>
    %28 = tpu.matmul %27, %3, %cst_17 {dimension_numbers = #tpu.dot_dimension_numbers<[1], [0], [0], [1], [0, 0, 1, 1], [], []>} : vector<16x32xbf16>, vector<32x64xbf16>, vector<16x64xf32> -> vector<16x64xf32>
    %29 = vector.broadcast %4 : vector<1x64xf32> to vector<16x64xf32>
    %30 = arith.addf %28, %29 : vector<16x64xf32>
    %cst_18 = arith.constant 0.000000e+00 : f32
    %31 = vector.broadcast %cst_18 : f32 to vector<16x64xf32>
    %32 = arith.maximumf %30, %31 : vector<16x64xf32>
    %33 = arith.truncf %32 : vector<16x64xf32> to vector<16x64xbf16>
    %cst_19 = arith.constant dense<0.000000e+00> : vector<16x32xf32>
    %34 = tpu.matmul %33, %5, %cst_19 {dimension_numbers = #tpu.dot_dimension_numbers<[1], [0], [0], [1], [0, 0, 1, 1], [], []>} : vector<16x64xbf16>, vector<64x32xbf16>, vector<16x32xf32> -> vector<16x32xf32>
    %35 = vector.broadcast %6 : vector<1x32xf32> to vector<16x32xf32>
    %36 = arith.addf %34, %35 : vector<16x32xf32>
    %37 = arith.addf %0, %36 : vector<16x32xf32>
    %c0_20 = arith.constant 0 : index
    %c0_21 = arith.constant 0 : index
    %38 = vector.load %arg8[%c0_20, %c0_21] : memref<1x32xf32, #tpu.memory_space<vmem>>, vector<1x32xf32>
    %c0_22 = arith.constant 0 : index
    %c0_23 = arith.constant 0 : index
    %39 = vector.load %arg9[%c0_22, %c0_23] : memref<1x32xf32, #tpu.memory_space<vmem>>, vector<1x32xf32>
    %cst_24 = arith.constant dense<0.000000e+00> : vector<16xf32>
    %40 = vector.multi_reduction <add>, %37, %cst_24 [1] : vector<16x32xf32> to vector<16xf32>
    %41 = vector.shape_cast %40 : vector<16xf32> to vector<16x1xf32>
    %cst_25 = arith.constant 3.200000e+01 : f32
    %42 = vector.broadcast %cst_25 : f32 to vector<16x1xf32>
    %43 = arith.divf %41, %42 : vector<16x1xf32>
    %44 = vector.broadcast %43 : vector<16x1xf32> to vector<16x32xf32>
    %45 = arith.subf %37, %44 : vector<16x32xf32>
    %46 = arith.mulf %45, %45 : vector<16x32xf32>
    %cst_26 = arith.constant dense<0.000000e+00> : vector<16xf32>
    %47 = vector.multi_reduction <add>, %46, %cst_26 [1] : vector<16x32xf32> to vector<16xf32>
    %48 = vector.shape_cast %47 : vector<16xf32> to vector<16x1xf32>
    %cst_27 = arith.constant 3.100000e+01 : f32
    %49 = vector.broadcast %cst_27 : f32 to vector<16x1xf32>
    %50 = arith.divf %48, %49 : vector<16x1xf32>
    %51 = vector.broadcast %38 : vector<1x32xf32> to vector<16x32xf32>
    %52 = arith.mulf %51, %45 : vector<16x32xf32>
    %53 = math.sqrt %50 : vector<16x1xf32>
    %cst_28 = arith.constant 9.99999997E-7 : f32
    %54 = vector.broadcast %cst_28 : f32 to vector<16x1xf32>
    %55 = arith.addf %53, %54 : vector<16x1xf32>
    %56 = vector.broadcast %55 : vector<16x1xf32> to vector<16x32xf32>
    %57 = arith.divf %52, %56 : vector<16x32xf32>
    %58 = vector.broadcast %39 : vector<1x32xf32> to vector<16x32xf32>
    %59 = arith.addf %57, %58 : vector<16x32xf32>
    %c0_29 = arith.constant 0 : index
    %c0_30 = arith.constant 0 : index
    %60 = vector.load %arg10[%c0_29, %c0_30] : memref<16x32xf32, #tpu.memory_space<vmem>>, vector<16x32xf32>
    tpu.vector_store %arg10[%c0_29, %c0_30], %59 {strides = array<i32>} : memref<16x32xf32, #tpu.memory_space<vmem>>, vector<16x32xf32>,
    return
  }
  func.func @transform_0(%arg0: i32) -> (i32, i32) {
    %c0_i32 = arith.constant 0 : i32
    %c0_i32_0 = arith.constant 0 : i32
    return %arg0, %c0_i32 : i32, i32
  }
  func.func @transform_1(%arg0: i32) -> (i32, i32) {
    %c0_i32 = arith.constant 0 : i32
    %c0_i32_0 = arith.constant 0 : i32
    %c0_i32_1 = arith.constant 0 : i32
    return %c0_i32, %c0_i32_0 : i32, i32
  }
  func.func @transform_2(%arg0: i32) -> (i32, i32) {
    %c0_i32 = arith.constant 0 : i32
    %c0_i32_0 = arith.constant 0 : i32
    %c0_i32_1 = arith.constant 0 : i32
    return %c0_i32, %c0_i32_0 : i32, i32
  }
  func.func @transform_3(%arg0: i32) -> (i32, i32) {
    %c0_i32 = arith.constant 0 : i32
    %c0_i32_0 = arith.constant 0 : i32
    %c0_i32_1 = arith.constant 0 : i32
    return %c0_i32, %c0_i32_0 : i32, i32
  }
  func.func @transform_4(%arg0: i32) -> (i32, i32) {
    %c0_i32 = arith.constant 0 : i32
    %c0_i32_0 = arith.constant 0 : i32
    %c0_i32_1 = arith.constant 0 : i32
    return %c0_i32, %c0_i32_0 : i32, i32
  }
  func.func @transform_5(%arg0: i32) -> (i32, i32) {
    %c0_i32 = arith.constant 0 : i32
    %c0_i32_0 = arith.constant 0 : i32
    %c0_i32_1 = arith.constant 0 : i32
    return %c0_i32, %c0_i32_0 : i32, i32
  }
  func.func @transform_6(%arg0: i32) -> (i32, i32) {
    %c0_i32 = arith.constant 0 : i32
    %c0_i32_0 = arith.constant 0 : i32
    %c0_i32_1 = arith.constant 0 : i32
    return %c0_i32, %c0_i32_0 : i32, i32
  }
  func.func @transform_7(%arg0: i32) -> (i32, i32) {
    %c0_i32 = arith.constant 0 : i32
    %c0_i32_0 = arith.constant 0 : i32
    %c0_i32_1 = arith.constant 0 : i32
    return %c0_i32, %c0_i32_0 : i32, i32
  }
  func.func @transform_8(%arg0: i32) -> (i32, i32) {
    %c0_i32 = arith.constant 0 : i32
    %c0_i32_0 = arith.constant 0 : i32
    %c0_i32_1 = arith.constant 0 : i32
    return %c0_i32, %c0_i32_0 : i32, i32
  }
  func.func @transform_9(%arg0: i32) -> (i32, i32) {
    %c0_i32 = arith.constant 0 : i32
    %c0_i32_0 = arith.constant 0 : i32
    return %arg0, %c0_i32 : i32, i32
  }
}

</mosaic_0001>

<llo_original>
// kernel: tpu_custom_call.1
$region0: #{tpu_custom_call.1}
  #allocation0 [shape = 'u32[]', space=smem, size = 0x4, offset = 0x4, fixed_abs, tag = 'smem constant byte address 0x4 - core index']
  #allocation1 [shape = 'u32[144,128]{1,0:T(1,128)}', space=vmem, size = 0x12000, scoped, tag = 'internal scratch']
  %s0 = inlined_call_operand.hbm [shape: f32[16,128], index: 0, kind: input, shape index: {}]
  %s1 = inlined_call_operand.hbm [shape: f32[16,128], index: 1, kind: output, shape index: {}]
  %s2 = sld [smem:[#allocation0]]
  $region41: #{tpu_custom_call.1} parent=0
    _
  %s4 = ssub.s32 1, %s2
  %s5 = scalar_select 0, %s4, %s2
  $region1: #{tpu_custom_call.1} parent=0
    #allocation2 [shape = 'u8[4096]{0}', space=vmem, size = 0x1000, scoped, tag = 'input window, operand 0, single buffered']
    #allocation3 [shape = 's32[2]{0}', space=sflag, size = 0x8, scoped, tag = 'scoped memory for tpu_custom_call.1']
    #allocation4 [shape = 's32[2]{0}', space=sflag, size = 0x8, scoped, tag = 'scoped memory for tpu_custom_call.1']
    #allocation5 [shape = 'u8[8192]{0}', space=vmem, size = 0x2000, scoped, tag = 'output window, operand 0']
    %6 = vsyncpa [#allocation3], 0
    %7 = vsyncpa [#allocation4], 0
    %s8 = scalar_lea.sflag [#allocation4], 1
    %9 = vsyncpa %s8, 0
    loop: start=0, step=1, limit=4
    $region2: #{tpu_custom_call.1} parent=1 // loop_pre_header
      _
    $region3: #{tpu_custom_call.1} parent=1 // loop_header
      %s11 = sphi 0, %s15
      %p12 = scmp.ge.s32.totalorder %s11, 4
      %s19 = sphi 0, %s19
      %s21 = sphi 0, %s19
      %s22 = sphi 0, %s21
      %s36 = sphi 0, %s22
      %s42 = sphi 0, %s44
      %s45 = sphi 0, %s42
      %s46 = sphi 0, %s45
      %s62 = sphi 0, %s46
    $region4: #{tpu_custom_call.1} parent=1 // loop_header_branch
      %14 = sbr.rel (%p12) target = $region8
    $region5: #{tpu_custom_call.1} parent=1 // loop_body
      %s16 = ssub.s32 %s11, 1
      %s17 = ssub.s32 %s11, 2
      %s18 = sadd.s32 %s11, 1
      %s20 = sadd.s32 %s19, 1
      %p23 = scmp.eq.s32.totalorder %s11, 1
      %p24 = scmp.ne.s32.totalorder %s19, %s21
      %p25 = scmp.eq.s32.totalorder %s11, 0
      %p26 = por %p24, %p25
      %p27 = scmp.ne.s32.totalorder %s19, %s21
      %p28 = scmp.eq.s32.totalorder %s16, 1
      %p29 = por %p27, %p28
      %p30 = scmp.ne.s32.totalorder %s21, %s22
      %p31 = scmp.eq.s32.totalorder %s16, 0
      %p32 = por %p30, %p31
      %p33 = scmp.ne.s32.totalorder %s21, %s22
      %p34 = scmp.eq.s32.totalorder %s17, 1
      %p35 = por %p33, %p34
      %p37 = scmp.ne.s32.totalorder %s22, %s36
      %p38 = scmp.eq.s32.totalorder %s17, 0
      %p39 = por %p37, %p38
      %s40 = ssub.s32 %s11, %s18
      %p41 = scmp.eq.s32.totalorder %s40, 0
      %s43 = sadd.s32 %s42, 1
      %s44 = scalar_select %p41, %s42, %s43
      %p47 = pneg %p41
      %p48 = scmp.eq.s32.totalorder %s11, 1
      %p49 = por %p47, %p48
      %p50 = scmp.ne.s32.totalorder %s42, %s45
      %p51 = scmp.eq.s32.totalorder %s11, 0
      %p52 = por %p50, %p51
      %p53 = scmp.ne.s32.totalorder %s42, %s45
      %p54 = scmp.eq.s32.totalorder %s16, 1
      %p55 = por %p53, %p54
      %p56 = scmp.ne.s32.totalorder %s45, %s46
      %p57 = scmp.eq.s32.totalorder %s16, 0
      %p58 = por %p56, %p57
      %p59 = scmp.ne.s32.totalorder %s45, %s46
      %p60 = scmp.eq.s32.totalorder %s17, 1
      %p61 = por %p59, %p60
      %p63 = scmp.ne.s32.totalorder %s46, %s62
      %p64 = scmp.eq.s32.totalorder %s17, 0
      %p65 = por %p63, %p64
      %p66 = scmp.le.s32.totalorder 1, %s11
      %p67 = scmp.lt.s32.totalorder %s11, 3
      %p68 = pnand %p66, %p67
      %p69 = pneg %p68
      // Predicated region
      $region9: #{tpu_custom_call.1} parent=5 // pred_check
        _
      $region10: #{tpu_custom_call.1} parent=5 // pred_check_branch
        %71 = sbr.rel (%p68) target = $region12
      $region11: #{tpu_custom_call.1} parent=5 // pred_region
        %s72 = ssub.s32 %s11, 1
        // Predicated region
        $region13: #{tpu_custom_call.1} parent=11 // pred_check
          %p73 = pneg %p32
        $region14: #{tpu_custom_call.1} parent=11 // pred_check_branch
          %75 = sbr.rel (%p73) target = $region16
        $region15: #{tpu_custom_call.1} parent=11 // pred_region
          %s77 = ssub.s32 128, 128
          %78 = vsyncadd [#allocation3], %s77
          %s80 = sshll.u32 [#allocation2], 4
          %s81 = int_to_ptr.vmem [resolvable:$true] %s80
          %83 = dma.hbm_to_vmem [thread:$0]  %s0, 128, %s81, [#allocation3]
        $region16: #{tpu_custom_call.1} parent=11 // pred_fallthru
          _
      $region12: #{tpu_custom_call.1} parent=5 // pred_fallthru
        _
      %p84 = scmp.lt.s32.totalorder %s11, 2
      // Predicated region
      $region17: #{tpu_custom_call.1} parent=5 // pred_check
        %p85 = pneg %p84
      $region18: #{tpu_custom_call.1} parent=5 // pred_check_branch
        %87 = sbr.rel (%p85) target = $region20
      $region19: #{tpu_custom_call.1} parent=5 // pred_region
        _
      $region20: #{tpu_custom_call.1} parent=5 // pred_fallthru
        _
      %p88 = scmp.le.s32.totalorder 1, %s11
      %p89 = scmp.lt.s32.totalorder %s11, 3
      %p90 = pnand %p88, %p89
      %p91 = pneg %p90
      // Predicated region
      $region21: #{tpu_custom_call.1} parent=5 // pred_check
        _
      $region22: #{tpu_custom_call.1} parent=5 // pred_check_branch
        %93 = sbr.rel (%p90) target = $region24
      $region23: #{tpu_custom_call.1} parent=5 // pred_region
        %s94 = ssub.s32 %s11, 1
        // Predicated region
        $region25: #{tpu_custom_call.1} parent=23 // pred_check
          %p95 = pneg %p32
        $region26: #{tpu_custom_call.1} parent=23 // pred_check_branch
          %97 = sbr.rel (%p95) target = $region28
        $region27: #{tpu_custom_call.1} parent=23 // pred_region
          %98 = dma.done [#allocation3], 128
        $region28: #{tpu_custom_call.1} parent=23 // pred_fallthru
          _
        %p99 = pneg %p32
        %p100 = pneg %p29
        %p101 = pneg %p58
        %p102 = pneg %p55
        %s103 = sand.u32 %s45, 1
        %s104 = scalar_lea.sflag [#allocation4], %s103
        %s105 = sand.u32 %s45, 1
        %s106 = smul.addr %s105, 8
        %s107 = scalar_lea.vmem [#allocation5], %s106
        %v108 = vld [vmem:[#allocation2] sm:$0xff]
        %v109 = vadd.f32 %v108, 1.0
        %110 = vst [vmem:[%s107] sm:$0xff] %v109
        %s111 = sand.u32 %s45, 1
        %s112 = scalar_lea.sflag [#allocation4], %s111
        %s113 = sand.u32 %s45, 1
        %s114 = smul.addr %s113, 8
        %s115 = scalar_lea.vmem [#allocation5], %s114
        // Predicated region
        $region29: #{tpu_custom_call.1} parent=23 // pred_check
          %p116 = pneg %p55
        $region30: #{tpu_custom_call.1} parent=23 // pred_check_branch
          %118 = sbr.rel (%p116) target = $region32
        $region31: #{tpu_custom_call.1} parent=23 // pred_region
          %s120 = ssub.s32 128, 128
          %121 = vsyncadd %s112, %s120
          %s122 = smul.addr %s16, 128
          %s123 = scalar_lea.hbm %s1, %s122
          %s125 = sshll.u32 %s115, 4
          %s126 = int_to_ptr.vmem [resolvable:$true] %s125
          %128 = dma.vmem_to_hbm [thread:$0]  %s126, 128, %s123, %s112
        $region32: #{tpu_custom_call.1} parent=23 // pred_fallthru
          _
      $region24: #{tpu_custom_call.1} parent=5 // pred_fallthru
        _
      %p129 = scmp.le.s32.totalorder 2, %s11
      // Predicated region
      $region33: #{tpu_custom_call.1} parent=5 // pred_check
        %p130 = pneg %p129
      $region34: #{tpu_custom_call.1} parent=5 // pred_check_branch
        %132 = sbr.rel (%p130) target = $region36
      $region35: #{tpu_custom_call.1} parent=5 // pred_region
        %s133 = ssub.s32 %s11, 2
        // Predicated region
        $region37: #{tpu_custom_call.1} parent=35 // pred_check
          %p134 = pneg %p61
        $region38: #{tpu_custom_call.1} parent=35 // pred_check_branch
          %136 = sbr.rel (%p134) target = $region40
        $region39: #{tpu_custom_call.1} parent=35 // pred_region
          %s137 = sand.u32 %s46, 1
          %s138 = scalar_lea.sflag [#allocation4], %s137
          %s139 = sand.u32 %s46, 1
          %s140 = smul.addr %s139, 8
          %s141 = scalar_lea.vmem [#allocation5], %s140
          %142 = dma.done %s138, 128
        $region40: #{tpu_custom_call.1} parent=35 // pred_fallthru
          _
      $region36: #{tpu_custom_call.1} parent=5 // pred_fallthru
        _
    $region6: #{tpu_custom_call.1} parent=1 // loop_footer
      %s15 = sadd.s32 1, %s11
    $region7: #{tpu_custom_call.1} parent=1 // loop_footer_branch
      %10 = sbr.rel target = $region3
    $region8: #{tpu_custom_call.1} parent=1 // loop_exit
      _
    %143 = vsyncpa [#allocation3], 1
    %s144 = scalar_lea.sflag [#allocation3], 1
    %145 = vsyncpa %s144, 1
    %146 = vsyncpa [#allocation4], 1
    %s147 = scalar_lea.sflag [#allocation4], 1
    %148 = vsyncpa %s147, 1

// kernel: _decoder_forward_jit.7
$region0: #{_decoder_forward_jit.7}
  #allocation0 [shape = 'u32[]', space=smem, size = 0x4, offset = 0x4, fixed_abs, tag = 'smem constant byte address 0x4 - core index']
  #allocation1 [shape = 'u32[144,128]{1,0:T(1,128)}', space=vmem, size = 0x12000, scoped, tag = 'internal scratch']
  %s0 = inlined_call_operand.hbm [shape: f32[2,8,32], index: 0, kind: input, shape index: {}]
  %s1 = inlined_call_operand.hbm [shape: f32[2,16,32], index: 1, kind: input, shape index: {}]
  %s2 = inlined_call_operand.hbm [shape: bf16[2,8,16], index: 2, kind: input, shape index: {}]
  %s3 = inlined_call_operand.hbm [shape: f32[1,32], index: 3, kind: input, shape index: {}]
  %s4 = inlined_call_operand.hbm [shape: f32[1,32], index: 4, kind: input, shape index: {}]
  %s5 = inlined_call_operand.hbm [shape: bf16[32,32], index: 5, kind: input, shape index: {}]
  %s6 = inlined_call_operand.hbm [shape: f32[1,32], index: 6, kind: input, shape index: {}]
  %s7 = inlined_call_operand.hbm [shape: bf16[32,64], index: 7, kind: input, shape index: {}]
  %s8 = inlined_call_operand.hbm [shape: f32[1,64], index: 8, kind: input, shape index: {}]
  %s9 = inlined_call_operand.hbm [shape: bf16[32,32], index: 9, kind: input, shape index: {}]
  %s10 = inlined_call_operand.hbm [shape: f32[1,32], index: 10, kind: input, shape index: {}]
  %s11 = inlined_call_operand.hbm [shape: f32[2,8,32], index: 11, kind: output, shape index: {}]
  %s12 = sld [smem:[#allocation0]]
  $region121: #{_decoder_forward_jit.7} parent=0
    _
  %s14 = ssub.s32 1, %s12
  %s15 = scalar_select 0, %s14, %s12
  $region1: #{_decoder_forward_jit.7} parent=0
    #allocation2 [shape = 'u8[8192]{0}', space=vmem, size = 0x2000, scoped, tag = 'input window, operand 0']
    #allocation3 [shape = 's32[2]{0}', space=sflag, size = 0x8, scoped, tag = 'scoped memory for _decoder_forward_jit.7']
    #allocation4 [shape = 's32[2]{0}', space=sflag, size = 0x8, scoped, tag = 'scoped memory for _decoder_forward_jit.7']
    #allocation5 [shape = 'u8[16384]{0}', space=vmem, size = 0x4000, scoped, tag = 'input window, operand 1']
    #allocation6 [shape = 's32[2]{0}', space=sflag, size = 0x8, scoped, tag = 'scoped memory for _decoder_forward_jit.7']
    #allocation7 [shape = 'u8[4096]{0}', space=vmem, size = 0x1000, scoped, tag = 'input window, operand 2']
    #allocation8 [shape = 'u8[512]{0}', space=vmem, size = 0x400, scoped, tag = 'input window, operand 3, single buffered']
    #allocation9 [shape = 's32[1]{0}', space=sflag, size = 0x4, scoped, tag = 'scoped memory for _decoder_forward_jit.7']
    #allocation10 [shape = 'u8[512]{0}', space=vmem, size = 0x400, scoped, tag = 'input window, operand 4, single buffered']
    #allocation11 [shape = 'u8[8192]{0}', space=vmem, size = 0x2000, scoped, tag = 'input window, operand 5, single buffered']
    #allocation12 [shape = 's32[1]{0}', space=sflag, size = 0x4, scoped, tag = 'scoped memory for _decoder_forward_jit.7']
    #allocation13 [shape = 'u8[512]{0}', space=vmem, size = 0x400, scoped, tag = 'input window, operand 6, single buffered']
    #allocation14 [shape = 'u8[8192]{0}', space=vmem, size = 0x2000, scoped, tag = 'input window, operand 7, single buffered']
    #allocation15 [shape = 's32[1]{0}', space=sflag, size = 0x4, scoped, tag = 'scoped memory for _decoder_forward_jit.7']
    #allocation16 [shape = 'u8[512]{0}', space=vmem, size = 0x400, scoped, tag = 'input window, operand 8, single buffered']
    #allocation17 [shape = 'u8[8192]{0}', space=vmem, size = 0x2000, scoped, tag = 'input window, operand 9, single buffered']
    #allocation18 [shape = 's32[1]{0}', space=sflag, size = 0x4, scoped, tag = 'scoped memory for _decoder_forward_jit.7']
    #allocation19 [shape = 'u8[512]{0}', space=vmem, size = 0x400, scoped, tag = 'input window, operand 10, single buffered']
    #allocation20 [shape = 'u8[8192]{0}', space=vmem, size = 0x2000, scoped, tag = 'output window, operand 0']
    %16 = vsyncpa [#allocation3], 0
    %s17 = scalar_lea.sflag [#allocation3], 1
    %18 = vsyncpa %s17, 0
    %19 = vsyncpa [#allocation6], 0
    %s20 = scalar_lea.sflag [#allocation6], 1
    %21 = vsyncpa %s20, 0
    %22 = vsyncpa [#allocation9], 0
    %23 = vsyncpa [#allocation12], 0
    %24 = vsyncpa [#allocation15], 0
    %25 = vsyncpa [#allocation18], 0
    %26 = vsyncpa [#allocation4], 0
    %s27 = scalar_lea.sflag [#allocation4], 1
    %28 = vsyncpa %s27, 0
    loop: start=0, step=1, limit=4
    $region2: #{_decoder_forward_jit.7} parent=1 // loop_pre_header
      _
    $region3: #{_decoder_forward_jit.7} parent=1 // loop_header
      %s30 = sphi 0, %s34
      %p31 = scmp.ge.s32.totalorder %s30, 4
      %s37 = sphi 0, %s49
      %s38 = sphi 0, %s45
      %s39 = sphi 0, %s37
      %s40 = sphi 0, %s38
      %s41 = sphi 0, %s39
      %s42 = sphi 0, %s40
      %s54 = sphi 0, %s56
      %s57 = sphi 0, %s54
      %s58 = sphi 0, %s57
      %s74 = sphi 0, %s58
      %s80 = sphi 0, %s82
      %s83 = sphi 0, %s80
      %s84 = sphi 0, %s83
      %s100 = sphi 0, %s84
      %s108 = sphi 0, %s110
      %s111 = sphi 0, %s108
      %s112 = sphi 0, %s111
      %s128 = sphi 0, %s112
      %s132 = sphi 0, %s132
      %s134 = sphi 0, %s132
      %s135 = sphi 0, %s134
      %s149 = sphi 0, %s135
      %s153 = sphi 0, %s153
      %s155 = sphi 0, %s153
      %s156 = sphi 0, %s155
      %s170 = sphi 0, %s156
      %s174 = sphi 0, %s174
      %s176 = sphi 0, %s174
      %s177 = sphi 0, %s176
      %s191 = sphi 0, %s177
      %s195 = sphi 0, %s195
      %s197 = sphi 0, %s195
      %s198 = sphi 0, %s197
      %s212 = sphi 0, %s198
      %s216 = sphi 0, %s216
      %s218 = sphi 0, %s216
      %s219 = sphi 0, %s218
      %s233 = sphi 0, %s219
      %s237 = sphi 0, %s237
      %s239 = sphi 0, %s237
      %s240 = sphi 0, %s239
      %s254 = sphi 0, %s240
      %s258 = sphi 0, %s258
      %s260 = sphi 0, %s258
      %s261 = sphi 0, %s260
      %s275 = sphi 0, %s261
      %s279 = sphi 0, %s279
      %s281 = sphi 0, %s279
      %s282 = sphi 0, %s281
      %s296 = sphi 0, %s282
      %s304 = sphi 0, %s306
      %s307 = sphi 0, %s304
      %s308 = sphi 0, %s307
      %s324 = sphi 0, %s308
    $region4: #{_decoder_forward_jit.7} parent=1 // loop_header_branch
      %33 = sbr.rel (%p31) target = $region8
    $region5: #{_decoder_forward_jit.7} parent=1 // loop_body
      %s35 = ssub.s32 %s30, 1
      %s36 = ssub.s32 %s30, 2
      %s43 = sadd.s32 1, %s38
      %p44 = scmp.ge.s32.totalorder %s43, 1
      %s45 = scalar_select %p44, 0, %s43
      %s46 = sadd.s32 1, %s37
      %s47 = scalar_select %p44, %s46, %s37
      %p48 = scmp.ge.s32.totalorder %s47, 2
      %s49 = scalar_select %p48, 0, %s47
      %s50 = ssub.s32 %s37, %s49
      %s51 = ssub.s32 %s38, %s45
      %s52 = sor.u32 %s50, %s51
      %p53 = scmp.eq.s32.totalorder %s52, 0
      %s55 = sadd.s32 %s54, 1
      %s56 = scalar_select %p53, %s54, %s55
      %p59 = pneg %p53
      %p60 = scmp.eq.s32.totalorder %s30, 1
      %p61 = por %p59, %p60
      %p62 = scmp.ne.s32.totalorder %s54, %s57
      %p63 = scmp.eq.s32.totalorder %s30, 0
      %p64 = por %p62, %p63
      %p65 = scmp.ne.s32.totalorder %s54, %s57
      %p66 = scmp.eq.s32.totalorder %s35, 1
      %p67 = por %p65, %p66
      %p68 = scmp.ne.s32.totalorder %s57, %s58
      %p69 = scmp.eq.s32.totalorder %s35, 0
      %p70 = por %p68, %p69
      %p71 = scmp.ne.s32.totalorder %s57, %s58
      %p72 = scmp.eq.s32.totalorder %s36, 1
      %p73 = por %p71, %p72
      %p75 = scmp.ne.s32.totalorder %s58, %s74
      %p76 = scmp.eq.s32.totalorder %s36, 0
      %p77 = por %p75, %p76
      %s78 = ssub.s32 %s37, %s49
      %p79 = scmp.eq.s32.totalorder %s78, 0
      %s81 = sadd.s32 %s80, 1
      %s82 = scalar_select %p79, %s80, %s81
      %p85 = pneg %p79
      %p86 = scmp.eq.s32.totalorder %s30, 1
      %p87 = por %p85, %p86
      %p88 = scmp.ne.s32.totalorder %s80, %s83
      %p89 = scmp.eq.s32.totalorder %s30, 0
      %p90 = por %p88, %p89
      %p91 = scmp.ne.s32.totalorder %s80, %s83
      %p92 = scmp.eq.s32.totalorder %s35, 1
      %p93 = por %p91, %p92
      %p94 = scmp.ne.s32.totalorder %s83, %s84
      %p95 = scmp.eq.s32.totalorder %s35, 0
      %p96 = por %p94, %p95
      %p97 = scmp.ne.s32.totalorder %s83, %s84
      %p98 = scmp.eq.s32.totalorder %s36, 1
      %p99 = por %p97, %p98
      %p101 = scmp.ne.s32.totalorder %s84, %s100
      %p102 = scmp.eq.s32.totalorder %s36, 0
      %p103 = por %p101, %p102
      %s104 = ssub.s32 %s37, %s49
      %s105 = ssub.s32 %s38, %s45
      %s106 = sor.u32 %s104, %s105
      %p107 = scmp.eq.s32.totalorder %s106, 0
      %s109 = sadd.s32 %s108, 1
      %s110 = scalar_select %p107, %s108, %s109
      %p113 = pneg %p107
      %p114 = scmp.eq.s32.totalorder %s30, 1
      %p115 = por %p113, %p114
      %p116 = scmp.ne.s32.totalorder %s108, %s111
      %p117 = scmp.eq.s32.totalorder %s30, 0
      %p118 = por %p116, %p117
      %p119 = scmp.ne.s32.totalorder %s108, %s111
      %p120 = scmp.eq.s32.totalorder %s35, 1
      %p121 = por %p119, %p120
      %p122 = scmp.ne.s32.totalorder %s111, %s112
      %p123 = scmp.eq.s32.totalorder %s35, 0
      %p124 = por %p122, %p123
      %p125 = scmp.ne.s32.totalorder %s111, %s112
      %p126 = scmp.eq.s32.totalorder %s36, 1
      %p127 = por %p125, %p126
      %p129 = scmp.ne.s32.totalorder %s112, %s128
      %p130 = scmp.eq.s32.totalorder %s36, 0
      %p131 = por %p129, %p130
      %s133 = sadd.s32 %s132, 1
      %p136 = scmp.eq.s32.totalorder %s30, 1
      %p137 = scmp.ne.s32.totalorder %s132, %s134
      %p138 = scmp.eq.s32.totalorder %s30, 0
      %p139 = por %p137, %p138
      %p140 = scmp.ne.s32.totalorder %s132, %s134
      %p141 = scmp.eq.s32.totalorder %s35, 1
      %p142 = por %p140, %p141
      %p143 = scmp.ne.s32.totalorder %s134, %s135
      %p144 = scmp.eq.s32.totalorder %s35, 0
      %p145 = por %p143, %p144
      %p146 = scmp.ne.s32.totalorder %s134, %s135
      %p147 = scmp.eq.s32.totalorder %s36, 1
      %p148 = por %p146, %p147
      %p150 = scmp.ne.s32.totalorder %s135, %s149
      %p151 = scmp.eq.s32.totalorder %s36, 0
      %p152 = por %p150, %p151
      %s154 = sadd.s32 %s153, 1
      %p157 = scmp.eq.s32.totalorder %s30, 1
      %p158 = scmp.ne.s32.totalorder %s153, %s155
      %p159 = scmp.eq.s32.totalorder %s30, 0
      %p160 = por %p158, %p159
      %p161 = scmp.ne.s32.totalorder %s153, %s155
      %p162 = scmp.eq.s32.totalorder %s35, 1
      %p163 = por %p161, %p162
      %p164 = scmp.ne.s32.totalorder %s155, %s156
      %p165 = scmp.eq.s32.totalorder %s35, 0
      %p166 = por %p164, %p165
      %p167 = scmp.ne.s32.totalorder %s155, %s156
      %p168 = scmp.eq.s32.totalorder %s36, 1
      %p169 = por %p167, %p168
      %p171 = scmp.ne.s32.totalorder %s156, %s170
      %p172 = scmp.eq.s32.totalorder %s36, 0
      %p173 = por %p171, %p172
      %s175 = sadd.s32 %s174, 1
      %p178 = scmp.eq.s32.totalorder %s30, 1
      %p179 = scmp.ne.s32.totalorder %s174, %s176
      %p180 = scmp.eq.s32.totalorder %s30, 0
      %p181 = por %p179, %p180
      %p182 = scmp.ne.s32.totalorder %s174, %s176
      %p183 = scmp.eq.s32.totalorder %s35, 1
      %p184 = por %p182, %p183
      %p185 = scmp.ne.s32.totalorder %s176, %s177
      %p186 = scmp.eq.s32.totalorder %s35, 0
      %p187 = por %p185, %p186
      %p188 = scmp.ne.s32.totalorder %s176, %s177
      %p189 = scmp.eq.s32.totalorder %s36, 1
      %p190 = por %p188, %p189
      %p192 = scmp.ne.s32.totalorder %s177, %s191
      %p193 = scmp.eq.s32.totalorder %s36, 0
      %p194 = por %p192, %p193
      %s196 = sadd.s32 %s195, 1
      %p199 = scmp.eq.s32.totalorder %s30, 1
      %p200 = scmp.ne.s32.totalorder %s195, %s197
      %p201 = scmp.eq.s32.totalorder %s30, 0
      %p202 = por %p200, %p201
      %p203 = scmp.ne.s32.totalorder %s195, %s197
      %p204 = scmp.eq.s32.totalorder %s35, 1
      %p205 = por %p203, %p204
      %p206 = scmp.ne.s32.totalorder %s197, %s198
      %p207 = scmp.eq.s32.totalorder %s35, 0
      %p208 = por %p206, %p207
      %p209 = scmp.ne.s32.totalorder %s197, %s198
      %p210 = scmp.eq.s32.totalorder %s36, 1
      %p211 = por %p209, %p210
      %p213 = scmp.ne.s32.totalorder %s198, %s212
      %p214 = scmp.eq.s32.totalorder %s36, 0
      %p215 = por %p213, %p214
      %s217 = sadd.s32 %s216, 1
      %p220 = scmp.eq.s32.totalorder %s30, 1
      %p221 = scmp.ne.s32.totalorder %s216, %s218
      %p222 = scmp.eq.s32.totalorder %s30, 0
      %p223 = por %p221, %p222
      %p224 = scmp.ne.s32.totalorder %s216, %s218
      %p225 = scmp.eq.s32.totalorder %s35, 1
      %p226 = por %p224, %p225
      %p227 = scmp.ne.s32.totalorder %s218, %s219
      %p228 = scmp.eq.s32.totalorder %s35, 0
      %p229 = por %p227, %p228
      %p230 = scmp.ne.s32.totalorder %s218, %s219
      %p231 = scmp.eq.s32.totalorder %s36, 1
      %p232 = por %p230, %p231
      %p234 = scmp.ne.s32.totalorder %s219, %s233
      %p235 = scmp.eq.s32.totalorder %s36, 0
      %p236 = por %p234, %p235
      %s238 = sadd.s32 %s237, 1
      %p241 = scmp.eq.s32.totalorder %s30, 1
      %p242 = scmp.ne.s32.totalorder %s237, %s239
      %p243 = scmp.eq.s32.totalorder %s30, 0
      %p244 = por %p242, %p243
      %p245 = scmp.ne.s32.totalorder %s237, %s239
      %p246 = scmp.eq.s32.totalorder %s35, 1
      %p247 = por %p245, %p246
      %p248 = scmp.ne.s32.totalorder %s239, %s240
      %p249 = scmp.eq.s32.totalorder %s35, 0
      %p250 = por %p248, %p249
      %p251 = scmp.ne.s32.totalorder %s239, %s240
      %p252 = scmp.eq.s32.totalorder %s36, 1
      %p253 = por %p251, %p252
      %p255 = scmp.ne.s32.totalorder %s240, %s254
      %p256 = scmp.eq.s32.totalorder %s36, 0
      %p257 = por %p255, %p256
      %s259 = sadd.s32 %s258, 1
      %p262 = scmp.eq.s32.totalorder %s30, 1
      %p263 = scmp.ne.s32.totalorder %s258, %s260
      %p264 = scmp.eq.s32.totalorder %s30, 0
      %p265 = por %p263, %p264
      %p266 = scmp.ne.s32.totalorder %s258, %s260
      %p267 = scmp.eq.s32.totalorder %s35, 1
      %p268 = por %p266, %p267
      %p269 = scmp.ne.s32.totalorder %s260, %s261
      %p270 = scmp.eq.s32.totalorder %s35, 0
      %p271 = por %p269, %p270
      %p272 = scmp.ne.s32.totalorder %s260, %s261
      %p273 = scmp.eq.s32.totalorder %s36, 1
      %p274 = por %p272, %p273
      %p276 = scmp.ne.s32.totalorder %s261, %s275
      %p277 = scmp.eq.s32.totalorder %s36, 0
      %p278 = por %p276, %p277
      %s280 = sadd.s32 %s279, 1
      %p283 = scmp.eq.s32.totalorder %s30, 1
      %p284 = scmp.ne.s32.totalorder %s279, %s281
      %p285 = scmp.eq.s32.totalorder %s30, 0
      %p286 = por %p284, %p285
      %p287 = scmp.ne.s32.totalorder %s279, %s281
      %p288 = scmp.eq.s32.totalorder %s35, 1
      %p289 = por %p287, %p288
      %p290 = scmp.ne.s32.totalorder %s281, %s282
      %p291 = scmp.eq.s32.totalorder %s35, 0
      %p292 = por %p290, %p291
      %p293 = scmp.ne.s32.totalorder %s281, %s282
      %p294 = scmp.eq.s32.totalorder %s36, 1
      %p295 = por %p293, %p294
      %p297 = scmp.ne.s32.totalorder %s282, %s296
      %p298 = scmp.eq.s32.totalorder %s36, 0
      %p299 = por %p297, %p298
      %s300 = ssub.s32 %s37, %s49
      %s301 = ssub.s32 %s38, %s45
      %s302 = sor.u32 %s300, %s301
      %p303 = scmp.eq.s32.totalorder %s302, 0
      %s305 = sadd.s32 %s304, 1
      %s306 = scalar_select %p303, %s304, %s305
      %p309 = pneg %p303
      %p310 = scmp.eq.s32.totalorder %s30, 1
      %p311 = por %p309, %p310
      %p312 = scmp.ne.s32.totalorder %s304, %s307
      %p313 = scmp.eq.s32.totalorder %s30, 0
      %p314 = por %p312, %p313
      %p315 = scmp.ne.s32.totalorder %s304, %s307
      %p316 = scmp.eq.s32.totalorder %s35, 1
      %p317 = por %p315, %p316
      %p318 = scmp.ne.s32.totalorder %s307, %s308
      %p319 = scmp.eq.s32.totalorder %s35, 0
      %p320 = por %p318, %p319
      %p321 = scmp.ne.s32.totalorder %s307, %s308
      %p322 = scmp.eq.s32.totalorder %s36, 1
      %p323 = por %p321, %p322
      %p325 = scmp.ne.s32.totalorder %s308, %s324
      %p326 = scmp.eq.s32.totalorder %s36, 0
      %p327 = por %p325, %p326
      %p328 = scmp.le.s32.totalorder 1, %s30
      %p329 = scmp.lt.s32.totalorder %s30, 3
      %p330 = pnand %p328, %p329
      %p331 = pneg %p330
      // Predicated region
      $region9: #{_decoder_forward_jit.7} parent=5 // pred_check
        _
      $region10: #{_decoder_forward_jit.7} parent=5 // pred_check_branch
        %333 = sbr.rel (%p330) target = $region12
      $region11: #{_decoder_forward_jit.7} parent=5 // pred_region
        %s334 = ssub.s32 %s30, 1
        // Predicated region
        $region13: #{_decoder_forward_jit.7} parent=11 // pred_check
          %p335 = pneg %p145
        $region14: #{_decoder_forward_jit.7} parent=11 // pred_check_branch
          %337 = sbr.rel (%p335) target = $region16
        $region15: #{_decoder_forward_jit.7} parent=11 // pred_region
          %s339 = ssub.s32 16, 16
          %340 = vsyncadd [#allocation9], %s339
          %s342 = sshll.u32 [#allocation8], 4
          %s343 = int_to_ptr.vmem [resolvable:$true] %s342
          %345 = dma.hbm_to_vmem [thread:$0]  %s3, 16, %s343, [#allocation9]
        $region16: #{_decoder_forward_jit.7} parent=11 // pred_fallthru
          _
        // Predicated region
        $region17: #{_decoder_forward_jit.7} parent=11 // pred_check
          %p346 = pneg %p166
        $region18: #{_decoder_forward_jit.7} parent=11 // pred_check_branch
          %348 = sbr.rel (%p346) target = $region20
        $region19: #{_decoder_forward_jit.7} parent=11 // pred_region
          %s350 = ssub.s32 16, 16
          %351 = vsyncadd [#allocation9], %s350
          %s353 = sshll.u32 [#allocation10], 4
          %s354 = int_to_ptr.vmem [resolvable:$true] %s353
          %356 = dma.hbm_to_vmem [thread:$0]  %s4, 16, %s354, [#allocation9]
        $region20: #{_decoder_forward_jit.7} parent=11 // pred_fallthru
          _
        // Predicated region
        $region21: #{_decoder_forward_jit.7} parent=11 // pred_check
          %p357 = pneg %p187
        $region22: #{_decoder_forward_jit.7} parent=11 // pred_check_branch
          %359 = sbr.rel (%p357) target = $region24
        $region23: #{_decoder_forward_jit.7} parent=11 // pred_region
          %s361 = ssub.s32 256, 256
          %362 = vsyncadd [#allocation12], %s361
          %s363 = sshll.u32 [#allocation11], 4
          %s364 = int_to_ptr.vmem [resolvable:$true] %s363
          %369 = dma.hbm_to_vmem [thread:$0]  %s5, 256, %s364, [#allocation12], 64, 64, 4
        $region24: #{_decoder_forward_jit.7} parent=11 // pred_fallthru
          _
        // Predicated region
        $region25: #{_decoder_forward_jit.7} parent=11 // pred_check
          %p370 = pneg %p208
        $region26: #{_decoder_forward_jit.7} parent=11 // pred_check_branch
          %372 = sbr.rel (%p370) target = $region28
        $region27: #{_decoder_forward_jit.7} parent=11 // pred_region
          %s374 = ssub.s32 16, 16
          %375 = vsyncadd [#allocation12], %s374
          %s377 = sshll.u32 [#allocation13], 4
          %s378 = int_to_ptr.vmem [resolvable:$true] %s377
          %380 = dma.hbm_to_vmem [thread:$0]  %s6, 16, %s378, [#allocation12]
        $region28: #{_decoder_forward_jit.7} parent=11 // pred_fallthru
          _
        // Predicated region
        $region29: #{_decoder_forward_jit.7} parent=11 // pred_check
          %p381 = pneg %p229
        $region30: #{_decoder_forward_jit.7} parent=11 // pred_check_branch
          %383 = sbr.rel (%p381) target = $region32
        $region31: #{_decoder_forward_jit.7} parent=11 // pred_region
          %s385 = ssub.s32 256, 256
          %386 = vsyncadd [#allocation15], %s385
          %s387 = sshll.u32 [#allocation14], 4
          %s388 = int_to_ptr.vmem [resolvable:$true] %s387
          %393 = dma.hbm_to_vmem [thread:$0]  %s7, 256, %s388, [#allocation15], 64, 64, 4
        $region32: #{_decoder_forward_jit.7} parent=11 // pred_fallthru
          _
        // Predicated region
        $region33: #{_decoder_forward_jit.7} parent=11 // pred_check
          %p394 = pneg %p250
        $region34: #{_decoder_forward_jit.7} parent=11 // pred_check_branch
          %396 = sbr.rel (%p394) target = $region36
        $region35: #{_decoder_forward_jit.7} parent=11 // pred_region
          %s398 = ssub.s32 16, 16
          %399 = vsyncadd [#allocation15], %s398
          %s401 = sshll.u32 [#allocation16], 4
          %s402 = int_to_ptr.vmem [resolvable:$true] %s401
          %404 = dma.hbm_to_vmem [thread:$0]  %s8, 16, %s402, [#allocation15]
        $region36: #{_decoder_forward_jit.7} parent=11 // pred_fallthru
          _
        // Predicated region
        $region37: #{_decoder_forward_jit.7} parent=11 // pred_check
          %p405 = pneg %p271
        $region38: #{_decoder_forward_jit.7} parent=11 // pred_check_branch
          %407 = sbr.rel (%p405) target = $region40
        $region39: #{_decoder_forward_jit.7} parent=11 // pred_region
          %s409 = ssub.s32 256, 256
          %410 = vsyncadd [#allocation18], %s409
          %s411 = sshll.u32 [#allocation17], 4
          %s412 = int_to_ptr.vmem [resolvable:$true] %s411
          %417 = dma.hbm_to_vmem [thread:$0]  %s9, 256, %s412, [#allocation18], 64, 64, 4
        $region40: #{_decoder_forward_jit.7} parent=11 // pred_fallthru
          _
        // Predicated region
        $region41: #{_decoder_forward_jit.7} parent=11 // pred_check
          %p418 = pneg %p292
        $region42: #{_decoder_forward_jit.7} parent=11 // pred_check_branch
          %420 = sbr.rel (%p418) target = $region44
        $region43: #{_decoder_forward_jit.7} parent=11 // pred_region
          %s422 = ssub.s32 16, 16
          %423 = vsyncadd [#allocation18], %s422
          %s425 = sshll.u32 [#allocation19], 4
          %s426 = int_to_ptr.vmem [resolvable:$true] %s425
          %428 = dma.hbm_to_vmem [thread:$0]  %s10, 16, %s426, [#allocation18]
        $region44: #{_decoder_forward_jit.7} parent=11 // pred_fallthru
          _
      $region12: #{_decoder_forward_jit.7} parent=5 // pred_fallthru
        _
      %p429 = scmp.lt.s32.totalorder %s30, 2
      // Predicated region
      $region45: #{_decoder_forward_jit.7} parent=5 // pred_check
        %p430 = pneg %p429
      $region46: #{_decoder_forward_jit.7} parent=5 // pred_check_branch
        %432 = sbr.rel (%p430) target = $region48
      $region47: #{_decoder_forward_jit.7} parent=5 // pred_region
        // Predicated region
        $region49: #{_decoder_forward_jit.7} parent=47 // pred_check
          %p433 = pneg %p64
        $region50: #{_decoder_forward_jit.7} parent=47 // pred_check_branch
          %435 = sbr.rel (%p433) target = $region52
        $region51: #{_decoder_forward_jit.7} parent=47 // pred_region
          %s436 = sand.u32 %s54, 1
          %s437 = scalar_lea.sflag [#allocation3], %s436
          %s438 = sand.u32 %s54, 1
          %s439 = smul.addr %s438, 8
          %s440 = scalar_lea.vmem [#allocation2], %s439
          %s442 = ssub.s32 128, 128
          %443 = vsyncadd %s437, %s442
          %s444 = sadd.s32 %s38, %s37
          %s445 = smul.addr %s444, 128
          %s446 = scalar_lea.hbm %s0, %s445
          %s448 = sshll.u32 %s440, 4
          %s449 = int_to_ptr.vmem [resolvable:$true] %s448
          %451 = dma.hbm_to_vmem [thread:$0]  %s446, 128, %s449, %s437
        $region52: #{_decoder_forward_jit.7} parent=47 // pred_fallthru
          _
        // Predicated region
        $region53: #{_decoder_forward_jit.7} parent=47 // pred_check
          %p452 = pneg %p90
        $region54: #{_decoder_forward_jit.7} parent=47 // pred_check_branch
          %454 = sbr.rel (%p452) target = $region56
        $region55: #{_decoder_forward_jit.7} parent=47 // pred_region
          %s455 = sand.u32 %s30, 1
          %s456 = scalar_lea.sflag [#allocation6], %s455
          %s457 = sand.u32 %s80, 1
          %s458 = smul.addr %s457, 16
          %s459 = scalar_lea.vmem [#allocation5], %s458
          %s461 = ssub.s32 256, 256
          %462 = vsyncadd %s456, %s461
          %s463 = smul.addr %s37, 2
          %s464 = smul.addr %s463, 128
          %s465 = scalar_lea.hbm %s1, %s464
          %s466 = sshll.u32 %s459, 4
          %s467 = int_to_ptr.vmem [resolvable:$true] %s466
          %472 = dma.hbm_to_vmem [thread:$0]  %s465, 256, %s467, %s456, 128, 128, 8
        $region56: #{_decoder_forward_jit.7} parent=47 // pred_fallthru
          _
        // Predicated region
        $region57: #{_decoder_forward_jit.7} parent=47 // pred_check
          %p473 = pneg %p118
        $region58: #{_decoder_forward_jit.7} parent=47 // pred_check_branch
          %475 = sbr.rel (%p473) target = $region60
        $region59: #{_decoder_forward_jit.7} parent=47 // pred_region
          %s476 = sand.u32 %s30, 1
          %s477 = scalar_lea.sflag [#allocation6], %s476
          %s478 = sand.u32 %s108, 1
          %s479 = smul.addr %s478, 4
          %s480 = scalar_lea.vmem [#allocation7], %s479
          %s482 = ssub.s32 64, 64
          %483 = vsyncadd %s477, %s482
          %s484 = sadd.s32 %s38, %s37
          %s485 = smul.addr %s484, 64
          %s486 = scalar_lea.hbm %s2, %s485
          %s488 = sshll.u32 %s480, 4
          %s489 = int_to_ptr.vmem [resolvable:$true] %s488
          %491 = dma.hbm_to_vmem [thread:$0]  %s486, 64, %s489, %s477
        $region60: #{_decoder_forward_jit.7} parent=47 // pred_fallthru
          _
      $region48: #{_decoder_forward_jit.7} parent=5 // pred_fallthru
        _
      %p492 = scmp.le.s32.totalorder 1, %s30
      %p493 = scmp.lt.s32.totalorder %s30, 3
      %p494 = pnand %p492, %p493
      %p495 = pneg %p494
      // Predicated region
      $region61: #{_decoder_forward_jit.7} parent=5 // pred_check
        _
      $region62: #{_decoder_forward_jit.7} parent=5 // pred_check_branch
        %497 = sbr.rel (%p494) target = $region64
      $region63: #{_decoder_forward_jit.7} parent=5 // pred_region
        %s498 = ssub.s32 %s30, 1
        %s499 = sand.u32 %s57, 1
        %s500 = scalar_lea.sflag [#allocation3], %s499
        %s501 = sand.u32 %s57, 1
        %s502 = smul.addr %s501, 8
        %s503 = scalar_lea.vmem [#allocation2], %s502
        // Predicated region
        $region65: #{_decoder_forward_jit.7} parent=63 // pred_check
          %p504 = pneg %p70
        $region66: #{_decoder_forward_jit.7} parent=63 // pred_check_branch
          %506 = sbr.rel (%p504) target = $region68
        $region67: #{_decoder_forward_jit.7} parent=63 // pred_region
          %507 = dma.done %s500, 128
        $region68: #{_decoder_forward_jit.7} parent=63 // pred_fallthru
          _
        %s508 = sand.u32 %s35, 1
        %s509 = scalar_lea.sflag [#allocation6], %s508
        %s510 = sand.u32 %s83, 1
        %s511 = smul.addr %s510, 16
        %s512 = scalar_lea.vmem [#allocation5], %s511
        // Predicated region
        $region69: #{_decoder_forward_jit.7} parent=63 // pred_check
          %p513 = pneg %p96
        $region70: #{_decoder_forward_jit.7} parent=63 // pred_check_branch
          %515 = sbr.rel (%p513) target = $region72
        $region71: #{_decoder_forward_jit.7} parent=63 // pred_region
          %516 = dma.done %s509, 256
        $region72: #{_decoder_forward_jit.7} parent=63 // pred_fallthru
          _
        %s517 = sand.u32 %s35, 1
        %s518 = scalar_lea.sflag [#allocation6], %s517
        %s519 = sand.u32 %s111, 1
        %s520 = smul.addr %s519, 4
        %s521 = scalar_lea.vmem [#allocation7], %s520
        // Predicated region
        $region73: #{_decoder_forward_jit.7} parent=63 // pred_check
          %p522 = pneg %p124
        $region74: #{_decoder_forward_jit.7} parent=63 // pred_check_branch
          %524 = sbr.rel (%p522) target = $region76
        $region75: #{_decoder_forward_jit.7} parent=63 // pred_region
          %525 = dma.done %s518, 64
        $region76: #{_decoder_forward_jit.7} parent=63 // pred_fallthru
          _
        // Predicated region
        $region77: #{_decoder_forward_jit.7} parent=63 // pred_check
          %p526 = pneg %p145
        $region78: #{_decoder_forward_jit.7} parent=63 // pred_check_branch
          %528 = sbr.rel (%p526) target = $region80
        $region79: #{_decoder_forward_jit.7} parent=63 // pred_region
          %529 = dma.done [#allocation9], 16
        $region80: #{_decoder_forward_jit.7} parent=63 // pred_fallthru
          _
        // Predicated region
        $region81: #{_decoder_forward_jit.7} parent=63 // pred_check
          %p530 = pneg %p166
        $region82: #{_decoder_forward_jit.7} parent=63 // pred_check_branch
          %532 = sbr.rel (%p530) target = $region84
        $region83: #{_decoder_forward_jit.7} parent=63 // pred_region
          %533 = dma.done [#allocation9], 16
        $region84: #{_decoder_forward_jit.7} parent=63 // pred_fallthru
          _
        // Predicated region
        $region85: #{_decoder_forward_jit.7} parent=63 // pred_check
          %p534 = pneg %p187
        $region86: #{_decoder_forward_jit.7} parent=63 // pred_check_branch
          %536 = sbr.rel (%p534) target = $region88
        $region87: #{_decoder_forward_jit.7} parent=63 // pred_region
          %537 = dma.done [#allocation12], 256
        $region88: #{_decoder_forward_jit.7} parent=63 // pred_fallthru
          _
        // Predicated region
        $region89: #{_decoder_forward_jit.7} parent=63 // pred_check
          %p538 = pneg %p208
        $region90: #{_decoder_forward_jit.7} parent=63 // pred_check_branch
          %540 = sbr.rel (%p538) target = $region92
        $region91: #{_decoder_forward_jit.7} parent=63 // pred_region
          %541 = dma.done [#allocation12], 16
        $region92: #{_decoder_forward_jit.7} parent=63 // pred_fallthru
          _
        // Predicated region
        $region93: #{_decoder_forward_jit.7} parent=63 // pred_check
          %p542 = pneg %p229
        $region94: #{_decoder_forward_jit.7} parent=63 // pred_check_branch
          %544 = sbr.rel (%p542) target = $region96
        $region95: #{_decoder_forward_jit.7} parent=63 // pred_region
          %545 = dma.done [#allocation15], 256
        $region96: #{_decoder_forward_jit.7} parent=63 // pred_fallthru
          _
        // Predicated region
        $region97: #{_decoder_forward_jit.7} parent=63 // pred_check
          %p546 = pneg %p250
        $region98: #{_decoder_forward_jit.7} parent=63 // pred_check_branch
          %548 = sbr.rel (%p546) target = $region100
        $region99: #{_decoder_forward_jit.7} parent=63 // pred_region
          %549 = dma.done [#allocation15], 16
        $region100: #{_decoder_forward_jit.7} parent=63 // pred_fallthru
          _
        // Predicated region
        $region101: #{_decoder_forward_jit.7} parent=63 // pred_check
          %p550 = pneg %p271
        $region102: #{_decoder_forward_jit.7} parent=63 // pred_check_branch
          %552 = sbr.rel (%p550) target = $region104
        $region103: #{_decoder_forward_jit.7} parent=63 // pred_region
          %553 = dma.done [#allocation18], 256
        $region104: #{_decoder_forward_jit.7} parent=63 // pred_fallthru
          _
        // Predicated region
        $region105: #{_decoder_forward_jit.7} parent=63 // pred_check
          %p554 = pneg %p292
        $region106: #{_decoder_forward_jit.7} parent=63 // pred_check_branch
          %556 = sbr.rel (%p554) target = $region108
        $region107: #{_decoder_forward_jit.7} parent=63 // pred_region
          %557 = dma.done [#allocation18], 16
        $region108: #{_decoder_forward_jit.7} parent=63 // pred_fallthru
          _
        %s558 = sand.u32 %s57, 1
        %s559 = scalar_lea.sflag [#allocation3], %s558
        %s560 = sand.u32 %s57, 1
        %s561 = smul.addr %s560, 8
        %s562 = scalar_lea.vmem [#allocation2], %s561
        %p563 = pneg %p70
        %p564 = pneg %p67
        %s565 = sand.u32 %s35, 1
        %s566 = scalar_lea.sflag [#allocation6], %s565
        %s567 = sand.u32 %s83, 1
        %s568 = smul.addr %s567, 16
        %s569 = scalar_lea.vmem [#allocation5], %s568
        %p570 = pneg %p96
        %p571 = pneg %p93
        %s572 = sand.u32 %s35, 1
        %s573 = scalar_lea.sflag [#allocation6], %s572
        %s574 = sand.u32 %s111, 1
        %s575 = smul.addr %s574, 4
        %s576 = scalar_lea.vmem [#allocation7], %s575
        %p577 = pneg %p124
        %p578 = pneg %p121
        %p579 = pneg %p145
        %p580 = pneg %p142
        %p581 = pneg %p166
        %p582 = pneg %p163
        %p583 = pneg %p187
        %p584 = pneg %p184
        %p585 = pneg %p208
        %p586 = pneg %p205
        %p587 = pneg %p229
        %p588 = pneg %p226
        %p589 = pneg %p250
        %p590 = pneg %p247
        %p591 = pneg %p271
        %p592 = pneg %p268
        %p593 = pneg %p292
        %p594 = pneg %p289
        %p595 = pneg %p320
        %p596 = pneg %p317
        %s597 = sand.u32 %s307, 1
        %s598 = scalar_lea.sflag [#allocation4], %s597
        %s599 = sand.u32 %s307, 1
        %s600 = smul.addr %s599, 8
        %s601 = scalar_lea.vmem [#allocation20], %s600
        %v603 = vld [vmem:[%s503] sm:$0xff]
        %v604 = vld [vmem:[%s512] sm:$0xff]
        %v605 = vld [vmem:[%s512 + $0x8] sm:$0xff]
        %v606 = vld [vmem:[#allocation8] sm:$0x1]
        %v607 = vld [vmem:[#allocation10] sm:$0x1]
        %vm608 = vcmask 261120
        %v609 = vsel %vm608, %v603, 0.0
        %610 = vadd.xlane.f32.xlu0 %v609
        %v611 = vpop.xlane.xlu0 %610
        %v612 = vrcp.pop 32.0
        %v613 = vmul.f32 %v611, %v612
        %v614 = vsub.f32 %v603, %v613
        %v615 = vmul.f32 %v614, %v614
        %v616 = vsel %vm608, %v615, 0.0
        %617 = vadd.xlane.f32.xlu0 %v616
        %v618 = vpop.xlane.xlu0 %617
        %v619 = vrcp.pop 31.0
        %v620 = vmul.f32 %v618, %v619
        %v622 = vlaneseq
        %v623 = vshrl.u32 %v622, 7
        %v624 = vsub.s32 0, %v623
        %v625 = vrot.slane %v606, %v624
        %v627 = vmul.f32 %v625, %v614
        %v628 = vrsqrt.pop %v620
        %v629 = vmul.f32 %v620, %v628
        %vm630 = vcmp.eq.f32.partialorder %v620, inf
        %v631 = vsel %vm630, %v620, %v629
        %vm632 = vcmp.eq.f32.partialorder %v620, 0.0
        %v633 = vand.u32 %v620, 2147483648
        %v634 = vsel %vm632, %v633, %v631
        %v635 = vadd.f32 %v634, 1e-06
        %v636 = vrcp.pop %v635
        %v637 = vmul.f32 %v627, %v636
        %v639 = vlaneseq
        %v640 = vshrl.u32 %v639, 7
        %v641 = vsub.s32 0, %v640
        %v642 = vrot.slane %v607, %v641
        %v644 = vadd.f32 %v637, %v642
        %v645 = vpack.c.bf16 %v644, %v644
        %v646 = vld [vmem:[#allocation11] sm:$0xf]
        %v647 = vld [vmem:[#allocation11 + $0x4] sm:$0xf]
        %v648 = vld [vmem:[#allocation11 + $0x8] sm:$0xf]
        %v649 = vld [vmem:[#allocation11 + $0xc] sm:$0xf]
        %v650 = vld [vmem:[#allocation13] sm:$0x1]
        %v652 = vlaneseq
        %v653 = vshrl.u32 %v652, 7
        %v654 = vsub.s32 0, %v653
        %v655 = vrot.slane %v650, %v654
        %v661 = vunpack.c.l.b16 %v646
        %v662 = vunpack.c.l.b16 %v647
        %v663 = vunpack.c.l.b16 %v648
        %v664 = vunpack.c.l.b16 %v649
        %v665 = vpack.c.b16 %v662, %v661
        %v666 = vpack.c.b16 %v664, %v663
        %v670 = vsel %vm608, %v645, 0
        %672 = vmatprep.subr.bf16.mxu0 0
        %673 = vmatpush1.bf16.msra.mxu0 %v665
        %674 = vmatprep.subr.bf16.mxu0 0
        %675 = vmatpush1.bf16.msra.mxu0 %v666
        %676 = vmatprep.subr.bf16.mxu0 0
        %677 = vmatpush1.bf16.msra.mxu0 0
        %678 = vmatprep.subr.bf16.mxu0 0
        %679 = vmatpush1.bf16.msra.mxu0 0
        %680 = vmatprep.subr.bf16.mxu0 0
        %681 = vmatpush1.bf16.msra.mxu0 0
        %682 = vmatprep.subr.bf16.mxu0 0
        %683 = vmatpush1.bf16.msra.mxu0 0
        %684 = vmatprep.subr.bf16.mxu0 0
        %685 = vmatpush1.bf16.msra.mxu0 0
        %686 = vmatprep.subr.bf16.mxu0 0
        %687 = vmatpush1.bf16.msra.mxu0 0
        %688 = vmatprep.subr.bf16.mxu0 0
        %689 = vmatpush1.bf16.msra.mxu0 0
        %690 = vmatprep.subr.bf16.mxu0 0
        %691 = vmatpush1.bf16.msra.mxu0 0
        %692 = vmatprep.subr.bf16.mxu0 0
        %693 = vmatpush1.bf16.msra.mxu0 0
        %694 = vmatprep.subr.bf16.mxu0 0
        %695 = vmatpush1.bf16.msra.mxu0 0
        %696 = vmatprep.subr.bf16.mxu0 0
        %697 = vmatpush1.bf16.msra.mxu0 0
        %698 = vmatprep.subr.bf16.mxu0 0
        %699 = vmatpush1.bf16.msra.mxu0 0
        %700 = vmatprep.subr.bf16.mxu0 0
        %701 = vmatpush1.bf16.msra.mxu0 0
        %702 = vmatprep.subr.bf16.mxu0 0
        %703 = vmatpush1.bf16.msra.mxu0 0
        %704 = vmatprep.mubr.bf16.mxu0 0
        %705 = vmatmul.mubr.bf16.gmra.mrb[0].mxu0 %v670
        %v706 = vpop.f32.mrb[0].mxu0
        %v707 = vadd.f32 %v655, %v706
        %v708 = vpop.f32.mrb[0].mxu0
        %v709 = vpop.f32.mrb[0].mxu0
        %v710 = vpop.f32.mrb[0].mxu0
        %711 = vdwg.mxu0
        %v712 = vmul.f32 %v707, 0.35355338
        %v713 = vpack.c.bf16 %v605, %v604
        %v714 = vld [vmem:[#allocation14] sm:$0xf]
        %v715 = vld [vmem:[#allocation14 + $0x4] sm:$0xf]
        %v716 = vld [vmem:[#allocation14 + $0x8] sm:$0xf]
        %v717 = vld [vmem:[#allocation14 + $0xc] sm:$0xf]
        %v718 = vld [vmem:[#allocation16] sm:$0x1]
        %v720 = vlaneseq
        %v721 = vshrl.u32 %v720, 7
        %v722 = vsub.s32 0, %v721
        %v723 = vrot.slane %v718, %v722
        %v729 = vunpack.c.l.b16 %v714
        %v730 = vunpack.c.l.b16 %v715
        %v731 = vunpack.c.l.b16 %v716
        %v732 = vunpack.c.l.b16 %v717
        %v733 = vpack.c.b16 %v730, %v729
        %v734 = vpack.c.b16 %v732, %v731
        %v738 = vsel %vm608, %v713, 0
        %740 = vmatprep.subr.bf16.mxu0 0
        %741 = vmatpush1.bf16.msra.mxu0 %v733
        %742 = vmatprep.subr.bf16.mxu0 0
        %743 = vmatpush1.bf16.msra.mxu0 %v734
        %744 = vmatprep.subr.bf16.mxu0 0
        %745 = vmatpush1.bf16.msra.mxu0 0
        %746 = vmatprep.subr.bf16.mxu0 0
        %747 = vmatpush1.bf16.msra.mxu0 0
        %748 = vmatprep.subr.bf16.mxu0 0
        %749 = vmatpush1.bf16.msra.mxu0 0
        %750 = vmatprep.subr.bf16.mxu0 0
        %751 = vmatpush1.bf16.msra.mxu0 0
        %752 = vmatprep.subr.bf16.mxu0 0
        %753 = vmatpush1.bf16.msra.mxu0 0
        %754 = vmatprep.subr.bf16.mxu0 0
        %755 = vmatpush1.bf16.msra.mxu0 0
        %756 = vmatprep.subr.bf16.mxu0 0
        %757 = vmatpush1.bf16.msra.mxu0 0
        %758 = vmatprep.subr.bf16.mxu0 0
        %759 = vmatpush1.bf16.msra.mxu0 0
        %760 = vmatprep.subr.bf16.mxu0 0
        %761 = vmatpush1.bf16.msra.mxu0 0
        %762 = vmatprep.subr.bf16.mxu0 0
        %763 = vmatpush1.bf16.msra.mxu0 0
        %764 = vmatprep.subr.bf16.mxu0 0
        %765 = vmatpush1.bf16.msra.mxu0 0
        %766 = vmatprep.subr.bf16.mxu0 0
        %767 = vmatpush1.bf16.msra.mxu0 0
        %768 = vmatprep.subr.bf16.mxu0 0
        %769 = vmatpush1.bf16.msra.mxu0 0
        %770 = vmatprep.subr.bf16.mxu0 0
        %771 = vmatpush1.bf16.msra.mxu0 0
        %772 = vmatprep.mubr.bf16.mxu0 0
        %773 = vmatmul.mubr.bf16.gmra.mrb[0].mxu0 %v738
        %v774 = vpop.f32.mrb[0].mxu0
        %v775 = vadd.f32 %v723, %v774
        %v776 = vpop.f32.mrb[0].mxu0
        %v777 = vpop.f32.mrb[0].mxu0
        %v778 = vadd.f32 %v723, %v777
        %v779 = vpop.f32.mrb[0].mxu0
        %780 = vdwg.mxu0
        %v781 = vld [vmem:[%s521] sm:$0xf]
        %v782 = vunpack.c.l.bf16 %v781
        %v783 = vpack.c.bf16 %v712, %v712
        %v784 = vpack.c.bf16 %v778, %v775
        %vm785 = vcmask 64512
        %v787 = vsel %vm785, %v783, 0
        %v790 = vsel %vm785, %v784, 0
        %792 = vmatprep.subr.bf16.mxu0 0
        %793 = vmatpush1.bf16.xpose.msra.mxu0 %v790
        %794 = vmatprep.subr.bf16.mxu0 0
        %795 = vmatpush1.bf16.xpose.msra.mxu0 0
        %796 = vmatprep.subr.bf16.mxu0 0
        %797 = vmatpush1.bf16.xpose.msra.mxu0 0
        %798 = vmatprep.subr.bf16.mxu0 0
        %799 = vmatpush1.bf16.xpose.msra.mxu0 0
        %800 = vmatprep.subr.bf16.mxu0 0
        %801 = vmatpush1.bf16.xpose.msra.mxu0 0
        %802 = vmatprep.subr.bf16.mxu0 0
        %803 = vmatpush1.bf16.xpose.msra.mxu0 0
        %804 = vmatprep.subr.bf16.mxu0 0
        %805 = vmatpush1.bf16.xpose.msra.mxu0 0
        %806 = vmatprep.subr.bf16.mxu0 0
        %807 = vmatpush1.bf16.xpose.msra.mxu0 0
        %808 = vmatprep.subr.bf16.mxu0 0
        %809 = vmatpush1.bf16.xpose.msra.mxu0 0
        %810 = vmatprep.subr.bf16.mxu0 0
        %811 = vmatpush1.bf16.xpose.msra.mxu0 0
        %812 = vmatprep.subr.bf16.mxu0 0
        %813 = vmatpush1.bf16.xpose.msra.mxu0 0
        %814 = vmatprep.subr.bf16.mxu0 0
        %815 = vmatpush1.bf16.xpose.msra.mxu0 0
        %816 = vmatprep.subr.bf16.mxu0 0
        %817 = vmatpush1.bf16.xpose.msra.mxu0 0
        %818 = vmatprep.subr.bf16.mxu0 0
        %819 = vmatpush1.bf16.xpose.msra.mxu0 0
        %820 = vmatprep.subr.bf16.mxu0 0
        %821 = vmatpush1.bf16.xpose.msra.mxu0 0
        %822 = vmatprep.subr.bf16.mxu0 0
        %823 = vmatpush1.bf16.xpose.msra.mxu0 0
        %824 = vmatprep.mubr.bf16.mxu0 0
        %825 = vmatmul.mubr.bf16.gmra.mrb[0].mxu0 %v787
        %v826 = vpop.f32.mrb[0].mxu0
        %v827 = vadd.f32 %v782, %v826
        %v828 = vpop.f32.mrb[0].mxu0
        %v829 = vpop.f32.mrb[0].mxu0
        %v830 = vpop.f32.mrb[0].mxu0
        %831 = vdwg.mxu0
        %vm832 = vcmask 130048
        %v833 = vsel %vm832, %v827, -inf
        %834 = vmax.xlane.f32.xlu0 %v833
        %v835 = vpop.xlane.xlu0 %834
        %v836 = vsub.f32 %v827, %v835
        %v837 = vmul.f32 %v836, 1.442695
        %v838 = vpow.pop %v837
        %v839 = vsel %vm832, %v838, 0.0
        %840 = vadd.xlane.f32.xlu0 %v839
        %v841 = vpop.xlane.xlu0 %840
        %v842 = vrcp.pop %v841
        %v843 = vmul.f32 %v838, %v842
        %v844 = vpack.c.bf16 %v843, %v843
        %846 = vrot.lane.b32.xlu0 %v784, 96
        %v847 = vpop.permute.xlu0 %846
        %v850 = vsel %vm832, %v844, 0
        %852 = vmatprep.subr.bf16.mxu0 0
        %853 = vmatpush1.bf16.msra.mxu0 %v847
        %854 = vmatprep.subr.bf16.mxu0 0
        %855 = vmatpush1.bf16.msra.mxu0 0
        %856 = vmatprep.subr.bf16.mxu0 0
        %857 = vmatpush1.bf16.msra.mxu0 0
        %858 = vmatprep.subr.bf16.mxu0 0
        %859 = vmatpush1.bf16.msra.mxu0 0
        %860 = vmatprep.subr.bf16.mxu0 0
        %861 = vmatpush1.bf16.msra.mxu0 0
        %862 = vmatprep.subr.bf16.mxu0 0
        %863 = vmatpush1.bf16.msra.mxu0 0
        %864 = vmatprep.subr.bf16.mxu0 0
        %865 = vmatpush1.bf16.msra.mxu0 0
        %866 = vmatprep.subr.bf16.mxu0 0
        %867 = vmatpush1.bf16.msra.mxu0 0
        %868 = vmatprep.subr.bf16.mxu0 0
        %869 = vmatpush1.bf16.msra.mxu0 0
        %870 = vmatprep.subr.bf16.mxu0 0
        %871 = vmatpush1.bf16.msra.mxu0 0
        %872 = vmatprep.subr.bf16.mxu0 0
        %873 = vmatpush1.bf16.msra.mxu0 0
        %874 = vmatprep.subr.bf16.mxu0 0
        %875 = vmatpush1.bf16.msra.mxu0 0
        %876 = vmatprep.subr.bf16.mxu0 0
        %877 = vmatpush1.bf16.msra.mxu0 0
        %878 = vmatprep.subr.bf16.mxu0 0
        %879 = vmatpush1.bf16.msra.mxu0 0
        %880 = vmatprep.subr.bf16.mxu0 0
        %881 = vmatpush1.bf16.msra.mxu0 0
        %882 = vmatprep.subr.bf16.mxu0 0
        %883 = vmatpush1.bf16.msra.mxu0 0
        %884 = vmatprep.mubr.bf16.mxu0 0
        %885 = vmatmul.mubr.bf16.gmra.mrb[0].mxu0 %v850
        %v886 = vpop.f32.mrb[0].mxu0
        %v887 = vadd.f32 0.0, %v886
        %v888 = vpop.f32.mrb[0].mxu0
        %v889 = vpop.f32.mrb[0].mxu0
        %v890 = vpop.f32.mrb[0].mxu0
        %891 = vdwg.mxu0
        %893 = vrot.lane.b32.xlu0 %v783, 120
        %v894 = vpop.permute.xlu0 %893
        %895 = vrot.lane.b32.xlu0 %v784, 120
        %v896 = vpop.permute.xlu0 %895
        %v898 = vsel %vm785, %v894, 0
        %v901 = vsel %vm785, %v896, 0
        %903 = vmatprep.subr.bf16.mxu0 0
        %904 = vmatpush1.bf16.xpose.msra.mxu0 %v901
        %905 = vmatprep.subr.bf16.mxu0 0
        %906 = vmatpush1.bf16.xpose.msra.mxu0 0
        %907 = vmatprep.subr.bf16.mxu0 0
        %908 = vmatpush1.bf16.xpose.msra.mxu0 0
        %909 = vmatprep.subr.bf16.mxu0 0
        %910 = vmatpush1.bf16.xpose.msra.mxu0 0
        %911 = vmatprep.subr.bf16.mxu0 0
        %912 = vmatpush1.bf16.xpose.msra.mxu0 0
        %913 = vmatprep.subr.bf16.mxu0 0
        %914 = vmatpush1.bf16.xpose.msra.mxu0 0
        %915 = vmatprep.subr.bf16.mxu0 0
        %916 = vmatpush1.bf16.xpose.msra.mxu0 0
        %917 = vmatprep.subr.bf16.mxu0 0
        %918 = vmatpush1.bf16.xpose.msra.mxu0 0
        %919 = vmatprep.subr.bf16.mxu0 0
        %920 = vmatpush1.bf16.xpose.msra.mxu0 0
        %921 = vmatprep.subr.bf16.mxu0 0
        %922 = vmatpush1.bf16.xpose.msra.mxu0 0
        %923 = vmatprep.subr.bf16.mxu0 0
        %924 = vmatpush1.bf16.xpose.msra.mxu0 0
        %925 = vmatprep.subr.bf16.mxu0 0
        %926 = vmatpush1.bf16.xpose.msra.mxu0 0
        %927 = vmatprep.subr.bf16.mxu0 0
        %928 = vmatpush1.bf16.xpose.msra.mxu0 0
        %929 = vmatprep.subr.bf16.mxu0 0
        %930 = vmatpush1.bf16.xpose.msra.mxu0 0
        %931 = vmatprep.subr.bf16.mxu0 0
        %932 = vmatpush1.bf16.xpose.msra.mxu0 0
        %933 = vmatprep.subr.bf16.mxu0 0
        %934 = vmatpush1.bf16.xpose.msra.mxu0 0
        %935 = vmatprep.mubr.bf16.mxu0 0
        %936 = vmatmul.mubr.bf16.gmra.mrb[0].mxu0 %v898
        %v937 = vpop.f32.mrb[0].mxu0
        %v938 = vadd.f32 %v782, %v937
        %v939 = vpop.f32.mrb[0].mxu0
        %v940 = vpop.f32.mrb[0].mxu0
        %v941 = vpop.f32.mrb[0].mxu0
        %942 = vdwg.mxu0
        %v943 = vsel %vm832, %v938, -inf
        %944 = vmax.xlane.f32.xlu0 %v943
        %v945 = vpop.xlane.xlu0 %944
        %v946 = vsub.f32 %v938, %v945
        %v947 = vmul.f32 %v946, 1.442695
        %v948 = vpow.pop %v947
        %v949 = vsel %vm832, %v948, 0.0
        %950 = vadd.xlane.f32.xlu0 %v949
        %v951 = vpop.xlane.xlu0 %950
        %v952 = vrcp.pop %v951
        %v953 = vmul.f32 %v948, %v952
        %v954 = vpack.c.bf16 %v953, %v953
        %955 = vrot.lane.b32.xlu0 %v784, 88
        %v956 = vpop.permute.xlu0 %955
        %v959 = vsel %vm832, %v954, 0
        %961 = vmatprep.subr.bf16.mxu0 0
        %962 = vmatpush1.bf16.msra.mxu0 %v956
        %963 = vmatprep.subr.bf16.mxu0 0
        %964 = vmatpush1.bf16.msra.mxu0 0
        %965 = vmatprep.subr.bf16.mxu0 0
        %966 = vmatpush1.bf16.msra.mxu0 0
        %967 = vmatprep.subr.bf16.mxu0 0
        %968 = vmatpush1.bf16.msra.mxu0 0
        %969 = vmatprep.subr.bf16.mxu0 0
        %970 = vmatpush1.bf16.msra.mxu0 0
        %971 = vmatprep.subr.bf16.mxu0 0
        %972 = vmatpush1.bf16.msra.mxu0 0
        %973 = vmatprep.subr.bf16.mxu0 0
        %974 = vmatpush1.bf16.msra.mxu0 0
        %975 = vmatprep.subr.bf16.mxu0 0
        %976 = vmatpush1.bf16.msra.mxu0 0
        %977 = vmatprep.subr.bf16.mxu0 0
        %978 = vmatpush1.bf16.msra.mxu0 0
        %979 = vmatprep.subr.bf16.mxu0 0
        %980 = vmatpush1.bf16.msra.mxu0 0
        %981 = vmatprep.subr.bf16.mxu0 0
        %982 = vmatpush1.bf16.msra.mxu0 0
        %983 = vmatprep.subr.bf16.mxu0 0
        %984 = vmatpush1.bf16.msra.mxu0 0
        %985 = vmatprep.subr.bf16.mxu0 0
        %986 = vmatpush1.bf16.msra.mxu0 0
        %987 = vmatprep.subr.bf16.mxu0 0
        %988 = vmatpush1.bf16.msra.mxu0 0
        %989 = vmatprep.subr.bf16.mxu0 0
        %990 = vmatpush1.bf16.msra.mxu0 0
        %991 = vmatprep.subr.bf16.mxu0 0
        %992 = vmatpush1.bf16.msra.mxu0 0
        %993 = vmatprep.mubr.bf16.mxu0 0
        %994 = vmatmul.mubr.bf16.gmra.mrb[0].mxu0 %v959
        %v995 = vpop.f32.mrb[0].mxu0
        %v996 = vadd.f32 0.0, %v995
        %v997 = vpop.f32.mrb[0].mxu0
        %v998 = vpop.f32.mrb[0].mxu0
        %v999 = vpop.f32.mrb[0].mxu0
        %1000 = vdwg.mxu0
        %1001 = vrot.lane.b32.xlu0 %v783, 112
        %v1002 = vpop.permute.xlu0 %1001
        %1003 = vrot.lane.b32.xlu0 %v784, 112
        %v1004 = vpop.permute.xlu0 %1003
        %v1006 = vsel %vm785, %v1002, 0
        %v1009 = vsel %vm785, %v1004, 0
        %1011 = vmatprep.subr.bf16.mxu0 0
        %1012 = vmatpush1.bf16.xpose.msra.mxu0 %v1009
        %1013 = vmatprep.subr.bf16.mxu0 0
        %1014 = vmatpush1.bf16.xpose.msra.mxu0 0
        %1015 = vmatprep.subr.bf16.mxu0 0
        %1016 = vmatpush1.bf16.xpose.msra.mxu0 0
        %1017 = vmatprep.subr.bf16.mxu0 0
        %1018 = vmatpush1.bf16.xpose.msra.mxu0 0
        %1019 = vmatprep.subr.bf16.mxu0 0
        %1020 = vmatpush1.bf16.xpose.msra.mxu0 0
        %1021 = vmatprep.subr.bf16.mxu0 0
        %1022 = vmatpush1.bf16.xpose.msra.mxu0 0
        %1023 = vmatprep.subr.bf16.mxu0 0
        %1024 = vmatpush1.bf16.xpose.msra.mxu0 0
        %1025 = vmatprep.subr.bf16.mxu0 0
        %1026 = vmatpush1.bf16.xpose.msra.mxu0 0
        %1027 = vmatprep.subr.bf16.mxu0 0
        %1028 = vmatpush1.bf16.xpose.msra.mxu0 0
        %1029 = vmatprep.subr.bf16.mxu0 0
        %1030 = vmatpush1.bf16.xpose.msra.mxu0 0
        %1031 = vmatprep.subr.bf16.mxu0 0
        %1032 = vmatpush1.bf16.xpose.msra.mxu0 0
        %1033 = vmatprep.subr.bf16.mxu0 0
        %1034 = vmatpush1.bf16.xpose.msra.mxu0 0
        %1035 = vmatprep.subr.bf16.mxu0 0
        %1036 = vmatpush1.bf16.xpose.msra.mxu0 0
        %1037 = vmatprep.subr.bf16.mxu0 0
        %1038 = vmatpush1.bf16.xpose.msra.mxu0 0
        %1039 = vmatprep.subr.bf16.mxu0 0
        %1040 = vmatpush1.bf16.xpose.msra.mxu0 0
        %1041 = vmatprep.subr.bf16.mxu0 0
        %1042 = vmatpush1.bf16.xpose.msra.mxu0 0
        %1043 = vmatprep.mubr.bf16.mxu0 0
        %1044 = vmatmul.mubr.bf16.gmra.mrb[0].mxu0 %v1006
        %v1045 = vpop.f32.mrb[0].mxu0
        %v1046 = vadd.f32 %v782, %v1045
        %v1047 = vpop.f32.mrb[0].mxu0
        %v1048 = vpop.f32.mrb[0].mxu0
        %v1049 = vpop.f32.mrb[0].mxu0
        %1050 = vdwg.mxu0
        %v1051 = vsel %vm832, %v1046, -inf
        %1052 = vmax.xlane.f32.xlu0 %v1051
        %v1053 = vpop.xlane.xlu0 %1052
        %v1054 = vsub.f32 %v1046, %v1053
        %v1055 = vmul.f32 %v1054, 1.442695
        %v1056 = vpow.pop %v1055
        %v1057 = vsel %vm832, %v1056, 0.0
        %1058 = vadd.xlane.f32.xlu0 %v1057
        %v1059 = vpop.xlane.xlu0 %1058
        %v1060 = vrcp.pop %v1059
        %v1061 = vmul.f32 %v1056, %v1060
        %v1062 = vpack.c.bf16 %v1061, %v1061
        %1063 = vrot.lane.b32.xlu0 %v784, 80
        %v1064 = vpop.permute.xlu0 %1063
        %v1067 = vsel %vm832, %v1062, 0
        %1069 = vmatprep.subr.bf16.mxu0 0
        %1070 = vmatpush1.bf16.msra.mxu0 %v1064
        %1071 = vmatprep.subr.bf16.mxu0 0
        %1072 = vmatpush1.bf16.msra.mxu0 0
        %1073 = vmatprep.subr.bf16.mxu0 0
        %1074 = vmatpush1.bf16.msra.mxu0 0
        %1075 = vmatprep.subr.bf16.mxu0 0
        %1076 = vmatpush1.bf16.msra.mxu0 0
        %1077 = vmatprep.subr.bf16.mxu0 0
        %1078 = vmatpush1.bf16.msra.mxu0 0
        %1079 = vmatprep.subr.bf16.mxu0 0
        %1080 = vmatpush1.bf16.msra.mxu0 0
        %1081 = vmatprep.subr.bf16.mxu0 0
        %1082 = vmatpush1.bf16.msra.mxu0 0
        %1083 = vmatprep.subr.bf16.mxu0 0
        %1084 = vmatpush1.bf16.msra.mxu0 0
        %1085 = vmatprep.subr.bf16.mxu0 0
        %1086 = vmatpush1.bf16.msra.mxu0 0
        %1087 = vmatprep.subr.bf16.mxu0 0
        %1088 = vmatpush1.bf16.msra.mxu0 0
        %1089 = vmatprep.subr.bf16.mxu0 0
        %1090 = vmatpush1.bf16.msra.mxu0 0
        %1091 = vmatprep.subr.bf16.mxu0 0
        %1092 = vmatpush1.bf16.msra.mxu0 0
        %1093 = vmatprep.subr.bf16.mxu0 0
        %1094 = vmatpush1.bf16.msra.mxu0 0
        %1095 = vmatprep.subr.bf16.mxu0 0
        %1096 = vmatpush1.bf16.msra.mxu0 0
        %1097 = vmatprep.subr.bf16.mxu0 0
        %1098 = vmatpush1.bf16.msra.mxu0 0
        %1099 = vmatprep.subr.bf16.mxu0 0
        %1100 = vmatpush1.bf16.msra.mxu0 0
        %1101 = vmatprep.mubr.bf16.mxu0 0
        %1102 = vmatmul.mubr.bf16.gmra.mrb[0].mxu0 %v1067
        %v1103 = vpop.f32.mrb[0].mxu0
        %v1104 = vadd.f32 0.0, %v1103
        %v1105 = vpop.f32.mrb[0].mxu0
        %v1106 = vpop.f32.mrb[0].mxu0
        %v1107 = vpop.f32.mrb[0].mxu0
        %1108 = vdwg.mxu0
        %1109 = vrot.lane.b32.xlu0 %v783, 104
        %v1110 = vpop.permute.xlu0 %1109
        %1111 = vrot.lane.b32.xlu0 %v784, 104
        %v1112 = vpop.permute.xlu0 %1111
        %v1114 = vsel %vm785, %v1110, 0
        %v1117 = vsel %vm785, %v1112, 0
        %1119 = vmatprep.subr.bf16.mxu0 0
        %1120 = vmatpush1.bf16.xpose.msra.mxu0 %v1117
        %1121 = vmatprep.subr.bf16.mxu0 0
        %1122 = vmatpush1.bf16.xpose.msra.mxu0 0
        %1123 = vmatprep.subr.bf16.mxu0 0
        %1124 = vmatpush1.bf16.xpose.msra.mxu0 0
        %1125 = vmatprep.subr.bf16.mxu0 0
        %1126 = vmatpush1.bf16.xpose.msra.mxu0 0
        %1127 = vmatprep.subr.bf16.mxu0 0
        %1128 = vmatpush1.bf16.xpose.msra.mxu0 0
        %1129 = vmatprep.subr.bf16.mxu0 0
        %1130 = vmatpush1.bf16.xpose.msra.mxu0 0
        %1131 = vmatprep.subr.bf16.mxu0 0
        %1132 = vmatpush1.bf16.xpose.msra.mxu0 0
        %1133 = vmatprep.subr.bf16.mxu0 0
        %1134 = vmatpush1.bf16.xpose.msra.mxu0 0
        %1135 = vmatprep.subr.bf16.mxu0 0
        %1136 = vmatpush1.bf16.xpose.msra.mxu0 0
        %1137 = vmatprep.subr.bf16.mxu0 0
        %1138 = vmatpush1.bf16.xpose.msra.mxu0 0
        %1139 = vmatprep.subr.bf16.mxu0 0
        %1140 = vmatpush1.bf16.xpose.msra.mxu0 0
        %1141 = vmatprep.subr.bf16.mxu0 0
        %1142 = vmatpush1.bf16.xpose.msra.mxu0 0
        %1143 = vmatprep.subr.bf16.mxu0 0
        %1144 = vmatpush1.bf16.xpose.msra.mxu0 0
        %1145 = vmatprep.subr.bf16.mxu0 0
        %1146 = vmatpush1.bf16.xpose.msra.mxu0 0
        %1147 = vmatprep.subr.bf16.mxu0 0
        %1148 = vmatpush1.bf16.xpose.msra.mxu0 0
        %1149 = vmatprep.subr.bf16.mxu0 0
        %1150 = vmatpush1.bf16.xpose.msra.mxu0 0
        %1151 = vmatprep.mubr.bf16.mxu0 0
        %1152 = vmatmul.mubr.bf16.gmra.mrb[0].mxu0 %v1114
        %v1153 = vpop.f32.mrb[0].mxu0
        %v1154 = vadd.f32 %v782, %v1153
        %v1155 = vpop.f32.mrb[0].mxu0
        %v1156 = vpop.f32.mrb[0].mxu0
        %v1157 = vpop.f32.mrb[0].mxu0
        %1158 = vdwg.mxu0
        %v1159 = vsel %vm832, %v1154, -inf
        %1160 = vmax.xlane.f32.xlu0 %v1159
        %v1161 = vpop.xlane.xlu0 %1160
        %v1162 = vsub.f32 %v1154, %v1161
        %v1163 = vmul.f32 %v1162, 1.442695
        %v1164 = vpow.pop %v1163
        %v1165 = vsel %vm832, %v1164, 0.0
        %1166 = vadd.xlane.f32.xlu0 %v1165
        %v1167 = vpop.xlane.xlu0 %1166
        %v1168 = vrcp.pop %v1167
        %v1169 = vmul.f32 %v1164, %v1168
        %v1170 = vpack.c.bf16 %v1169, %v1169
        %1171 = vrot.lane.b32.xlu0 %v784, 72
        %v1172 = vpop.permute.xlu0 %1171
        %v1175 = vsel %vm832, %v1170, 0
        %1177 = vmatprep.subr.bf16.mxu0 0
        %1178 = vmatpush1.bf16.msra.mxu0 %v1172
        %1179 = vmatprep.subr.bf16.mxu0 0
        %1180 = vmatpush1.bf16.msra.mxu0 0
        %1181 = vmatprep.subr.bf16.mxu0 0
        %1182 = vmatpush1.bf16.msra.mxu0 0
        %1183 = vmatprep.subr.bf16.mxu0 0
        %1184 = vmatpush1.bf16.msra.mxu0 0
        %1185 = vmatprep.subr.bf16.mxu0 0
        %1186 = vmatpush1.bf16.msra.mxu0 0
        %1187 = vmatprep.subr.bf16.mxu0 0
        %1188 = vmatpush1.bf16.msra.mxu0 0
        %1189 = vmatprep.subr.bf16.mxu0 0
        %1190 = vmatpush1.bf16.msra.mxu0 0
        %1191 = vmatprep.subr.bf16.mxu0 0
        %1192 = vmatpush1.bf16.msra.mxu0 0
        %1193 = vmatprep.subr.bf16.mxu0 0
        %1194 = vmatpush1.bf16.msra.mxu0 0
        %1195 = vmatprep.subr.bf16.mxu0 0
        %1196 = vmatpush1.bf16.msra.mxu0 0
        %1197 = vmatprep.subr.bf16.mxu0 0
        %1198 = vmatpush1.bf16.msra.mxu0 0
        %1199 = vmatprep.subr.bf16.mxu0 0
        %1200 = vmatpush1.bf16.msra.mxu0 0
        %1201 = vmatprep.subr.bf16.mxu0 0
        %1202 = vmatpush1.bf16.msra.mxu0 0
        %1203 = vmatprep.subr.bf16.mxu0 0
        %1204 = vmatpush1.bf16.msra.mxu0 0
        %1205 = vmatprep.subr.bf16.mxu0 0
        %1206 = vmatpush1.bf16.msra.mxu0 0
        %1207 = vmatprep.subr.bf16.mxu0 0
        %1208 = vmatpush1.bf16.msra.mxu0 0
        %1209 = vmatprep.mubr.bf16.mxu0 0
        %1210 = vmatmul.mubr.bf16.gmra.mrb[0].mxu0 %v1175
        %v1211 = vpop.f32.mrb[0].mxu0
        %v1212 = vadd.f32 0.0, %v1211
        %v1213 = vpop.f32.mrb[0].mxu0
        %v1214 = vpop.f32.mrb[0].mxu0
        %v1215 = vpop.f32.mrb[0].mxu0
        %1216 = vdwg.mxu0
        %1218 = vrot.lane.b32.xlu0 %v996, 8
        %v1219 = vpop.permute.xlu0 %1218
        %1222 = vrot.lane.b32.xlu0 %v1104, 16
        %v1223 = vpop.permute.xlu0 %1222
        %1226 = vrot.lane.b32.xlu0 %v1212, 24
        %v1227 = vpop.permute.xlu0 %1226
        %v1229 = vsel %vm785, %v887, %v1219
        %v1230 = vsel %vm832, %v1229, %v1223
        %vm1231 = vcmask 195584
        %v1232 = vsel %vm1231, %v1230, %v1227
        %v1233 = vpack.c.bf16 %v1232, %v1232
        %v1234 = vld [vmem:[#allocation17] sm:$0xf]
        %v1235 = vld [vmem:[#allocation17 + $0x4] sm:$0xf]
        %v1236 = vld [vmem:[#allocation17 + $0x8] sm:$0xf]
        %v1237 = vld [vmem:[#allocation17 + $0xc] sm:$0xf]
        %v1238 = vld [vmem:[#allocation19] sm:$0x1]
        %v1240 = vlaneseq
        %v1241 = vshrl.u32 %v1240, 7
        %v1242 = vsub.s32 0, %v1241
        %v1243 = vrot.slane %v1238, %v1242
        %v1249 = vunpack.c.l.b16 %v1234
        %v1250 = vunpack.c.l.b16 %v1235
        %v1251 = vunpack.c.l.b16 %v1236
        %v1252 = vunpack.c.l.b16 %v1237
        %v1253 = vpack.c.b16 %v1250, %v1249
        %v1254 = vpack.c.b16 %v1252, %v1251
        %v1258 = vsel %vm608, %v1233, 0
        %1260 = vmatprep.subr.bf16.mxu0 0
        %1261 = vmatpush1.bf16.msra.mxu0 %v1253
        %1262 = vmatprep.subr.bf16.mxu0 0
        %1263 = vmatpush1.bf16.msra.mxu0 %v1254
        %1264 = vmatprep.subr.bf16.mxu0 0
        %1265 = vmatpush1.bf16.msra.mxu0 0
        %1266 = vmatprep.subr.bf16.mxu0 0
        %1267 = vmatpush1.bf16.msra.mxu0 0
        %1268 = vmatprep.subr.bf16.mxu0 0
        %1269 = vmatpush1.bf16.msra.mxu0 0
        %1270 = vmatprep.subr.bf16.mxu0 0
        %1271 = vmatpush1.bf16.msra.mxu0 0
        %1272 = vmatprep.subr.bf16.mxu0 0
        %1273 = vmatpush1.bf16.msra.mxu0 0
        %1274 = vmatprep.subr.bf16.mxu0 0
        %1275 = vmatpush1.bf16.msra.mxu0 0
        %1276 = vmatprep.subr.bf16.mxu0 0
        %1277 = vmatpush1.bf16.msra.mxu0 0
        %1278 = vmatprep.subr.bf16.mxu0 0
        %1279 = vmatpush1.bf16.msra.mxu0 0
        %1280 = vmatprep.subr.bf16.mxu0 0
        %1281 = vmatpush1.bf16.msra.mxu0 0
        %1282 = vmatprep.subr.bf16.mxu0 0
        %1283 = vmatpush1.bf16.msra.mxu0 0
        %1284 = vmatprep.subr.bf16.mxu0 0
        %1285 = vmatpush1.bf16.msra.mxu0 0
        %1286 = vmatprep.subr.bf16.mxu0 0
        %1287 = vmatpush1.bf16.msra.mxu0 0
        %1288 = vmatprep.subr.bf16.mxu0 0
        %1289 = vmatpush1.bf16.msra.mxu0 0
        %1290 = vmatprep.subr.bf16.mxu0 0
        %1291 = vmatpush1.bf16.msra.mxu0 0
        %1292 = vmatprep.mubr.bf16.mxu0 0
        %1293 = vmatmul.mubr.bf16.gmra.mrb[0].mxu0 %v1258
        %v1294 = vpop.f32.mrb[0].mxu0
        %v1295 = vadd.f32 %v1243, %v1294
        %v1296 = vpop.f32.mrb[0].mxu0
        %v1297 = vpop.f32.mrb[0].mxu0
        %v1298 = vpop.f32.mrb[0].mxu0
        %1299 = vdwg.mxu0
        %v1300 = vadd.f32 %v603, %v1295
        %1301 = vst.msk [vmem:[%s601] sm:$0xff] %vm608, %v1300
        %s1302 = sand.u32 %s307, 1
        %s1303 = scalar_lea.sflag [#allocation4], %s1302
        %s1304 = sand.u32 %s307, 1
        %s1305 = smul.addr %s1304, 8
        %s1306 = scalar_lea.vmem [#allocation20], %s1305
        // Predicated region
        $region109: #{_decoder_forward_jit.7} parent=63 // pred_check
          %p1307 = pneg %p317
        $region110: #{_decoder_forward_jit.7} parent=63 // pred_check_branch
          %1309 = sbr.rel (%p1307) target = $region112
        $region111: #{_decoder_forward_jit.7} parent=63 // pred_region
          %s1311 = ssub.s32 128, 128
          %1312 = vsyncadd %s1303, %s1311
          %s1313 = sadd.s32 %s40, %s39
          %s1314 = smul.addr %s1313, 128
          %s1315 = scalar_lea.hbm %s11, %s1314
          %s1317 = sshll.u32 %s1306, 4
          %s1318 = int_to_ptr.vmem [resolvable:$true] %s1317
          %1320 = dma.vmem_to_hbm [thread:$0]  %s1318, 128, %s1315, %s1303
        $region112: #{_decoder_forward_jit.7} parent=63 // pred_fallthru
          _
      $region64: #{_decoder_forward_jit.7} parent=5 // pred_fallthru
        _
      %p1321 = scmp.le.s32.totalorder 2, %s30
      // Predicated region
      $region113: #{_decoder_forward_jit.7} parent=5 // pred_check
        %p1322 = pneg %p1321
      $region114: #{_decoder_forward_jit.7} parent=5 // pred_check_branch
        %1324 = sbr.rel (%p1322) target = $region116
      $region115: #{_decoder_forward_jit.7} parent=5 // pred_region
        %s1325 = ssub.s32 %s30, 2
        // Predicated region
        $region117: #{_decoder_forward_jit.7} parent=115 // pred_check
          %p1326 = pneg %p323
        $region118: #{_decoder_forward_jit.7} parent=115 // pred_check_branch
          %1328 = sbr.rel (%p1326) target = $region120
        $region119: #{_decoder_forward_jit.7} parent=115 // pred_region
          %s1329 = sand.u32 %s308, 1
          %s1330 = scalar_lea.sflag [#allocation4], %s1329
          %s1331 = sand.u32 %s308, 1
          %s1332 = smul.addr %s1331, 8
          %s1333 = scalar_lea.vmem [#allocation20], %s1332
          %1334 = dma.done %s1330, 128
        $region120: #{_decoder_forward_jit.7} parent=115 // pred_fallthru
          _
      $region116: #{_decoder_forward_jit.7} parent=5 // pred_fallthru
        _
    $region6: #{_decoder_forward_jit.7} parent=1 // loop_footer
      %s34 = sadd.s32 1, %s30
    $region7: #{_decoder_forward_jit.7} parent=1 // loop_footer_branch
      %29 = sbr.rel target = $region3
    $region8: #{_decoder_forward_jit.7} parent=1 // loop_exit
      _
    %1335 = vsyncpa [#allocation3], 1
    %s1336 = scalar_lea.sflag [#allocation3], 1
    %1337 = vsyncpa %s1336, 1
    %1338 = vsyncpa [#allocation6], 1
    %s1339 = scalar_lea.sflag [#allocation6], 1
    %1340 = vsyncpa %s1339, 1
    %1341 = vsyncpa [#allocation9], 1
    %1342 = vsyncpa [#allocation12], 1
    %1343 = vsyncpa [#allocation15], 1
    %1344 = vsyncpa [#allocation18], 1
    %1345 = vsyncpa [#allocation4], 1
    %s1346 = scalar_lea.sflag [#allocation4], 1
    %1347 = vsyncpa %s1346, 1

// kernel: _decoder_forward_jit.8
$region0: #{_decoder_forward_jit.8}
  #allocation0 [shape = 'u32[]', space=smem, size = 0x4, offset = 0x4, fixed_abs, tag = 'smem constant byte address 0x4 - core index']
  #allocation1 [shape = 'u32[144,128]{1,0:T(1,128)}', space=vmem, size = 0x12000, scoped, tag = 'internal scratch']
  %s0 = inlined_call_operand.hbm [shape: f32[16,32], index: 0, kind: input, shape index: {}]
  %s1 = inlined_call_operand.hbm [shape: f32[1,32], index: 1, kind: input, shape index: {}]
  %s2 = inlined_call_operand.hbm [shape: f32[1,32], index: 2, kind: input, shape index: {}]
  %s3 = inlined_call_operand.hbm [shape: bf16[32,64], index: 3, kind: input, shape index: {}]
  %s4 = inlined_call_operand.hbm [shape: f32[1,64], index: 4, kind: input, shape index: {}]
  %s5 = inlined_call_operand.hbm [shape: bf16[64,32], index: 5, kind: input, shape index: {}]
  %s6 = inlined_call_operand.hbm [shape: f32[1,32], index: 6, kind: input, shape index: {}]
  %s7 = inlined_call_operand.hbm [shape: f32[16,32], index: 7, kind: output, shape index: {}]
  %s8 = sld [smem:[#allocation0]]
  $region66: #{_decoder_forward_jit.8} parent=0
    _
  %s10 = ssub.s32 1, %s8
  %s11 = scalar_select 0, %s10, %s8
  $region1: #{_decoder_forward_jit.8} parent=0
    #allocation2 [shape = 'u8[8192]{0}', space=vmem, size = 0x2000, scoped, tag = 'input window, operand 0, single buffered']
    #allocation3 [shape = 's32[1]{0}', space=sflag, size = 0x4, scoped, tag = 'scoped memory for _decoder_forward_jit.8']
    #allocation4 [shape = 's32[1]{0}', space=sflag, size = 0x4, scoped, tag = 'scoped memory for _decoder_forward_jit.8']
    #allocation5 [shape = 'u8[512]{0}', space=vmem, size = 0x400, scoped, tag = 'input window, operand 1, single buffered']
    #allocation6 [shape = 's32[1]{0}', space=sflag, size = 0x4, scoped, tag = 'scoped memory for _decoder_forward_jit.8']
    #allocation7 [shape = 'u8[512]{0}', space=vmem, size = 0x400, scoped, tag = 'input window, operand 2, single buffered']
    #allocation8 [shape = 'u8[8192]{0}', space=vmem, size = 0x2000, scoped, tag = 'input window, operand 3, single buffered']
    #allocation9 [shape = 's32[1]{0}', space=sflag, size = 0x4, scoped, tag = 'scoped memory for _decoder_forward_jit.8']
    #allocation10 [shape = 'u8[512]{0}', space=vmem, size = 0x400, scoped, tag = 'input window, operand 4, single buffered']
    #allocation11 [shape = 'u8[16384]{0}', space=vmem, size = 0x4000, scoped, tag = 'input window, operand 5, single buffered']
    #allocation12 [shape = 's32[1]{0}', space=sflag, size = 0x4, scoped, tag = 'scoped memory for _decoder_forward_jit.8']
    #allocation13 [shape = 'u8[512]{0}', space=vmem, size = 0x400, scoped, tag = 'input window, operand 6, single buffered']
    #allocation14 [shape = 'u8[8192]{0}', space=vmem, size = 0x2000, scoped, tag = 'output window, operand 0, single buffered']
    %12 = vsyncpa [#allocation3], 0
    %13 = vsyncpa [#allocation6], 0
    %14 = vsyncpa [#allocation9], 0
    %15 = vsyncpa [#allocation12], 0
    %16 = vsyncpa [#allocation4], 0
    // Predicated region
    $region2: #{_decoder_forward_jit.8} parent=1 // pred_check
      _
    $region3: #{_decoder_forward_jit.8} parent=1 // pred_check_branch
      %18 = sbr.rel (0) target = $region5
    $region4: #{_decoder_forward_jit.8} parent=1 // pred_region
      %s20 = ssub.s32 256, 256
      %21 = vsyncadd [#allocation3], %s20
      %s22 = sshll.u32 [#allocation2], 4
      %s23 = int_to_ptr.vmem [resolvable:$true] %s22
      %28 = dma.hbm_to_vmem [thread:$0]  %s0, 256, %s23, [#allocation3], 128, 128, 8
    $region5: #{_decoder_forward_jit.8} parent=1 // pred_fallthru
      _
    // Predicated region
    $region6: #{_decoder_forward_jit.8} parent=1 // pred_check
      _
    $region7: #{_decoder_forward_jit.8} parent=1 // pred_check_branch
      %30 = sbr.rel (0) target = $region9
    $region8: #{_decoder_forward_jit.8} parent=1 // pred_region
      %s32 = ssub.s32 16, 16
      %33 = vsyncadd [#allocation6], %s32
      %s35 = sshll.u32 [#allocation5], 4
      %s36 = int_to_ptr.vmem [resolvable:$true] %s35
      %38 = dma.hbm_to_vmem [thread:$0]  %s1, 16, %s36, [#allocation6]
    $region9: #{_decoder_forward_jit.8} parent=1 // pred_fallthru
      _
    // Predicated region
    $region10: #{_decoder_forward_jit.8} parent=1 // pred_check
      _
    $region11: #{_decoder_forward_jit.8} parent=1 // pred_check_branch
      %40 = sbr.rel (0) target = $region13
    $region12: #{_decoder_forward_jit.8} parent=1 // pred_region
      %s42 = ssub.s32 16, 16
      %43 = vsyncadd [#allocation6], %s42
      %s45 = sshll.u32 [#allocation7], 4
      %s46 = int_to_ptr.vmem [resolvable:$true] %s45
      %48 = dma.hbm_to_vmem [thread:$0]  %s2, 16, %s46, [#allocation6]
    $region13: #{_decoder_forward_jit.8} parent=1 // pred_fallthru
      _
    // Predicated region
    $region14: #{_decoder_forward_jit.8} parent=1 // pred_check
      _
    $region15: #{_decoder_forward_jit.8} parent=1 // pred_check_branch
      %50 = sbr.rel (0) target = $region17
    $region16: #{_decoder_forward_jit.8} parent=1 // pred_region
      %s52 = ssub.s32 256, 256
      %53 = vsyncadd [#allocation9], %s52
      %s54 = sshll.u32 [#allocation8], 4
      %s55 = int_to_ptr.vmem [resolvable:$true] %s54
      %60 = dma.hbm_to_vmem [thread:$0]  %s3, 256, %s55, [#allocation9], 64, 64, 4
    $region17: #{_decoder_forward_jit.8} parent=1 // pred_fallthru
      _
    // Predicated region
    $region18: #{_decoder_forward_jit.8} parent=1 // pred_check
      _
    $region19: #{_decoder_forward_jit.8} parent=1 // pred_check_branch
      %62 = sbr.rel (0) target = $region21
    $region20: #{_decoder_forward_jit.8} parent=1 // pred_region
      %s64 = ssub.s32 16, 16
      %65 = vsyncadd [#allocation9], %s64
      %s67 = sshll.u32 [#allocation10], 4
      %s68 = int_to_ptr.vmem [resolvable:$true] %s67
      %70 = dma.hbm_to_vmem [thread:$0]  %s4, 16, %s68, [#allocation9]
    $region21: #{_decoder_forward_jit.8} parent=1 // pred_fallthru
      _
    // Predicated region
    $region22: #{_decoder_forward_jit.8} parent=1 // pred_check
      _
    $region23: #{_decoder_forward_jit.8} parent=1 // pred_check_branch
      %72 = sbr.rel (0) target = $region25
    $region24: #{_decoder_forward_jit.8} parent=1 // pred_region
      %s74 = ssub.s32 512, 512
      %75 = vsyncadd [#allocation12], %s74
      %s76 = sshll.u32 [#allocation11], 4
      %s77 = int_to_ptr.vmem [resolvable:$true] %s76
      %82 = dma.hbm_to_vmem [thread:$0]  %s5, 512, %s77, [#allocation12], 64, 64, 4
    $region25: #{_decoder_forward_jit.8} parent=1 // pred_fallthru
      _
    // Predicated region
    $region26: #{_decoder_forward_jit.8} parent=1 // pred_check
      _
    $region27: #{_decoder_forward_jit.8} parent=1 // pred_check_branch
      %84 = sbr.rel (0) target = $region29
    $region28: #{_decoder_forward_jit.8} parent=1 // pred_region
      %s86 = ssub.s32 16, 16
      %87 = vsyncadd [#allocation12], %s86
      %s89 = sshll.u32 [#allocation13], 4
      %s90 = int_to_ptr.vmem [resolvable:$true] %s89
      %92 = dma.hbm_to_vmem [thread:$0]  %s6, 16, %s90, [#allocation12]
    $region29: #{_decoder_forward_jit.8} parent=1 // pred_fallthru
      _
    // Predicated region
    $region30: #{_decoder_forward_jit.8} parent=1 // pred_check
      _
    $region31: #{_decoder_forward_jit.8} parent=1 // pred_check_branch
      %94 = sbr.rel (0) target = $region33
    $region32: #{_decoder_forward_jit.8} parent=1 // pred_region
      %95 = dma.done [#allocation3], 256
    $region33: #{_decoder_forward_jit.8} parent=1 // pred_fallthru
      _
    // Predicated region
    $region34: #{_decoder_forward_jit.8} parent=1 // pred_check
      _
    $region35: #{_decoder_forward_jit.8} parent=1 // pred_check_branch
      %97 = sbr.rel (0) target = $region37
    $region36: #{_decoder_forward_jit.8} parent=1 // pred_region
      %98 = dma.done [#allocation6], 16
    $region37: #{_decoder_forward_jit.8} parent=1 // pred_fallthru
      _
    // Predicated region
    $region38: #{_decoder_forward_jit.8} parent=1 // pred_check
      _
    $region39: #{_decoder_forward_jit.8} parent=1 // pred_check_branch
      %100 = sbr.rel (0) target = $region41
    $region40: #{_decoder_forward_jit.8} parent=1 // pred_region
      %101 = dma.done [#allocation6], 16
    $region41: #{_decoder_forward_jit.8} parent=1 // pred_fallthru
      _
    // Predicated region
    $region42: #{_decoder_forward_jit.8} parent=1 // pred_check
      _
    $region43: #{_decoder_forward_jit.8} parent=1 // pred_check_branch
      %103 = sbr.rel (0) target = $region45
    $region44: #{_decoder_forward_jit.8} parent=1 // pred_region
      %104 = dma.done [#allocation9], 256
    $region45: #{_decoder_forward_jit.8} parent=1 // pred_fallthru
      _
    // Predicated region
    $region46: #{_decoder_forward_jit.8} parent=1 // pred_check
      _
    $region47: #{_decoder_forward_jit.8} parent=1 // pred_check_branch
      %106 = sbr.rel (0) target = $region49
    $region48: #{_decoder_forward_jit.8} parent=1 // pred_region
      %107 = dma.done [#allocation9], 16
    $region49: #{_decoder_forward_jit.8} parent=1 // pred_fallthru
      _
    // Predicated region
    $region50: #{_decoder_forward_jit.8} parent=1 // pred_check
      _
    $region51: #{_decoder_forward_jit.8} parent=1 // pred_check_branch
      %109 = sbr.rel (0) target = $region53
    $region52: #{_decoder_forward_jit.8} parent=1 // pred_region
      %110 = dma.done [#allocation12], 512
    $region53: #{_decoder_forward_jit.8} parent=1 // pred_fallthru
      _
    // Predicated region
    $region54: #{_decoder_forward_jit.8} parent=1 // pred_check
      _
    $region55: #{_decoder_forward_jit.8} parent=1 // pred_check_branch
      %112 = sbr.rel (0) target = $region57
    $region56: #{_decoder_forward_jit.8} parent=1 // pred_region
      %113 = dma.done [#allocation12], 16
    $region57: #{_decoder_forward_jit.8} parent=1 // pred_fallthru
      _
    %v115 = vld [vmem:[#allocation2] sm:$0xff]
    %v116 = vld [vmem:[#allocation2 + $0x8] sm:$0xff]
    %v117 = vld [vmem:[#allocation5] sm:$0x1]
    %v118 = vld [vmem:[#allocation7] sm:$0x1]
    %v119 = vld [vmem:[#allocation8] sm:$0xf]
    %v120 = vld [vmem:[#allocation8 + $0x4] sm:$0xf]
    %v121 = vld [vmem:[#allocation8 + $0x8] sm:$0xf]
    %v122 = vld [vmem:[#allocation8 + $0xc] sm:$0xf]
    %v123 = vld [vmem:[#allocation10] sm:$0x1]
    %v124 = vld [vmem:[#allocation11] sm:$0xf]
    %v125 = vld [vmem:[#allocation11 + $0x4] sm:$0xf]
    %v126 = vld [vmem:[#allocation11 + $0x8] sm:$0xf]
    %v127 = vld [vmem:[#allocation11 + $0xc] sm:$0xf]
    %v128 = vld [vmem:[#allocation11 + $0x10] sm:$0xf]
    %v129 = vld [vmem:[#allocation11 + $0x14] sm:$0xf]
    %v130 = vld [vmem:[#allocation11 + $0x18] sm:$0xf]
    %v131 = vld [vmem:[#allocation11 + $0x1c] sm:$0xf]
    %v132 = vld [vmem:[#allocation13] sm:$0x1]
    %vm133 = vcmask 261120
    %v134 = vsel %vm133, %v115, 0.0
    %135 = vadd.xlane.f32.xlu0 %v134
    %v136 = vpop.xlane.xlu0 %135
    %v137 = vsel %vm133, %v116, 0.0
    %138 = vadd.xlane.f32.xlu0 %v137
    %v139 = vpop.xlane.xlu0 %138
    %v140 = vrcp.pop 32.0
    %v141 = vmul.f32 %v136, %v140
    %v142 = vmul.f32 %v139, %v140
    %v143 = vsub.f32 %v115, %v141
    %v144 = vsub.f32 %v116, %v142
    %v145 = vmul.f32 %v143, %v143
    %v146 = vmul.f32 %v144, %v144
    %v147 = vsel %vm133, %v145, 0.0
    %148 = vadd.xlane.f32.xlu0 %v147
    %v149 = vpop.xlane.xlu0 %148
    %v150 = vsel %vm133, %v146, 0.0
    %151 = vadd.xlane.f32.xlu0 %v150
    %v152 = vpop.xlane.xlu0 %151
    %v153 = vrcp.pop 31.0
    %v154 = vmul.f32 %v149, %v153
    %v155 = vmul.f32 %v152, %v153
    %v157 = vlaneseq
    %v158 = vshrl.u32 %v157, 7
    %v159 = vsub.s32 0, %v158
    %v160 = vrot.slane %v117, %v159
    %v162 = vmul.f32 %v160, %v143
    %v163 = vmul.f32 %v160, %v144
    %v164 = vrsqrt.pop %v154
    %v165 = vmul.f32 %v154, %v164
    %vm166 = vcmp.eq.f32.partialorder %v154, inf
    %v167 = vsel %vm166, %v154, %v165
    %vm168 = vcmp.eq.f32.partialorder %v154, 0.0
    %v169 = vand.u32 %v154, 2147483648
    %v170 = vsel %vm168, %v169, %v167
    %v171 = vrsqrt.pop %v155
    %v172 = vmul.f32 %v155, %v171
    %vm173 = vcmp.eq.f32.partialorder %v155, inf
    %v174 = vsel %vm173, %v155, %v172
    %vm175 = vcmp.eq.f32.partialorder %v155, 0.0
    %v176 = vand.u32 %v155, 2147483648
    %v177 = vsel %vm175, %v176, %v174
    %v178 = vadd.f32 %v170, 1e-06
    %v179 = vadd.f32 %v177, 1e-06
    %v180 = vrcp.pop %v178
    %v181 = vmul.f32 %v162, %v180
    %v182 = vrcp.pop %v179
    %v183 = vmul.f32 %v163, %v182
    %v185 = vlaneseq
    %v186 = vshrl.u32 %v185, 7
    %v187 = vsub.s32 0, %v186
    %v188 = vrot.slane %v118, %v187
    %v190 = vadd.f32 %v181, %v188
    %v191 = vadd.f32 %v183, %v188
    %v192 = vpack.c.bf16 %v191, %v190
    %v194 = vlaneseq
    %v195 = vshrl.u32 %v194, 7
    %v196 = vsub.s32 0, %v195
    %v197 = vrot.slane %v123, %v196
    %v203 = vunpack.c.l.b16 %v119
    %v204 = vunpack.c.l.b16 %v120
    %v205 = vunpack.c.l.b16 %v121
    %v206 = vunpack.c.l.b16 %v122
    %v207 = vpack.c.b16 %v204, %v203
    %v208 = vpack.c.b16 %v206, %v205
    %v212 = vsel %vm133, %v192, 0
    %214 = vmatprep.subr.bf16.mxu0 0
    %215 = vmatpush1.bf16.msra.mxu0 %v207
    %216 = vmatprep.subr.bf16.mxu0 0
    %217 = vmatpush1.bf16.msra.mxu0 %v208
    %218 = vmatprep.subr.bf16.mxu0 0
    %219 = vmatpush1.bf16.msra.mxu0 0
    %220 = vmatprep.subr.bf16.mxu0 0
    %221 = vmatpush1.bf16.msra.mxu0 0
    %222 = vmatprep.subr.bf16.mxu0 0
    %223 = vmatpush1.bf16.msra.mxu0 0
    %224 = vmatprep.subr.bf16.mxu0 0
    %225 = vmatpush1.bf16.msra.mxu0 0
    %226 = vmatprep.subr.bf16.mxu0 0
    %227 = vmatpush1.bf16.msra.mxu0 0
    %228 = vmatprep.subr.bf16.mxu0 0
    %229 = vmatpush1.bf16.msra.mxu0 0
    %230 = vmatprep.subr.bf16.mxu0 0
    %231 = vmatpush1.bf16.msra.mxu0 0
    %232 = vmatprep.subr.bf16.mxu0 0
    %233 = vmatpush1.bf16.msra.mxu0 0
    %234 = vmatprep.subr.bf16.mxu0 0
    %235 = vmatpush1.bf16.msra.mxu0 0
    %236 = vmatprep.subr.bf16.mxu0 0
    %237 = vmatpush1.bf16.msra.mxu0 0
    %238 = vmatprep.subr.bf16.mxu0 0
    %239 = vmatpush1.bf16.msra.mxu0 0
    %240 = vmatprep.subr.bf16.mxu0 0
    %241 = vmatpush1.bf16.msra.mxu0 0
    %242 = vmatprep.subr.bf16.mxu0 0
    %243 = vmatpush1.bf16.msra.mxu0 0
    %244 = vmatprep.subr.bf16.mxu0 0
    %245 = vmatpush1.bf16.msra.mxu0 0
    %246 = vmatprep.mubr.bf16.mxu0 0
    %247 = vmatmul.mubr.bf16.gmra.mrb[0].mxu0 %v212
    %v248 = vpop.f32.mrb[0].mxu0
    %v249 = vadd.f32 %v197, %v248
    %v250 = vpop.f32.mrb[0].mxu0
    %v251 = vpop.f32.mrb[0].mxu0
    %v252 = vadd.f32 %v197, %v251
    %v253 = vpop.f32.mrb[0].mxu0
    %254 = vdwg.mxu0
    %v255 = vmax.f32 %v249, 0.0
    %v256 = vmax.f32 %v252, 0.0
    %v257 = vpack.c.bf16 %v256, %v255
    %v259 = vlaneseq
    %v260 = vshrl.u32 %v259, 7
    %v261 = vsub.s32 0, %v260
    %v262 = vrot.slane %v132, %v261
    %v272 = vunpack.c.l.b16 %v124
    %v273 = vunpack.c.l.b16 %v125
    %v274 = vunpack.c.l.b16 %v126
    %v275 = vunpack.c.l.b16 %v127
    %v276 = vunpack.c.l.b16 %v128
    %v277 = vunpack.c.l.b16 %v129
    %v278 = vunpack.c.l.b16 %v130
    %v279 = vunpack.c.l.b16 %v131
    %v280 = vpack.c.b16 %v273, %v272
    %v281 = vpack.c.b16 %v275, %v274
    %v282 = vpack.c.b16 %v277, %v276
    %v283 = vpack.c.b16 %v279, %v278
    %vm288 = vcmask 523264
    %v290 = vsel %vm288, %v257, 0
    %292 = vmatprep.subr.bf16.mxu0 0
    %293 = vmatpush1.bf16.msra.mxu0 %v280
    %294 = vmatprep.subr.bf16.mxu0 0
    %295 = vmatpush1.bf16.msra.mxu0 %v281
    %296 = vmatprep.subr.bf16.mxu0 0
    %297 = vmatpush1.bf16.msra.mxu0 %v282
    %298 = vmatprep.subr.bf16.mxu0 0
    %299 = vmatpush1.bf16.msra.mxu0 %v283
    %300 = vmatprep.subr.bf16.mxu0 0
    %301 = vmatpush1.bf16.msra.mxu0 0
    %302 = vmatprep.subr.bf16.mxu0 0
    %303 = vmatpush1.bf16.msra.mxu0 0
    %304 = vmatprep.subr.bf16.mxu0 0
    %305 = vmatpush1.bf16.msra.mxu0 0
    %306 = vmatprep.subr.bf16.mxu0 0
    %307 = vmatpush1.bf16.msra.mxu0 0
    %308 = vmatprep.subr.bf16.mxu0 0
    %309 = vmatpush1.bf16.msra.mxu0 0
    %310 = vmatprep.subr.bf16.mxu0 0
    %311 = vmatpush1.bf16.msra.mxu0 0
    %312 = vmatprep.subr.bf16.mxu0 0
    %313 = vmatpush1.bf16.msra.mxu0 0
    %314 = vmatprep.subr.bf16.mxu0 0
    %315 = vmatpush1.bf16.msra.mxu0 0
    %316 = vmatprep.subr.bf16.mxu0 0
    %317 = vmatpush1.bf16.msra.mxu0 0
    %318 = vmatprep.subr.bf16.mxu0 0
    %319 = vmatpush1.bf16.msra.mxu0 0
    %320 = vmatprep.subr.bf16.mxu0 0
    %321 = vmatpush1.bf16.msra.mxu0 0
    %322 = vmatprep.subr.bf16.mxu0 0
    %323 = vmatpush1.bf16.msra.mxu0 0
    %324 = vmatprep.mubr.bf16.mxu0 0
    %325 = vmatmul.mubr.bf16.gmra.mrb[0].mxu0 %v290
    %v326 = vpop.f32.mrb[0].mxu0
    %v327 = vadd.f32 %v262, %v326
    %v328 = vpop.f32.mrb[0].mxu0
    %v329 = vpop.f32.mrb[0].mxu0
    %v330 = vadd.f32 %v262, %v329
    %v331 = vpop.f32.mrb[0].mxu0
    %332 = vdwg.mxu0
    %v333 = vadd.f32 %v115, %v327
    %v334 = vadd.f32 %v116, %v330
    %335 = vst.msk [vmem:[#allocation14] sm:$0xff] %vm133, %v333
    %336 = vst.msk [vmem:[#allocation14 + $0x8] sm:$0xff] %vm133, %v334
    // Predicated region
    $region58: #{_decoder_forward_jit.8} parent=1 // pred_check
      _
    $region59: #{_decoder_forward_jit.8} parent=1 // pred_check_branch
      %338 = sbr.rel (0) target = $region61
    $region60: #{_decoder_forward_jit.8} parent=1 // pred_region
      %s340 = ssub.s32 256, 256
      %341 = vsyncadd [#allocation4], %s340
      %s342 = sshll.u32 [#allocation14], 4
      %s343 = int_to_ptr.vmem [resolvable:$true] %s342
      %348 = dma.vmem_to_hbm [thread:$0]  %s343, 256, %s7, [#allocation4], 128, 128, 8
    $region61: #{_decoder_forward_jit.8} parent=1 // pred_fallthru
      _
    // Predicated region
    $region62: #{_decoder_forward_jit.8} parent=1 // pred_check
      _
    $region63: #{_decoder_forward_jit.8} parent=1 // pred_check_branch
      %350 = sbr.rel (0) target = $region65
    $region64: #{_decoder_forward_jit.8} parent=1 // pred_region
      %351 = dma.done [#allocation4], 256
    $region65: #{_decoder_forward_jit.8} parent=1 // pred_fallthru
      _
    %352 = vsyncpa [#allocation3], 1
    %353 = vsyncpa [#allocation6], 1
    %354 = vsyncpa [#allocation9], 1
    %355 = vsyncpa [#allocation12], 1
    %356 = vsyncpa [#allocation4], 1

// kernel: _decoder_forward_jit.11
$region0: #{_decoder_forward_jit.11}
  #allocation0 [shape = 'u32[]', space=smem, size = 0x4, offset = 0x4, fixed_abs, tag = 'smem constant byte address 0x4 - core index']
  #allocation1 [shape = 'u32[144,128]{1,0:T(1,128)}', space=vmem, size = 0x12000, scoped, tag = 'internal scratch']
  %s0 = inlined_call_operand.hbm [shape: f32[16,32], index: 0, kind: input, shape index: {}]
  %s1 = inlined_call_operand.hbm [shape: f32[1,32], index: 1, kind: input, shape index: {}]
  %s2 = inlined_call_operand.hbm [shape: f32[1,32], index: 2, kind: input, shape index: {}]
  %s3 = inlined_call_operand.hbm [shape: bf16[32,64], index: 3, kind: input, shape index: {}]
  %s4 = inlined_call_operand.hbm [shape: f32[1,64], index: 4, kind: input, shape index: {}]
  %s5 = inlined_call_operand.hbm [shape: bf16[64,32], index: 5, kind: input, shape index: {}]
  %s6 = inlined_call_operand.hbm [shape: f32[1,32], index: 6, kind: input, shape index: {}]
  %s7 = inlined_call_operand.hbm [shape: f32[1,32], index: 7, kind: input, shape index: {}]
  %s8 = inlined_call_operand.hbm [shape: f32[1,32], index: 8, kind: input, shape index: {}]
  %s9 = inlined_call_operand.hbm [shape: f32[16,32], index: 9, kind: output, shape index: {}]
  %s10 = sld [smem:[#allocation0]]
  $region82: #{_decoder_forward_jit.11} parent=0
    _
  %s12 = ssub.s32 1, %s10
  %s13 = scalar_select 0, %s12, %s10
  $region1: #{_decoder_forward_jit.11} parent=0
    #allocation2 [shape = 'u8[8192]{0}', space=vmem, size = 0x2000, scoped, tag = 'input window, operand 0, single buffered']
    #allocation3 [shape = 's32[1]{0}', space=sflag, size = 0x4, scoped, tag = 'scoped memory for _decoder_forward_jit.11']
    #allocation4 [shape = 's32[1]{0}', space=sflag, size = 0x4, scoped, tag = 'scoped memory for _decoder_forward_jit.11']
    #allocation5 [shape = 'u8[512]{0}', space=vmem, size = 0x400, scoped, tag = 'input window, operand 1, single buffered']
    #allocation6 [shape = 's32[1]{0}', space=sflag, size = 0x4, scoped, tag = 'scoped memory for _decoder_forward_jit.11']
    #allocation7 [shape = 'u8[512]{0}', space=vmem, size = 0x400, scoped, tag = 'input window, operand 2, single buffered']
    #allocation8 [shape = 'u8[8192]{0}', space=vmem, size = 0x2000, scoped, tag = 'input window, operand 3, single buffered']
    #allocation9 [shape = 's32[1]{0}', space=sflag, size = 0x4, scoped, tag = 'scoped memory for _decoder_forward_jit.11']
    #allocation10 [shape = 'u8[512]{0}', space=vmem, size = 0x400, scoped, tag = 'input window, operand 4, single buffered']
    #allocation11 [shape = 'u8[16384]{0}', space=vmem, size = 0x4000, scoped, tag = 'input window, operand 5, single buffered']
    #allocation12 [shape = 's32[1]{0}', space=sflag, size = 0x4, scoped, tag = 'scoped memory for _decoder_forward_jit.11']
    #allocation13 [shape = 'u8[512]{0}', space=vmem, size = 0x400, scoped, tag = 'input window, operand 6, single buffered']
    #allocation14 [shape = 'u8[512]{0}', space=vmem, size = 0x400, scoped, tag = 'input window, operand 7, single buffered']
    #allocation15 [shape = 's32[1]{0}', space=sflag, size = 0x4, scoped, tag = 'scoped memory for _decoder_forward_jit.11']
    #allocation16 [shape = 'u8[512]{0}', space=vmem, size = 0x400, scoped, tag = 'input window, operand 8, single buffered']
    #allocation17 [shape = 'u8[8192]{0}', space=vmem, size = 0x2000, scoped, tag = 'output window, operand 0, single buffered']
    %14 = vsyncpa [#allocation3], 0
    %15 = vsyncpa [#allocation6], 0
    %16 = vsyncpa [#allocation9], 0
    %17 = vsyncpa [#allocation12], 0
    %18 = vsyncpa [#allocation15], 0
    %19 = vsyncpa [#allocation4], 0
    // Predicated region
    $region2: #{_decoder_forward_jit.11} parent=1 // pred_check
      _
    $region3: #{_decoder_forward_jit.11} parent=1 // pred_check_branch
      %21 = sbr.rel (0) target = $region5
    $region4: #{_decoder_forward_jit.11} parent=1 // pred_region
      %s23 = ssub.s32 256, 256
      %24 = vsyncadd [#allocation3], %s23
      %s25 = sshll.u32 [#allocation2], 4
      %s26 = int_to_ptr.vmem [resolvable:$true] %s25
      %31 = dma.hbm_to_vmem [thread:$0]  %s0, 256, %s26, [#allocation3], 128, 128, 8
    $region5: #{_decoder_forward_jit.11} parent=1 // pred_fallthru
      _
    // Predicated region
    $region6: #{_decoder_forward_jit.11} parent=1 // pred_check
      _
    $region7: #{_decoder_forward_jit.11} parent=1 // pred_check_branch
      %33 = sbr.rel (0) target = $region9
    $region8: #{_decoder_forward_jit.11} parent=1 // pred_region
      %s35 = ssub.s32 16, 16
      %36 = vsyncadd [#allocation6], %s35
      %s38 = sshll.u32 [#allocation5], 4
      %s39 = int_to_ptr.vmem [resolvable:$true] %s38
      %41 = dma.hbm_to_vmem [thread:$0]  %s1, 16, %s39, [#allocation6]
    $region9: #{_decoder_forward_jit.11} parent=1 // pred_fallthru
      _
    // Predicated region
    $region10: #{_decoder_forward_jit.11} parent=1 // pred_check
      _
    $region11: #{_decoder_forward_jit.11} parent=1 // pred_check_branch
      %43 = sbr.rel (0) target = $region13
    $region12: #{_decoder_forward_jit.11} parent=1 // pred_region
      %s45 = ssub.s32 16, 16
      %46 = vsyncadd [#allocation6], %s45
      %s48 = sshll.u32 [#allocation7], 4
      %s49 = int_to_ptr.vmem [resolvable:$true] %s48
      %51 = dma.hbm_to_vmem [thread:$0]  %s2, 16, %s49, [#allocation6]
    $region13: #{_decoder_forward_jit.11} parent=1 // pred_fallthru
      _
    // Predicated region
    $region14: #{_decoder_forward_jit.11} parent=1 // pred_check
      _
    $region15: #{_decoder_forward_jit.11} parent=1 // pred_check_branch
      %53 = sbr.rel (0) target = $region17
    $region16: #{_decoder_forward_jit.11} parent=1 // pred_region
      %s55 = ssub.s32 256, 256
      %56 = vsyncadd [#allocation9], %s55
      %s57 = sshll.u32 [#allocation8], 4
      %s58 = int_to_ptr.vmem [resolvable:$true] %s57
      %63 = dma.hbm_to_vmem [thread:$0]  %s3, 256, %s58, [#allocation9], 64, 64, 4
    $region17: #{_decoder_forward_jit.11} parent=1 // pred_fallthru
      _
    // Predicated region
    $region18: #{_decoder_forward_jit.11} parent=1 // pred_check
      _
    $region19: #{_decoder_forward_jit.11} parent=1 // pred_check_branch
      %65 = sbr.rel (0) target = $region21
    $region20: #{_decoder_forward_jit.11} parent=1 // pred_region
      %s67 = ssub.s32 16, 16
      %68 = vsyncadd [#allocation9], %s67
      %s70 = sshll.u32 [#allocation10], 4
      %s71 = int_to_ptr.vmem [resolvable:$true] %s70
      %73 = dma.hbm_to_vmem [thread:$0]  %s4, 16, %s71, [#allocation9]
    $region21: #{_decoder_forward_jit.11} parent=1 // pred_fallthru
      _
    // Predicated region
    $region22: #{_decoder_forward_jit.11} parent=1 // pred_check
      _
    $region23: #{_decoder_forward_jit.11} parent=1 // pred_check_branch
      %75 = sbr.rel (0) target = $region25
    $region24: #{_decoder_forward_jit.11} parent=1 // pred_region
      %s77 = ssub.s32 512, 512
      %78 = vsyncadd [#allocation12], %s77
      %s79 = sshll.u32 [#allocation11], 4
      %s80 = int_to_ptr.vmem [resolvable:$true] %s79
      %85 = dma.hbm_to_vmem [thread:$0]  %s5, 512, %s80, [#allocation12], 64, 64, 4
    $region25: #{_decoder_forward_jit.11} parent=1 // pred_fallthru
      _
    // Predicated region
    $region26: #{_decoder_forward_jit.11} parent=1 // pred_check
      _
    $region27: #{_decoder_forward_jit.11} parent=1 // pred_check_branch
      %87 = sbr.rel (0) target = $region29
    $region28: #{_decoder_forward_jit.11} parent=1 // pred_region
      %s89 = ssub.s32 16, 16
      %90 = vsyncadd [#allocation12], %s89
      %s92 = sshll.u32 [#allocation13], 4
      %s93 = int_to_ptr.vmem [resolvable:$true] %s92
      %95 = dma.hbm_to_vmem [thread:$0]  %s6, 16, %s93, [#allocation12]
    $region29: #{_decoder_forward_jit.11} parent=1 // pred_fallthru
      _
    // Predicated region
    $region30: #{_decoder_forward_jit.11} parent=1 // pred_check
      _
    $region31: #{_decoder_forward_jit.11} parent=1 // pred_check_branch
      %97 = sbr.rel (0) target = $region33
    $region32: #{_decoder_forward_jit.11} parent=1 // pred_region
      %s99 = ssub.s32 16, 16
      %100 = vsyncadd [#allocation15], %s99
      %s102 = sshll.u32 [#allocation14], 4
      %s103 = int_to_ptr.vmem [resolvable:$true] %s102
      %105 = dma.hbm_to_vmem [thread:$0]  %s7, 16, %s103, [#allocation15]
    $region33: #{_decoder_forward_jit.11} parent=1 // pred_fallthru
      _
    // Predicated region
    $region34: #{_decoder_forward_jit.11} parent=1 // pred_check
      _
    $region35: #{_decoder_forward_jit.11} parent=1 // pred_check_branch
      %107 = sbr.rel (0) target = $region37
    $region36: #{_decoder_forward_jit.11} parent=1 // pred_region
      %s109 = ssub.s32 16, 16
      %110 = vsyncadd [#allocation15], %s109
      %s112 = sshll.u32 [#allocation16], 4
      %s113 = int_to_ptr.vmem [resolvable:$true] %s112
      %115 = dma.hbm_to_vmem [thread:$0]  %s8, 16, %s113, [#allocation15]
    $region37: #{_decoder_forward_jit.11} parent=1 // pred_fallthru
      _
    // Predicated region
    $region38: #{_decoder_forward_jit.11} parent=1 // pred_check
      _
    $region39: #{_decoder_forward_jit.11} parent=1 // pred_check_branch
      %117 = sbr.rel (0) target = $region41
    $region40: #{_decoder_forward_jit.11} parent=1 // pred_region
      %118 = dma.done [#allocation3], 256
    $region41: #{_decoder_forward_jit.11} parent=1 // pred_fallthru
      _
    // Predicated region
    $region42: #{_decoder_forward_jit.11} parent=1 // pred_check
      _
    $region43: #{_decoder_forward_jit.11} parent=1 // pred_check_branch
      %120 = sbr.rel (0) target = $region45
    $region44: #{_decoder_forward_jit.11} parent=1 // pred_region
      %121 = dma.done [#allocation6], 16
    $region45: #{_decoder_forward_jit.11} parent=1 // pred_fallthru
      _
    // Predicated region
    $region46: #{_decoder_forward_jit.11} parent=1 // pred_check
      _
    $region47: #{_decoder_forward_jit.11} parent=1 // pred_check_branch
      %123 = sbr.rel (0) target = $region49
    $region48: #{_decoder_forward_jit.11} parent=1 // pred_region
      %124 = dma.done [#allocation6], 16
    $region49: #{_decoder_forward_jit.11} parent=1 // pred_fallthru
      _
    // Predicated region
    $region50: #{_decoder_forward_jit.11} parent=1 // pred_check
      _
    $region51: #{_decoder_forward_jit.11} parent=1 // pred_check_branch
      %126 = sbr.rel (0) target = $region53
    $region52: #{_decoder_forward_jit.11} parent=1 // pred_region
      %127 = dma.done [#allocation9], 256
    $region53: #{_decoder_forward_jit.11} parent=1 // pred_fallthru
      _
    // Predicated region
    $region54: #{_decoder_forward_jit.11} parent=1 // pred_check
      _
    $region55: #{_decoder_forward_jit.11} parent=1 // pred_check_branch
      %129 = sbr.rel (0) target = $region57
    $region56: #{_decoder_forward_jit.11} parent=1 // pred_region
      %130 = dma.done [#allocation9], 16
    $region57: #{_decoder_forward_jit.11} parent=1 // pred_fallthru
      _
    // Predicated region
    $region58: #{_decoder_forward_jit.11} parent=1 // pred_check
      _
    $region59: #{_decoder_forward_jit.11} parent=1 // pred_check_branch
      %132 = sbr.rel (0) target = $region61
    $region60: #{_decoder_forward_jit.11} parent=1 // pred_region
      %133 = dma.done [#allocation12], 512
    $region61: #{_decoder_forward_jit.11} parent=1 // pred_fallthru
      _
    // Predicated region
    $region62: #{_decoder_forward_jit.11} parent=1 // pred_check
      _
    $region63: #{_decoder_forward_jit.11} parent=1 // pred_check_branch
      %135 = sbr.rel (0) target = $region65
    $region64: #{_decoder_forward_jit.11} parent=1 // pred_region
      %136 = dma.done [#allocation12], 16
    $region65: #{_decoder_forward_jit.11} parent=1 // pred_fallthru
      _
    // Predicated region
    $region66: #{_decoder_forward_jit.11} parent=1 // pred_check
      _
    $region67: #{_decoder_forward_jit.11} parent=1 // pred_check_branch
      %138 = sbr.rel (0) target = $region69
    $region68: #{_decoder_forward_jit.11} parent=1 // pred_region
      %139 = dma.done [#allocation15], 16
    $region69: #{_decoder_forward_jit.11} parent=1 // pred_fallthru
      _
    // Predicated region
    $region70: #{_decoder_forward_jit.11} parent=1 // pred_check
      _
    $region71: #{_decoder_forward_jit.11} parent=1 // pred_check_branch
      %141 = sbr.rel (0) target = $region73
    $region72: #{_decoder_forward_jit.11} parent=1 // pred_region
      %142 = dma.done [#allocation15], 16
    $region73: #{_decoder_forward_jit.11} parent=1 // pred_fallthru
      _
    %v144 = vld [vmem:[#allocation2] sm:$0xff]
    %v145 = vld [vmem:[#allocation2 + $0x8] sm:$0xff]
    %v146 = vld [vmem:[#allocation5] sm:$0x1]
    %v147 = vld [vmem:[#allocation7] sm:$0x1]
    %v148 = vld [vmem:[#allocation8] sm:$0xf]
    %v149 = vld [vmem:[#allocation8 + $0x4] sm:$0xf]
    %v150 = vld [vmem:[#allocation8 + $0x8] sm:$0xf]
    %v151 = vld [vmem:[#allocation8 + $0xc] sm:$0xf]
    %v152 = vld [vmem:[#allocation10] sm:$0x1]
    %v153 = vld [vmem:[#allocation11] sm:$0xf]
    %v154 = vld [vmem:[#allocation11 + $0x4] sm:$0xf]
    %v155 = vld [vmem:[#allocation11 + $0x8] sm:$0xf]
    %v156 = vld [vmem:[#allocation11 + $0xc] sm:$0xf]
    %v157 = vld [vmem:[#allocation11 + $0x10] sm:$0xf]
    %v158 = vld [vmem:[#allocation11 + $0x14] sm:$0xf]
    %v159 = vld [vmem:[#allocation11 + $0x18] sm:$0xf]
    %v160 = vld [vmem:[#allocation11 + $0x1c] sm:$0xf]
    %v161 = vld [vmem:[#allocation13] sm:$0x1]
    %vm162 = vcmask 261120
    %v163 = vsel %vm162, %v144, 0.0
    %164 = vadd.xlane.f32.xlu0 %v163
    %v165 = vpop.xlane.xlu0 %164
    %v166 = vsel %vm162, %v145, 0.0
    %167 = vadd.xlane.f32.xlu0 %v166
    %v168 = vpop.xlane.xlu0 %167
    %v169 = vrcp.pop 32.0
    %v170 = vmul.f32 %v165, %v169
    %v171 = vmul.f32 %v168, %v169
    %v172 = vsub.f32 %v144, %v170
    %v173 = vsub.f32 %v145, %v171
    %v174 = vmul.f32 %v172, %v172
    %v175 = vmul.f32 %v173, %v173
    %v176 = vsel %vm162, %v174, 0.0
    %177 = vadd.xlane.f32.xlu0 %v176
    %v178 = vpop.xlane.xlu0 %177
    %v179 = vsel %vm162, %v175, 0.0
    %180 = vadd.xlane.f32.xlu0 %v179
    %v181 = vpop.xlane.xlu0 %180
    %v182 = vrcp.pop 31.0
    %v183 = vmul.f32 %v178, %v182
    %v184 = vmul.f32 %v181, %v182
    %v186 = vlaneseq
    %v187 = vshrl.u32 %v186, 7
    %v188 = vsub.s32 0, %v187
    %v189 = vrot.slane %v146, %v188
    %v191 = vmul.f32 %v189, %v172
    %v192 = vmul.f32 %v189, %v173
    %v193 = vrsqrt.pop %v183
    %v194 = vmul.f32 %v183, %v193
    %vm195 = vcmp.eq.f32.partialorder %v183, inf
    %v196 = vsel %vm195, %v183, %v194
    %vm197 = vcmp.eq.f32.partialorder %v183, 0.0
    %v198 = vand.u32 %v183, 2147483648
    %v199 = vsel %vm197, %v198, %v196
    %v200 = vrsqrt.pop %v184
    %v201 = vmul.f32 %v184, %v200
    %vm202 = vcmp.eq.f32.partialorder %v184, inf
    %v203 = vsel %vm202, %v184, %v201
    %vm204 = vcmp.eq.f32.partialorder %v184, 0.0
    %v205 = vand.u32 %v184, 2147483648
    %v206 = vsel %vm204, %v205, %v203
    %v207 = vadd.f32 %v199, 1e-06
    %v208 = vadd.f32 %v206, 1e-06
    %v209 = vrcp.pop %v207
    %v210 = vmul.f32 %v191, %v209
    %v211 = vrcp.pop %v208
    %v212 = vmul.f32 %v192, %v211
    %v214 = vlaneseq
    %v215 = vshrl.u32 %v214, 7
    %v216 = vsub.s32 0, %v215
    %v217 = vrot.slane %v147, %v216
    %v219 = vadd.f32 %v210, %v217
    %v220 = vadd.f32 %v212, %v217
    %v221 = vpack.c.bf16 %v220, %v219
    %v223 = vlaneseq
    %v224 = vshrl.u32 %v223, 7
    %v225 = vsub.s32 0, %v224
    %v226 = vrot.slane %v152, %v225
    %v232 = vunpack.c.l.b16 %v148
    %v233 = vunpack.c.l.b16 %v149
    %v234 = vunpack.c.l.b16 %v150
    %v235 = vunpack.c.l.b16 %v151
    %v236 = vpack.c.b16 %v233, %v232
    %v237 = vpack.c.b16 %v235, %v234
    %v241 = vsel %vm162, %v221, 0
    %243 = vmatprep.subr.bf16.mxu0 0
    %244 = vmatpush1.bf16.msra.mxu0 %v236
    %245 = vmatprep.subr.bf16.mxu0 0
    %246 = vmatpush1.bf16.msra.mxu0 %v237
    %247 = vmatprep.subr.bf16.mxu0 0
    %248 = vmatpush1.bf16.msra.mxu0 0
    %249 = vmatprep.subr.bf16.mxu0 0
    %250 = vmatpush1.bf16.msra.mxu0 0
    %251 = vmatprep.subr.bf16.mxu0 0
    %252 = vmatpush1.bf16.msra.mxu0 0
    %253 = vmatprep.subr.bf16.mxu0 0
    %254 = vmatpush1.bf16.msra.mxu0 0
    %255 = vmatprep.subr.bf16.mxu0 0
    %256 = vmatpush1.bf16.msra.mxu0 0
    %257 = vmatprep.subr.bf16.mxu0 0
    %258 = vmatpush1.bf16.msra.mxu0 0
    %259 = vmatprep.subr.bf16.mxu0 0
    %260 = vmatpush1.bf16.msra.mxu0 0
    %261 = vmatprep.subr.bf16.mxu0 0
    %262 = vmatpush1.bf16.msra.mxu0 0
    %263 = vmatprep.subr.bf16.mxu0 0
    %264 = vmatpush1.bf16.msra.mxu0 0
    %265 = vmatprep.subr.bf16.mxu0 0
    %266 = vmatpush1.bf16.msra.mxu0 0
    %267 = vmatprep.subr.bf16.mxu0 0
    %268 = vmatpush1.bf16.msra.mxu0 0
    %269 = vmatprep.subr.bf16.mxu0 0
    %270 = vmatpush1.bf16.msra.mxu0 0
    %271 = vmatprep.subr.bf16.mxu0 0
    %272 = vmatpush1.bf16.msra.mxu0 0
    %273 = vmatprep.subr.bf16.mxu0 0
    %274 = vmatpush1.bf16.msra.mxu0 0
    %275 = vmatprep.mubr.bf16.mxu0 0
    %276 = vmatmul.mubr.bf16.gmra.mrb[0].mxu0 %v241
    %v277 = vpop.f32.mrb[0].mxu0
    %v278 = vadd.f32 %v226, %v277
    %v279 = vpop.f32.mrb[0].mxu0
    %v280 = vpop.f32.mrb[0].mxu0
    %v281 = vadd.f32 %v226, %v280
    %v282 = vpop.f32.mrb[0].mxu0
    %283 = vdwg.mxu0
    %v284 = vmax.f32 %v278, 0.0
    %v285 = vmax.f32 %v281, 0.0
    %v286 = vpack.c.bf16 %v285, %v284
    %v288 = vlaneseq
    %v289 = vshrl.u32 %v288, 7
    %v290 = vsub.s32 0, %v289
    %v291 = vrot.slane %v161, %v290
    %v301 = vunpack.c.l.b16 %v153
    %v302 = vunpack.c.l.b16 %v154
    %v303 = vunpack.c.l.b16 %v155
    %v304 = vunpack.c.l.b16 %v156
    %v305 = vunpack.c.l.b16 %v157
    %v306 = vunpack.c.l.b16 %v158
    %v307 = vunpack.c.l.b16 %v159
    %v308 = vunpack.c.l.b16 %v160
    %v309 = vpack.c.b16 %v302, %v301
    %v310 = vpack.c.b16 %v304, %v303
    %v311 = vpack.c.b16 %v306, %v305
    %v312 = vpack.c.b16 %v308, %v307
    %vm317 = vcmask 523264
    %v319 = vsel %vm317, %v286, 0
    %321 = vmatprep.subr.bf16.mxu0 0
    %322 = vmatpush1.bf16.msra.mxu0 %v309
    %323 = vmatprep.subr.bf16.mxu0 0
    %324 = vmatpush1.bf16.msra.mxu0 %v310
    %325 = vmatprep.subr.bf16.mxu0 0
    %326 = vmatpush1.bf16.msra.mxu0 %v311
    %327 = vmatprep.subr.bf16.mxu0 0
    %328 = vmatpush1.bf16.msra.mxu0 %v312
    %329 = vmatprep.subr.bf16.mxu0 0
    %330 = vmatpush1.bf16.msra.mxu0 0
    %331 = vmatprep.subr.bf16.mxu0 0
    %332 = vmatpush1.bf16.msra.mxu0 0
    %333 = vmatprep.subr.bf16.mxu0 0
    %334 = vmatpush1.bf16.msra.mxu0 0
    %335 = vmatprep.subr.bf16.mxu0 0
    %336 = vmatpush1.bf16.msra.mxu0 0
    %337 = vmatprep.subr.bf16.mxu0 0
    %338 = vmatpush1.bf16.msra.mxu0 0
    %339 = vmatprep.subr.bf16.mxu0 0
    %340 = vmatpush1.bf16.msra.mxu0 0
    %341 = vmatprep.subr.bf16.mxu0 0
    %342 = vmatpush1.bf16.msra.mxu0 0
    %343 = vmatprep.subr.bf16.mxu0 0
    %344 = vmatpush1.bf16.msra.mxu0 0
    %345 = vmatprep.subr.bf16.mxu0 0
    %346 = vmatpush1.bf16.msra.mxu0 0
    %347 = vmatprep.subr.bf16.mxu0 0
    %348 = vmatpush1.bf16.msra.mxu0 0
    %349 = vmatprep.subr.bf16.mxu0 0
    %350 = vmatpush1.bf16.msra.mxu0 0
    %351 = vmatprep.subr.bf16.mxu0 0
    %352 = vmatpush1.bf16.msra.mxu0 0
    %353 = vmatprep.mubr.bf16.mxu0 0
    %354 = vmatmul.mubr.bf16.gmra.mrb[0].mxu0 %v319
    %v355 = vpop.f32.mrb[0].mxu0
    %v356 = vadd.f32 %v291, %v355
    %v357 = vpop.f32.mrb[0].mxu0
    %v358 = vpop.f32.mrb[0].mxu0
    %v359 = vadd.f32 %v291, %v358
    %v360 = vpop.f32.mrb[0].mxu0
    %361 = vdwg.mxu0
    %v362 = vadd.f32 %v144, %v356
    %v363 = vadd.f32 %v145, %v359
    %v364 = vld [vmem:[#allocation14] sm:$0x1]
    %v365 = vld [vmem:[#allocation16] sm:$0x1]
    %v366 = vsel %vm162, %v362, 0.0
    %367 = vadd.xlane.f32.xlu0 %v366
    %v368 = vpop.xlane.xlu0 %367
    %v369 = vsel %vm162, %v363, 0.0
    %370 = vadd.xlane.f32.xlu0 %v369
    %v371 = vpop.xlane.xlu0 %370
    %v372 = vmul.f32 %v368, %v169
    %v373 = vmul.f32 %v371, %v169
    %v374 = vsub.f32 %v362, %v372
    %v375 = vsub.f32 %v363, %v373
    %v376 = vmul.f32 %v374, %v374
    %v377 = vmul.f32 %v375, %v375
    %v378 = vsel %vm162, %v376, 0.0
    %379 = vadd.xlane.f32.xlu0 %v378
    %v380 = vpop.xlane.xlu0 %379
    %v381 = vsel %vm162, %v377, 0.0
    %382 = vadd.xlane.f32.xlu0 %v381
    %v383 = vpop.xlane.xlu0 %382
    %v384 = vmul.f32 %v380, %v182
    %v385 = vmul.f32 %v383, %v182
    %v387 = vlaneseq
    %v388 = vshrl.u32 %v387, 7
    %v389 = vsub.s32 0, %v388
    %v390 = vrot.slane %v364, %v389
    %v392 = vmul.f32 %v390, %v374
    %v393 = vmul.f32 %v390, %v375
    %v394 = vrsqrt.pop %v384
    %v395 = vmul.f32 %v384, %v394
    %vm396 = vcmp.eq.f32.partialorder %v384, inf
    %v397 = vsel %vm396, %v384, %v395
    %vm398 = vcmp.eq.f32.partialorder %v384, 0.0
    %v399 = vand.u32 %v384, 2147483648
    %v400 = vsel %vm398, %v399, %v397
    %v401 = vrsqrt.pop %v385
    %v402 = vmul.f32 %v385, %v401
    %vm403 = vcmp.eq.f32.partialorder %v385, inf
    %v404 = vsel %vm403, %v385, %v402
    %vm405 = vcmp.eq.f32.partialorder %v385, 0.0
    %v406 = vand.u32 %v385, 2147483648
    %v407 = vsel %vm405, %v406, %v404
    %v408 = vadd.f32 %v400, 1e-06
    %v409 = vadd.f32 %v407, 1e-06
    %v410 = vrcp.pop %v408
    %v411 = vmul.f32 %v392, %v410
    %v412 = vrcp.pop %v409
    %v413 = vmul.f32 %v393, %v412
    %v415 = vlaneseq
    %v416 = vshrl.u32 %v415, 7
    %v417 = vsub.s32 0, %v416
    %v418 = vrot.slane %v365, %v417
    %v420 = vadd.f32 %v411, %v418
    %v421 = vadd.f32 %v413, %v418
    %422 = vst.msk [vmem:[#allocation17] sm:$0xff] %vm162, %v420
    %423 = vst.msk [vmem:[#allocation17 + $0x8] sm:$0xff] %vm162, %v421
    // Predicated region
    $region74: #{_decoder_forward_jit.11} parent=1 // pred_check
      _
    $region75: #{_decoder_forward_jit.11} parent=1 // pred_check_branch
      %425 = sbr.rel (0) target = $region77
    $region76: #{_decoder_forward_jit.11} parent=1 // pred_region
      %s427 = ssub.s32 256, 256
      %428 = vsyncadd [#allocation4], %s427
      %s429 = sshll.u32 [#allocation17], 4
      %s430 = int_to_ptr.vmem [resolvable:$true] %s429
      %435 = dma.vmem_to_hbm [thread:$0]  %s430, 256, %s9, [#allocation4], 128, 128, 8
    $region77: #{_decoder_forward_jit.11} parent=1 // pred_fallthru
      _
    // Predicated region
    $region78: #{_decoder_forward_jit.11} parent=1 // pred_check
      _
    $region79: #{_decoder_forward_jit.11} parent=1 // pred_check_branch
      %437 = sbr.rel (0) target = $region81
    $region80: #{_decoder_forward_jit.11} parent=1 // pred_region
      %438 = dma.done [#allocation4], 256
    $region81: #{_decoder_forward_jit.11} parent=1 // pred_fallthru
      _
    %439 = vsyncpa [#allocation3], 1
    %440 = vsyncpa [#allocation6], 1
    %441 = vsyncpa [#allocation9], 1
    %442 = vsyncpa [#allocation12], 1
    %443 = vsyncpa [#allocation15], 1
    %444 = vsyncpa [#allocation4], 1

// kernel: _decoder_forward_jit.6
$region0: #{_decoder_forward_jit.6}
  #allocation0 [shape = 'u32[]', space=smem, size = 0x4, offset = 0x4, fixed_abs, tag = 'smem constant byte address 0x4 - core index']
  #allocation1 [shape = 'u32[144,128]{1,0:T(1,128)}', space=vmem, size = 0x12000, scoped, tag = 'internal scratch']
  %s0 = inlined_call_operand.hbm [shape: f32[2,8,32], index: 0, kind: input, shape index: {}, may-alias: {0,1}]
  %s1 = inlined_call_operand.hbm [shape: f32[2,8,32], index: 1, kind: input, shape index: {}, may-alias: {0,1}]
  %s2 = inlined_call_operand.hbm [shape: bf16[2,8,8], index: 2, kind: input, shape index: {}]
  %s3 = inlined_call_operand.hbm [shape: f32[1,32], index: 3, kind: input, shape index: {}]
  %s4 = inlined_call_operand.hbm [shape: f32[1,32], index: 4, kind: input, shape index: {}]
  %s5 = inlined_call_operand.hbm [shape: bf16[32,32], index: 5, kind: input, shape index: {}]
  %s6 = inlined_call_operand.hbm [shape: f32[1,32], index: 6, kind: input, shape index: {}]
  %s7 = inlined_call_operand.hbm [shape: bf16[32,64], index: 7, kind: input, shape index: {}]
  %s8 = inlined_call_operand.hbm [shape: f32[1,64], index: 8, kind: input, shape index: {}]
  %s9 = inlined_call_operand.hbm [shape: bf16[32,32], index: 9, kind: input, shape index: {}]
  %s10 = inlined_call_operand.hbm [shape: f32[1,32], index: 10, kind: input, shape index: {}]
  %s11 = inlined_call_operand.hbm [shape: f32[2,8,32], index: 11, kind: output, shape index: {}]
  %s12 = sld [smem:[#allocation0]]
  $region121: #{_decoder_forward_jit.6} parent=0
    _
  %s14 = ssub.s32 1, %s12
  %s15 = scalar_select 0, %s14, %s12
  $region1: #{_decoder_forward_jit.6} parent=0
    #allocation2 [shape = 'u8[8192]{0}', space=vmem, size = 0x2000, scoped, tag = 'input window, operand 0']
    #allocation3 [shape = 's32[2]{0}', space=sflag, size = 0x8, scoped, tag = 'scoped memory for _decoder_forward_jit.6']
    #allocation4 [shape = 's32[2]{0}', space=sflag, size = 0x8, scoped, tag = 'scoped memory for _decoder_forward_jit.6']
    #allocation5 [shape = 'u8[8192]{0}', space=vmem, size = 0x2000, scoped, tag = 'input window, operand 1']
    #allocation6 [shape = 's32[2]{0}', space=sflag, size = 0x8, scoped, tag = 'scoped memory for _decoder_forward_jit.6']
    #allocation7 [shape = 'u8[4096]{0}', space=vmem, size = 0x1000, scoped, tag = 'input window, operand 2']
    #allocation8 [shape = 'u8[512]{0}', space=vmem, size = 0x400, scoped, tag = 'input window, operand 3, single buffered']
    #allocation9 [shape = 's32[1]{0}', space=sflag, size = 0x4, scoped, tag = 'scoped memory for _decoder_forward_jit.6']
    #allocation10 [shape = 'u8[512]{0}', space=vmem, size = 0x400, scoped, tag = 'input window, operand 4, single buffered']
    #allocation11 [shape = 'u8[8192]{0}', space=vmem, size = 0x2000, scoped, tag = 'input window, operand 5, single buffered']
    #allocation12 [shape = 's32[1]{0}', space=sflag, size = 0x4, scoped, tag = 'scoped memory for _decoder_forward_jit.6']
    #allocation13 [shape = 'u8[512]{0}', space=vmem, size = 0x400, scoped, tag = 'input window, operand 6, single buffered']
    #allocation14 [shape = 'u8[8192]{0}', space=vmem, size = 0x2000, scoped, tag = 'input window, operand 7, single buffered']
    #allocation15 [shape = 's32[1]{0}', space=sflag, size = 0x4, scoped, tag = 'scoped memory for _decoder_forward_jit.6']
    #allocation16 [shape = 'u8[512]{0}', space=vmem, size = 0x400, scoped, tag = 'input window, operand 8, single buffered']
    #allocation17 [shape = 'u8[8192]{0}', space=vmem, size = 0x2000, scoped, tag = 'input window, operand 9, single buffered']
    #allocation18 [shape = 's32[1]{0}', space=sflag, size = 0x4, scoped, tag = 'scoped memory for _decoder_forward_jit.6']
    #allocation19 [shape = 'u8[512]{0}', space=vmem, size = 0x400, scoped, tag = 'input window, operand 10, single buffered']
    #allocation20 [shape = 'u8[8192]{0}', space=vmem, size = 0x2000, scoped, tag = 'output window, operand 0']
    %16 = vsyncpa [#allocation3], 0
    %s17 = scalar_lea.sflag [#allocation3], 1
    %18 = vsyncpa %s17, 0
    %19 = vsyncpa [#allocation6], 0
    %s20 = scalar_lea.sflag [#allocation6], 1
    %21 = vsyncpa %s20, 0
    %22 = vsyncpa [#allocation9], 0
    %23 = vsyncpa [#allocation12], 0
    %24 = vsyncpa [#allocation15], 0
    %25 = vsyncpa [#allocation18], 0
    %26 = vsyncpa [#allocation4], 0
    %s27 = scalar_lea.sflag [#allocation4], 1
    %28 = vsyncpa %s27, 0
    loop: start=0, step=1, limit=4
    $region2: #{_decoder_forward_jit.6} parent=1 // loop_pre_header
      _
    $region3: #{_decoder_forward_jit.6} parent=1 // loop_header
      %s30 = sphi 0, %s34
      %p31 = scmp.ge.s32.totalorder %s30, 4
      %s37 = sphi 0, %s49
      %s38 = sphi 0, %s45
      %s39 = sphi 0, %s37
      %s40 = sphi 0, %s38
      %s41 = sphi 0, %s39
      %s42 = sphi 0, %s40
      %s54 = sphi 0, %s56
      %s57 = sphi 0, %s54
      %s58 = sphi 0, %s57
      %s74 = sphi 0, %s58
      %s80 = sphi 0, %s82
      %s83 = sphi 0, %s80
      %s84 = sphi 0, %s83
      %s100 = sphi 0, %s84
      %s108 = sphi 0, %s110
      %s111 = sphi 0, %s108
      %s112 = sphi 0, %s111
      %s128 = sphi 0, %s112
      %s132 = sphi 0, %s132
      %s134 = sphi 0, %s132
      %s135 = sphi 0, %s134
      %s149 = sphi 0, %s135
      %s153 = sphi 0, %s153
      %s155 = sphi 0, %s153
      %s156 = sphi 0, %s155
      %s170 = sphi 0, %s156
      %s174 = sphi 0, %s174
      %s176 = sphi 0, %s174
      %s177 = sphi 0, %s176
      %s191 = sphi 0, %s177
      %s195 = sphi 0, %s195
      %s197 = sphi 0, %s195
      %s198 = sphi 0, %s197
      %s212 = sphi 0, %s198
      %s216 = sphi 0, %s216
      %s218 = sphi 0, %s216
      %s219 = sphi 0, %s218
      %s233 = sphi 0, %s219
      %s237 = sphi 0, %s237
      %s239 = sphi 0, %s237
      %s240 = sphi 0, %s239
      %s254 = sphi 0, %s240
      %s258 = sphi 0, %s258
      %s260 = sphi 0, %s258
      %s261 = sphi 0, %s260
      %s275 = sphi 0, %s261
      %s279 = sphi 0, %s279
      %s281 = sphi 0, %s279
      %s282 = sphi 0, %s281
      %s296 = sphi 0, %s282
      %s304 = sphi 0, %s306
      %s307 = sphi 0, %s304
      %s308 = sphi 0, %s307
      %s324 = sphi 0, %s308
    $region4: #{_decoder_forward_jit.6} parent=1 // loop_header_branch
      %33 = sbr.rel (%p31) target = $region8
    $region5: #{_decoder_forward_jit.6} parent=1 // loop_body
      %s35 = ssub.s32 %s30, 1
      %s36 = ssub.s32 %s30, 2
      %s43 = sadd.s32 1, %s38
      %p44 = scmp.ge.s32.totalorder %s43, 1
      %s45 = scalar_select %p44, 0, %s43
      %s46 = sadd.s32 1, %s37
      %s47 = scalar_select %p44, %s46, %s37
      %p48 = scmp.ge.s32.totalorder %s47, 2
      %s49 = scalar_select %p48, 0, %s47
      %s50 = ssub.s32 %s37, %s49
      %s51 = ssub.s32 %s38, %s45
      %s52 = sor.u32 %s50, %s51
      %p53 = scmp.eq.s32.totalorder %s52, 0
      %s55 = sadd.s32 %s54, 1
      %s56 = scalar_select %p53, %s54, %s55
      %p59 = pneg %p53
      %p60 = scmp.eq.s32.totalorder %s30, 1
      %p61 = por %p59, %p60
      %p62 = scmp.ne.s32.totalorder %s54, %s57
      %p63 = scmp.eq.s32.totalorder %s30, 0
      %p64 = por %p62, %p63
      %p65 = scmp.ne.s32.totalorder %s54, %s57
      %p66 = scmp.eq.s32.totalorder %s35, 1
      %p67 = por %p65, %p66
      %p68 = scmp.ne.s32.totalorder %s57, %s58
      %p69 = scmp.eq.s32.totalorder %s35, 0
      %p70 = por %p68, %p69
      %p71 = scmp.ne.s32.totalorder %s57, %s58
      %p72 = scmp.eq.s32.totalorder %s36, 1
      %p73 = por %p71, %p72
      %p75 = scmp.ne.s32.totalorder %s58, %s74
      %p76 = scmp.eq.s32.totalorder %s36, 0
      %p77 = por %p75, %p76
      %s78 = ssub.s32 %s37, %s49
      %p79 = scmp.eq.s32.totalorder %s78, 0
      %s81 = sadd.s32 %s80, 1
      %s82 = scalar_select %p79, %s80, %s81
      %p85 = pneg %p79
      %p86 = scmp.eq.s32.totalorder %s30, 1
      %p87 = por %p85, %p86
      %p88 = scmp.ne.s32.totalorder %s80, %s83
      %p89 = scmp.eq.s32.totalorder %s30, 0
      %p90 = por %p88, %p89
      %p91 = scmp.ne.s32.totalorder %s80, %s83
      %p92 = scmp.eq.s32.totalorder %s35, 1
      %p93 = por %p91, %p92
      %p94 = scmp.ne.s32.totalorder %s83, %s84
      %p95 = scmp.eq.s32.totalorder %s35, 0
      %p96 = por %p94, %p95
      %p97 = scmp.ne.s32.totalorder %s83, %s84
      %p98 = scmp.eq.s32.totalorder %s36, 1
      %p99 = por %p97, %p98
      %p101 = scmp.ne.s32.totalorder %s84, %s100
      %p102 = scmp.eq.s32.totalorder %s36, 0
      %p103 = por %p101, %p102
      %s104 = ssub.s32 %s37, %s49
      %s105 = ssub.s32 %s38, %s45
      %s106 = sor.u32 %s104, %s105
      %p107 = scmp.eq.s32.totalorder %s106, 0
      %s109 = sadd.s32 %s108, 1
      %s110 = scalar_select %p107, %s108, %s109
      %p113 = pneg %p107
      %p114 = scmp.eq.s32.totalorder %s30, 1
      %p115 = por %p113, %p114
      %p116 = scmp.ne.s32.totalorder %s108, %s111
      %p117 = scmp.eq.s32.totalorder %s30, 0
      %p118 = por %p116, %p117
      %p119 = scmp.ne.s32.totalorder %s108, %s111
      %p120 = scmp.eq.s32.totalorder %s35, 1
      %p121 = por %p119, %p120
      %p122 = scmp.ne.s32.totalorder %s111, %s112
      %p123 = scmp.eq.s32.totalorder %s35, 0
      %p124 = por %p122, %p123
      %p125 = scmp.ne.s32.totalorder %s111, %s112
      %p126 = scmp.eq.s32.totalorder %s36, 1
      %p127 = por %p125, %p126
      %p129 = scmp.ne.s32.totalorder %s112, %s128
      %p130 = scmp.eq.s32.totalorder %s36, 0
      %p131 = por %p129, %p130
      %s133 = sadd.s32 %s132, 1
      %p136 = scmp.eq.s32.totalorder %s30, 1
      %p137 = scmp.ne.s32.totalorder %s132, %s134
      %p138 = scmp.eq.s32.totalorder %s30, 0
      %p139 = por %p137, %p138
      %p140 = scmp.ne.s32.totalorder %s132, %s134
      %p141 = scmp.eq.s32.totalorder %s35, 1
      %p142 = por %p140, %p141
      %p143 = scmp.ne.s32.totalorder %s134, %s135
      %p144 = scmp.eq.s32.totalorder %s35, 0
      %p145 = por %p143, %p144
      %p146 = scmp.ne.s32.totalorder %s134, %s135
      %p147 = scmp.eq.s32.totalorder %s36, 1
      %p148 = por %p146, %p147
      %p150 = scmp.ne.s32.totalorder %s135, %s149
      %p151 = scmp.eq.s32.totalorder %s36, 0
      %p152 = por %p150, %p151
      %s154 = sadd.s32 %s153, 1
      %p157 = scmp.eq.s32.totalorder %s30, 1
      %p158 = scmp.ne.s32.totalorder %s153, %s155
      %p159 = scmp.eq.s32.totalorder %s30, 0
      %p160 = por %p158, %p159
      %p161 = scmp.ne.s32.totalorder %s153, %s155
      %p162 = scmp.eq.s32.totalorder %s35, 1
      %p163 = por %p161, %p162
      %p164 = scmp.ne.s32.totalorder %s155, %s156
      %p165 = scmp.eq.s32.totalorder %s35, 0
      %p166 = por %p164, %p165
      %p167 = scmp.ne.s32.totalorder %s155, %s156
      %p168 = scmp.eq.s32.totalorder %s36, 1
      %p169 = por %p167, %p168
      %p171 = scmp.ne.s32.totalorder %s156, %s170
      %p172 = scmp.eq.s32.totalorder %s36, 0
      %p173 = por %p171, %p172
      %s175 = sadd.s32 %s174, 1
      %p178 = scmp.eq.s32.totalorder %s30, 1
      %p179 = scmp.ne.s32.totalorder %s174, %s176
      %p180 = scmp.eq.s32.totalorder %s30, 0
      %p181 = por %p179, %p180
      %p182 = scmp.ne.s32.totalorder %s174, %s176
      %p183 = scmp.eq.s32.totalorder %s35, 1
      %p184 = por %p182, %p183
      %p185 = scmp.ne.s32.totalorder %s176, %s177
      %p186 = scmp.eq.s32.totalorder %s35, 0
      %p187 = por %p185, %p186
      %p188 = scmp.ne.s32.totalorder %s176, %s177
      %p189 = scmp.eq.s32.totalorder %s36, 1
      %p190 = por %p188, %p189
      %p192 = scmp.ne.s32.totalorder %s177, %s191
      %p193 = scmp.eq.s32.totalorder %s36, 0
      %p194 = por %p192, %p193
      %s196 = sadd.s32 %s195, 1
      %p199 = scmp.eq.s32.totalorder %s30, 1
      %p200 = scmp.ne.s32.totalorder %s195, %s197
      %p201 = scmp.eq.s32.totalorder %s30, 0
      %p202 = por %p200, %p201
      %p203 = scmp.ne.s32.totalorder %s195, %s197
      %p204 = scmp.eq.s32.totalorder %s35, 1
      %p205 = por %p203, %p204
      %p206 = scmp.ne.s32.totalorder %s197, %s198
      %p207 = scmp.eq.s32.totalorder %s35, 0
      %p208 = por %p206, %p207
      %p209 = scmp.ne.s32.totalorder %s197, %s198
      %p210 = scmp.eq.s32.totalorder %s36, 1
      %p211 = por %p209, %p210
      %p213 = scmp.ne.s32.totalorder %s198, %s212
      %p214 = scmp.eq.s32.totalorder %s36, 0
      %p215 = por %p213, %p214
      %s217 = sadd.s32 %s216, 1
      %p220 = scmp.eq.s32.totalorder %s30, 1
      %p221 = scmp.ne.s32.totalorder %s216, %s218
      %p222 = scmp.eq.s32.totalorder %s30, 0
      %p223 = por %p221, %p222
      %p224 = scmp.ne.s32.totalorder %s216, %s218
      %p225 = scmp.eq.s32.totalorder %s35, 1
      %p226 = por %p224, %p225
      %p227 = scmp.ne.s32.totalorder %s218, %s219
      %p228 = scmp.eq.s32.totalorder %s35, 0
      %p229 = por %p227, %p228
      %p230 = scmp.ne.s32.totalorder %s218, %s219
      %p231 = scmp.eq.s32.totalorder %s36, 1
      %p232 = por %p230, %p231
      %p234 = scmp.ne.s32.totalorder %s219, %s233
      %p235 = scmp.eq.s32.totalorder %s36, 0
      %p236 = por %p234, %p235
      %s238 = sadd.s32 %s237, 1
      %p241 = scmp.eq.s32.totalorder %s30, 1
      %p242 = scmp.ne.s32.totalorder %s237, %s239
      %p243 = scmp.eq.s32.totalorder %s30, 0
      %p244 = por %p242, %p243
      %p245 = scmp.ne.s32.totalorder %s237, %s239
      %p246 = scmp.eq.s32.totalorder %s35, 1
      %p247 = por %p245, %p246
      %p248 = scmp.ne.s32.totalorder %s239, %s240
      %p249 = scmp.eq.s32.totalorder %s35, 0
      %p250 = por %p248, %p249
      %p251 = scmp.ne.s32.totalorder %s239, %s240
      %p252 = scmp.eq.s32.totalorder %s36, 1
      %p253 = por %p251, %p252
      %p255 = scmp.ne.s32.totalorder %s240, %s254
      %p256 = scmp.eq.s32.totalorder %s36, 0
      %p257 = por %p255, %p256
      %s259 = sadd.s32 %s258, 1
      %p262 = scmp.eq.s32.totalorder %s30, 1
      %p263 = scmp.ne.s32.totalorder %s258, %s260
      %p264 = scmp.eq.s32.totalorder %s30, 0
      %p265 = por %p263, %p264
      %p266 = scmp.ne.s32.totalorder %s258, %s260
      %p267 = scmp.eq.s32.totalorder %s35, 1
      %p268 = por %p266, %p267
      %p269 = scmp.ne.s32.totalorder %s260, %s261
      %p270 = scmp.eq.s32.totalorder %s35, 0
      %p271 = por %p269, %p270
      %p272 = scmp.ne.s32.totalorder %s260, %s261
      %p273 = scmp.eq.s32.totalorder %s36, 1
      %p274 = por %p272, %p273
      %p276 = scmp.ne.s32.totalorder %s261, %s275
      %p277 = scmp.eq.s32.totalorder %s36, 0
      %p278 = por %p276, %p277
      %s280 = sadd.s32 %s279, 1
      %p283 = scmp.eq.s32.totalorder %s30, 1
      %p284 = scmp.ne.s32.totalorder %s279, %s281
      %p285 = scmp.eq.s32.totalorder %s30, 0
      %p286 = por %p284, %p285
      %p287 = scmp.ne.s32.totalorder %s279, %s281
      %p288 = scmp.eq.s32.totalorder %s35, 1
      %p289 = por %p287, %p288
      %p290 = scmp.ne.s32.totalorder %s281, %s282
      %p291 = scmp.eq.s32.totalorder %s35, 0
      %p292 = por %p290, %p291
      %p293 = scmp.ne.s32.totalorder %s281, %s282
      %p294 = scmp.eq.s32.totalorder %s36, 1
      %p295 = por %p293, %p294
      %p297 = scmp.ne.s32.totalorder %s282, %s296
      %p298 = scmp.eq.s32.totalorder %s36, 0
      %p299 = por %p297, %p298
      %s300 = ssub.s32 %s37, %s49
      %s301 = ssub.s32 %s38, %s45
      %s302 = sor.u32 %s300, %s301
      %p303 = scmp.eq.s32.totalorder %s302, 0
      %s305 = sadd.s32 %s304, 1
      %s306 = scalar_select %p303, %s304, %s305
      %p309 = pneg %p303
      %p310 = scmp.eq.s32.totalorder %s30, 1
      %p311 = por %p309, %p310
      %p312 = scmp.ne.s32.totalorder %s304, %s307
      %p313 = scmp.eq.s32.totalorder %s30, 0
      %p314 = por %p312, %p313
      %p315 = scmp.ne.s32.totalorder %s304, %s307
      %p316 = scmp.eq.s32.totalorder %s35, 1
      %p317 = por %p315, %p316
      %p318 = scmp.ne.s32.totalorder %s307, %s308
      %p319 = scmp.eq.s32.totalorder %s35, 0
      %p320 = por %p318, %p319
      %p321 = scmp.ne.s32.totalorder %s307, %s308
      %p322 = scmp.eq.s32.totalorder %s36, 1
      %p323 = por %p321, %p322
      %p325 = scmp.ne.s32.totalorder %s308, %s324
      %p326 = scmp.eq.s32.totalorder %s36, 0
      %p327 = por %p325, %p326
      %p328 = scmp.le.s32.totalorder 1, %s30
      %p329 = scmp.lt.s32.totalorder %s30, 3
      %p330 = pnand %p328, %p329
      %p331 = pneg %p330
      // Predicated region
      $region9: #{_decoder_forward_jit.6} parent=5 // pred_check
        _
      $region10: #{_decoder_forward_jit.6} parent=5 // pred_check_branch
        %333 = sbr.rel (%p330) target = $region12
      $region11: #{_decoder_forward_jit.6} parent=5 // pred_region
        %s334 = ssub.s32 %s30, 1
        // Predicated region
        $region13: #{_decoder_forward_jit.6} parent=11 // pred_check
          %p335 = pneg %p145
        $region14: #{_decoder_forward_jit.6} parent=11 // pred_check_branch
          %337 = sbr.rel (%p335) target = $region16
        $region15: #{_decoder_forward_jit.6} parent=11 // pred_region
          %s339 = ssub.s32 16, 16
          %340 = vsyncadd [#allocation9], %s339
          %s342 = sshll.u32 [#allocation8], 4
          %s343 = int_to_ptr.vmem [resolvable:$true] %s342
          %345 = dma.hbm_to_vmem [thread:$0]  %s3, 16, %s343, [#allocation9]
        $region16: #{_decoder_forward_jit.6} parent=11 // pred_fallthru
          _
        // Predicated region
        $region17: #{_decoder_forward_jit.6} parent=11 // pred_check
          %p346 = pneg %p166
        $region18: #{_decoder_forward_jit.6} parent=11 // pred_check_branch
          %348 = sbr.rel (%p346) target = $region20
        $region19: #{_decoder_forward_jit.6} parent=11 // pred_region
          %s350 = ssub.s32 16, 16
          %351 = vsyncadd [#allocation9], %s350
          %s353 = sshll.u32 [#allocation10], 4
          %s354 = int_to_ptr.vmem [resolvable:$true] %s353
          %356 = dma.hbm_to_vmem [thread:$0]  %s4, 16, %s354, [#allocation9]
        $region20: #{_decoder_forward_jit.6} parent=11 // pred_fallthru
          _
        // Predicated region
        $region21: #{_decoder_forward_jit.6} parent=11 // pred_check
          %p357 = pneg %p187
        $region22: #{_decoder_forward_jit.6} parent=11 // pred_check_branch
          %359 = sbr.rel (%p357) target = $region24
        $region23: #{_decoder_forward_jit.6} parent=11 // pred_region
          %s361 = ssub.s32 256, 256
          %362 = vsyncadd [#allocation12], %s361
          %s363 = sshll.u32 [#allocation11], 4
          %s364 = int_to_ptr.vmem [resolvable:$true] %s363
          %369 = dma.hbm_to_vmem [thread:$0]  %s5, 256, %s364, [#allocation12], 64, 64, 4
        $region24: #{_decoder_forward_jit.6} parent=11 // pred_fallthru
          _
        // Predicated region
        $region25: #{_decoder_forward_jit.6} parent=11 // pred_check
          %p370 = pneg %p208
        $region26: #{_decoder_forward_jit.6} parent=11 // pred_check_branch
          %372 = sbr.rel (%p370) target = $region28
        $region27: #{_decoder_forward_jit.6} parent=11 // pred_region
          %s374 = ssub.s32 16, 16
          %375 = vsyncadd [#allocation12], %s374
          %s377 = sshll.u32 [#allocation13], 4
          %s378 = int_to_ptr.vmem [resolvable:$true] %s377
          %380 = dma.hbm_to_vmem [thread:$0]  %s6, 16, %s378, [#allocation12]
        $region28: #{_decoder_forward_jit.6} parent=11 // pred_fallthru
          _
        // Predicated region
        $region29: #{_decoder_forward_jit.6} parent=11 // pred_check
          %p381 = pneg %p229
        $region30: #{_decoder_forward_jit.6} parent=11 // pred_check_branch
          %383 = sbr.rel (%p381) target = $region32
        $region31: #{_decoder_forward_jit.6} parent=11 // pred_region
          %s385 = ssub.s32 256, 256
          %386 = vsyncadd [#allocation15], %s385
          %s387 = sshll.u32 [#allocation14], 4
          %s388 = int_to_ptr.vmem [resolvable:$true] %s387
          %393 = dma.hbm_to_vmem [thread:$0]  %s7, 256, %s388, [#allocation15], 64, 64, 4
        $region32: #{_decoder_forward_jit.6} parent=11 // pred_fallthru
          _
        // Predicated region
        $region33: #{_decoder_forward_jit.6} parent=11 // pred_check
          %p394 = pneg %p250
        $region34: #{_decoder_forward_jit.6} parent=11 // pred_check_branch
          %396 = sbr.rel (%p394) target = $region36
        $region35: #{_decoder_forward_jit.6} parent=11 // pred_region
          %s398 = ssub.s32 16, 16
          %399 = vsyncadd [#allocation15], %s398
          %s401 = sshll.u32 [#allocation16], 4
          %s402 = int_to_ptr.vmem [resolvable:$true] %s401
          %404 = dma.hbm_to_vmem [thread:$0]  %s8, 16, %s402, [#allocation15]
        $region36: #{_decoder_forward_jit.6} parent=11 // pred_fallthru
          _
        // Predicated region
        $region37: #{_decoder_forward_jit.6} parent=11 // pred_check
          %p405 = pneg %p271
        $region38: #{_decoder_forward_jit.6} parent=11 // pred_check_branch
          %407 = sbr.rel (%p405) target = $region40
        $region39: #{_decoder_forward_jit.6} parent=11 // pred_region
          %s409 = ssub.s32 256, 256
          %410 = vsyncadd [#allocation18], %s409
          %s411 = sshll.u32 [#allocation17], 4
          %s412 = int_to_ptr.vmem [resolvable:$true] %s411
          %417 = dma.hbm_to_vmem [thread:$0]  %s9, 256, %s412, [#allocation18], 64, 64, 4
        $region40: #{_decoder_forward_jit.6} parent=11 // pred_fallthru
          _
        // Predicated region
        $region41: #{_decoder_forward_jit.6} parent=11 // pred_check
          %p418 = pneg %p292
        $region42: #{_decoder_forward_jit.6} parent=11 // pred_check_branch
          %420 = sbr.rel (%p418) target = $region44
        $region43: #{_decoder_forward_jit.6} parent=11 // pred_region
          %s422 = ssub.s32 16, 16
          %423 = vsyncadd [#allocation18], %s422
          %s425 = sshll.u32 [#allocation19], 4
          %s426 = int_to_ptr.vmem [resolvable:$true] %s425
          %428 = dma.hbm_to_vmem [thread:$0]  %s10, 16, %s426, [#allocation18]
        $region44: #{_decoder_forward_jit.6} parent=11 // pred_fallthru
          _
      $region12: #{_decoder_forward_jit.6} parent=5 // pred_fallthru
        _
      %p429 = scmp.lt.s32.totalorder %s30, 2
      // Predicated region
      $region45: #{_decoder_forward_jit.6} parent=5 // pred_check
        %p430 = pneg %p429
      $region46: #{_decoder_forward_jit.6} parent=5 // pred_check_branch
        %432 = sbr.rel (%p430) target = $region48
      $region47: #{_decoder_forward_jit.6} parent=5 // pred_region
        // Predicated region
        $region49: #{_decoder_forward_jit.6} parent=47 // pred_check
          %p433 = pneg %p64
        $region50: #{_decoder_forward_jit.6} parent=47 // pred_check_branch
          %435 = sbr.rel (%p433) target = $region52
        $region51: #{_decoder_forward_jit.6} parent=47 // pred_region
          %s436 = sand.u32 %s54, 1
          %s437 = scalar_lea.sflag [#allocation3], %s436
          %s438 = sand.u32 %s54, 1
          %s439 = smul.addr %s438, 8
          %s440 = scalar_lea.vmem [#allocation2], %s439
          %s442 = ssub.s32 128, 128
          %443 = vsyncadd %s437, %s442
          %s444 = sadd.s32 %s38, %s37
          %s445 = smul.addr %s444, 128
          %s446 = scalar_lea.hbm %s0, %s445
          %s448 = sshll.u32 %s440, 4
          %s449 = int_to_ptr.vmem [resolvable:$true] %s448
          %451 = dma.hbm_to_vmem [thread:$0]  %s446, 128, %s449, %s437
        $region52: #{_decoder_forward_jit.6} parent=47 // pred_fallthru
          _
        // Predicated region
        $region53: #{_decoder_forward_jit.6} parent=47 // pred_check
          %p452 = pneg %p90
        $region54: #{_decoder_forward_jit.6} parent=47 // pred_check_branch
          %454 = sbr.rel (%p452) target = $region56
        $region55: #{_decoder_forward_jit.6} parent=47 // pred_region
          %s455 = sand.u32 %s30, 1
          %s456 = scalar_lea.sflag [#allocation6], %s455
          %s457 = sand.u32 %s80, 1
          %s458 = smul.addr %s457, 8
          %s459 = scalar_lea.vmem [#allocation5], %s458
          %s461 = ssub.s32 128, 128
          %462 = vsyncadd %s456, %s461
          %s463 = smul.addr %s37, 128
          %s464 = scalar_lea.hbm %s1, %s463
          %s466 = sshll.u32 %s459, 4
          %s467 = int_to_ptr.vmem [resolvable:$true] %s466
          %469 = dma.hbm_to_vmem [thread:$0]  %s464, 128, %s467, %s456
        $region56: #{_decoder_forward_jit.6} parent=47 // pred_fallthru
          _
        // Predicated region
        $region57: #{_decoder_forward_jit.6} parent=47 // pred_check
          %p470 = pneg %p118
        $region58: #{_decoder_forward_jit.6} parent=47 // pred_check_branch
          %472 = sbr.rel (%p470) target = $region60
        $region59: #{_decoder_forward_jit.6} parent=47 // pred_region
          %s473 = sand.u32 %s30, 1
          %s474 = scalar_lea.sflag [#allocation6], %s473
          %s475 = sand.u32 %s108, 1
          %s476 = smul.addr %s475, 4
          %s477 = scalar_lea.vmem [#allocation7], %s476
          %s479 = ssub.s32 64, 64
          %480 = vsyncadd %s474, %s479
          %s481 = sadd.s32 %s38, %s37
          %s482 = smul.addr %s481, 64
          %s483 = scalar_lea.hbm %s2, %s482
          %s485 = sshll.u32 %s477, 4
          %s486 = int_to_ptr.vmem [resolvable:$true] %s485
          %488 = dma.hbm_to_vmem [thread:$0]  %s483, 64, %s486, %s474
        $region60: #{_decoder_forward_jit.6} parent=47 // pred_fallthru
          _
      $region48: #{_decoder_forward_jit.6} parent=5 // pred_fallthru
        _
      %p489 = scmp.le.s32.totalorder 1, %s30
      %p490 = scmp.lt.s32.totalorder %s30, 3
      %p491 = pnand %p489, %p490
      %p492 = pneg %p491
      // Predicated region
      $region61: #{_decoder_forward_jit.6} parent=5 // pred_check
        _
      $region62: #{_decoder_forward_jit.6} parent=5 // pred_check_branch
        %494 = sbr.rel (%p491) target = $region64
      $region63: #{_decoder_forward_jit.6} parent=5 // pred_region
        %s495 = ssub.s32 %s30, 1
        %s496 = sand.u32 %s57, 1
        %s497 = scalar_lea.sflag [#allocation3], %s496
        %s498 = sand.u32 %s57, 1
        %s499 = smul.addr %s498, 8
        %s500 = scalar_lea.vmem [#allocation2], %s499
        // Predicated region
        $region65: #{_decoder_forward_jit.6} parent=63 // pred_check
          %p501 = pneg %p70
        $region66: #{_decoder_forward_jit.6} parent=63 // pred_check_branch
          %503 = sbr.rel (%p501) target = $region68
        $region67: #{_decoder_forward_jit.6} parent=63 // pred_region
          %504 = dma.done %s497, 128
        $region68: #{_decoder_forward_jit.6} parent=63 // pred_fallthru
          _
        %s505 = sand.u32 %s35, 1
        %s506 = scalar_lea.sflag [#allocation6], %s505
        %s507 = sand.u32 %s83, 1
        %s508 = smul.addr %s507, 8
        %s509 = scalar_lea.vmem [#allocation5], %s508
        // Predicated region
        $region69: #{_decoder_forward_jit.6} parent=63 // pred_check
          %p510 = pneg %p96
        $region70: #{_decoder_forward_jit.6} parent=63 // pred_check_branch
          %512 = sbr.rel (%p510) target = $region72
        $region71: #{_decoder_forward_jit.6} parent=63 // pred_region
          %513 = dma.done %s506, 128
        $region72: #{_decoder_forward_jit.6} parent=63 // pred_fallthru
          _
        %s514 = sand.u32 %s35, 1
        %s515 = scalar_lea.sflag [#allocation6], %s514
        %s516 = sand.u32 %s111, 1
        %s517 = smul.addr %s516, 4
        %s518 = scalar_lea.vmem [#allocation7], %s517
        // Predicated region
        $region73: #{_decoder_forward_jit.6} parent=63 // pred_check
          %p519 = pneg %p124
        $region74: #{_decoder_forward_jit.6} parent=63 // pred_check_branch
          %521 = sbr.rel (%p519) target = $region76
        $region75: #{_decoder_forward_jit.6} parent=63 // pred_region
          %522 = dma.done %s515, 64
        $region76: #{_decoder_forward_jit.6} parent=63 // pred_fallthru
          _
        // Predicated region
        $region77: #{_decoder_forward_jit.6} parent=63 // pred_check
          %p523 = pneg %p145
        $region78: #{_decoder_forward_jit.6} parent=63 // pred_check_branch
          %525 = sbr.rel (%p523) target = $region80
        $region79: #{_decoder_forward_jit.6} parent=63 // pred_region
          %526 = dma.done [#allocation9], 16
        $region80: #{_decoder_forward_jit.6} parent=63 // pred_fallthru
          _
        // Predicated region
        $region81: #{_decoder_forward_jit.6} parent=63 // pred_check
          %p527 = pneg %p166
        $region82: #{_decoder_forward_jit.6} parent=63 // pred_check_branch
          %529 = sbr.rel (%p527) target = $region84
        $region83: #{_decoder_forward_jit.6} parent=63 // pred_region
          %530 = dma.done [#allocation9], 16
        $region84: #{_decoder_forward_jit.6} parent=63 // pred_fallthru
          _
        // Predicated region
        $region85: #{_decoder_forward_jit.6} parent=63 // pred_check
          %p531 = pneg %p187
        $region86: #{_decoder_forward_jit.6} parent=63 // pred_check_branch
          %533 = sbr.rel (%p531) target = $region88
        $region87: #{_decoder_forward_jit.6} parent=63 // pred_region
          %534 = dma.done [#allocation12], 256
        $region88: #{_decoder_forward_jit.6} parent=63 // pred_fallthru
          _
        // Predicated region
        $region89: #{_decoder_forward_jit.6} parent=63 // pred_check
          %p535 = pneg %p208
        $region90: #{_decoder_forward_jit.6} parent=63 // pred_check_branch
          %537 = sbr.rel (%p535) target = $region92
        $region91: #{_decoder_forward_jit.6} parent=63 // pred_region
          %538 = dma.done [#allocation12], 16
        $region92: #{_decoder_forward_jit.6} parent=63 // pred_fallthru
          _
        // Predicated region
        $region93: #{_decoder_forward_jit.6} parent=63 // pred_check
          %p539 = pneg %p229
        $region94: #{_decoder_forward_jit.6} parent=63 // pred_check_branch
          %541 = sbr.rel (%p539) target = $region96
        $region95: #{_decoder_forward_jit.6} parent=63 // pred_region
          %542 = dma.done [#allocation15], 256
        $region96: #{_decoder_forward_jit.6} parent=63 // pred_fallthru
          _
        // Predicated region
        $region97: #{_decoder_forward_jit.6} parent=63 // pred_check
          %p543 = pneg %p250
        $region98: #{_decoder_forward_jit.6} parent=63 // pred_check_branch
          %545 = sbr.rel (%p543) target = $region100
        $region99: #{_decoder_forward_jit.6} parent=63 // pred_region
          %546 = dma.done [#allocation15], 16
        $region100: #{_decoder_forward_jit.6} parent=63 // pred_fallthru
          _
        // Predicated region
        $region101: #{_decoder_forward_jit.6} parent=63 // pred_check
          %p547 = pneg %p271
        $region102: #{_decoder_forward_jit.6} parent=63 // pred_check_branch
          %549 = sbr.rel (%p547) target = $region104
        $region103: #{_decoder_forward_jit.6} parent=63 // pred_region
          %550 = dma.done [#allocation18], 256
        $region104: #{_decoder_forward_jit.6} parent=63 // pred_fallthru
          _
        // Predicated region
        $region105: #{_decoder_forward_jit.6} parent=63 // pred_check
          %p551 = pneg %p292
        $region106: #{_decoder_forward_jit.6} parent=63 // pred_check_branch
          %553 = sbr.rel (%p551) target = $region108
        $region107: #{_decoder_forward_jit.6} parent=63 // pred_region
          %554 = dma.done [#allocation18], 16
        $region108: #{_decoder_forward_jit.6} parent=63 // pred_fallthru
          _
        %s555 = sand.u32 %s57, 1
        %s556 = scalar_lea.sflag [#allocation3], %s555
        %s557 = sand.u32 %s57, 1
        %s558 = smul.addr %s557, 8
        %s559 = scalar_lea.vmem [#allocation2], %s558
        %p560 = pneg %p70
        %p561 = pneg %p67
        %s562 = sand.u32 %s35, 1
        %s563 = scalar_lea.sflag [#allocation6], %s562
        %s564 = sand.u32 %s83, 1
        %s565 = smul.addr %s564, 8
        %s566 = scalar_lea.vmem [#allocation5], %s565
        %p567 = pneg %p96
        %p568 = pneg %p93
        %s569 = sand.u32 %s35, 1
        %s570 = scalar_lea.sflag [#allocation6], %s569
        %s571 = sand.u32 %s111, 1
        %s572 = smul.addr %s571, 4
        %s573 = scalar_lea.vmem [#allocation7], %s572
        %p574 = pneg %p124
        %p575 = pneg %p121
        %p576 = pneg %p145
        %p577 = pneg %p142
        %p578 = pneg %p166
        %p579 = pneg %p163
        %p580 = pneg %p187
        %p581 = pneg %p184
        %p582 = pneg %p208
        %p583 = pneg %p205
        %p584 = pneg %p229
        %p585 = pneg %p226
        %p586 = pneg %p250
        %p587 = pneg %p247
        %p588 = pneg %p271
        %p589 = pneg %p268
        %p590 = pneg %p292
        %p591 = pneg %p289
        %p592 = pneg %p320
        %p593 = pneg %p317
        %s594 = sand.u32 %s307, 1
        %s595 = scalar_lea.sflag [#allocation4], %s594
        %s596 = sand.u32 %s307, 1
        %s597 = smul.addr %s596, 8
        %s598 = scalar_lea.vmem [#allocation20], %s597
        %v600 = vld [vmem:[%s500] sm:$0xff]
        %v601 = vld [vmem:[%s509] sm:$0xff]
        %v602 = vld [vmem:[#allocation8] sm:$0x1]
        %v603 = vld [vmem:[#allocation10] sm:$0x1]
        %vm604 = vcmask 261120
        %v605 = vsel %vm604, %v600, 0.0
        %606 = vadd.xlane.f32.xlu0 %v605
        %v607 = vpop.xlane.xlu0 %606
        %v608 = vrcp.pop 32.0
        %v609 = vmul.f32 %v607, %v608
        %v610 = vsub.f32 %v600, %v609
        %v611 = vmul.f32 %v610, %v610
        %v612 = vsel %vm604, %v611, 0.0
        %613 = vadd.xlane.f32.xlu0 %v612
        %v614 = vpop.xlane.xlu0 %613
        %v615 = vrcp.pop 31.0
        %v616 = vmul.f32 %v614, %v615
        %v618 = vlaneseq
        %v619 = vshrl.u32 %v618, 7
        %v620 = vsub.s32 0, %v619
        %v621 = vrot.slane %v602, %v620
        %v623 = vmul.f32 %v621, %v610
        %v624 = vrsqrt.pop %v616
        %v625 = vmul.f32 %v616, %v624
        %vm626 = vcmp.eq.f32.partialorder %v616, inf
        %v627 = vsel %vm626, %v616, %v625
        %vm628 = vcmp.eq.f32.partialorder %v616, 0.0
        %v629 = vand.u32 %v616, 2147483648
        %v630 = vsel %vm628, %v629, %v627
        %v631 = vadd.f32 %v630, 1e-06
        %v632 = vrcp.pop %v631
        %v633 = vmul.f32 %v623, %v632
        %v635 = vlaneseq
        %v636 = vshrl.u32 %v635, 7
        %v637 = vsub.s32 0, %v636
        %v638 = vrot.slane %v603, %v637
        %v640 = vadd.f32 %v633, %v638
        %v641 = vsel %vm604, %v601, 0.0
        %642 = vadd.xlane.f32.xlu0 %v641
        %v643 = vpop.xlane.xlu0 %642
        %v644 = vmul.f32 %v643, %v608
        %v645 = vsub.f32 %v601, %v644
        %v646 = vmul.f32 %v645, %v645
        %v647 = vsel %vm604, %v646, 0.0
        %648 = vadd.xlane.f32.xlu0 %v647
        %v649 = vpop.xlane.xlu0 %648
        %v650 = vmul.f32 %v649, %v615
        %v651 = vmul.f32 %v621, %v645
        %v652 = vrsqrt.pop %v650
        %v653 = vmul.f32 %v650, %v652
        %vm654 = vcmp.eq.f32.partialorder %v650, inf
        %v655 = vsel %vm654, %v650, %v653
        %vm656 = vcmp.eq.f32.partialorder %v650, 0.0
        %v657 = vand.u32 %v650, 2147483648
        %v658 = vsel %vm656, %v657, %v655
        %v659 = vadd.f32 %v658, 1e-06
        %v660 = vrcp.pop %v659
        %v661 = vmul.f32 %v651, %v660
        %v662 = vadd.f32 %v661, %v638
        %v663 = vpack.c.bf16 %v640, %v640
        %v664 = vld [vmem:[#allocation11] sm:$0xf]
        %v665 = vld [vmem:[#allocation11 + $0x4] sm:$0xf]
        %v666 = vld [vmem:[#allocation11 + $0x8] sm:$0xf]
        %v667 = vld [vmem:[#allocation11 + $0xc] sm:$0xf]
        %v668 = vld [vmem:[#allocation13] sm:$0x1]
        %v670 = vlaneseq
        %v671 = vshrl.u32 %v670, 7
        %v672 = vsub.s32 0, %v671
        %v673 = vrot.slane %v668, %v672
        %v679 = vunpack.c.l.b16 %v664
        %v680 = vunpack.c.l.b16 %v665
        %v681 = vunpack.c.l.b16 %v666
        %v682 = vunpack.c.l.b16 %v667
        %v683 = vpack.c.b16 %v680, %v679
        %v684 = vpack.c.b16 %v682, %v681
        %v688 = vsel %vm604, %v663, 0
        %690 = vmatprep.subr.bf16.mxu0 0
        %691 = vmatpush1.bf16.msra.mxu0 %v683
        %692 = vmatprep.subr.bf16.mxu0 0
        %693 = vmatpush1.bf16.msra.mxu0 %v684
        %694 = vmatprep.subr.bf16.mxu0 0
        %695 = vmatpush1.bf16.msra.mxu0 0
        %696 = vmatprep.subr.bf16.mxu0 0
        %697 = vmatpush1.bf16.msra.mxu0 0
        %698 = vmatprep.subr.bf16.mxu0 0
        %699 = vmatpush1.bf16.msra.mxu0 0
        %700 = vmatprep.subr.bf16.mxu0 0
        %701 = vmatpush1.bf16.msra.mxu0 0
        %702 = vmatprep.subr.bf16.mxu0 0
        %703 = vmatpush1.bf16.msra.mxu0 0
        %704 = vmatprep.subr.bf16.mxu0 0
        %705 = vmatpush1.bf16.msra.mxu0 0
        %706 = vmatprep.subr.bf16.mxu0 0
        %707 = vmatpush1.bf16.msra.mxu0 0
        %708 = vmatprep.subr.bf16.mxu0 0
        %709 = vmatpush1.bf16.msra.mxu0 0
        %710 = vmatprep.subr.bf16.mxu0 0
        %711 = vmatpush1.bf16.msra.mxu0 0
        %712 = vmatprep.subr.bf16.mxu0 0
        %713 = vmatpush1.bf16.msra.mxu0 0
        %714 = vmatprep.subr.bf16.mxu0 0
        %715 = vmatpush1.bf16.msra.mxu0 0
        %716 = vmatprep.subr.bf16.mxu0 0
        %717 = vmatpush1.bf16.msra.mxu0 0
        %718 = vmatprep.subr.bf16.mxu0 0
        %719 = vmatpush1.bf16.msra.mxu0 0
        %720 = vmatprep.subr.bf16.mxu0 0
        %721 = vmatpush1.bf16.msra.mxu0 0
        %722 = vmatprep.mubr.bf16.mxu0 0
        %723 = vmatmul.mubr.bf16.gmra.mrb[0].mxu0 %v688
        %v724 = vpop.f32.mrb[0].mxu0
        %v725 = vadd.f32 %v673, %v724
        %v726 = vpop.f32.mrb[0].mxu0
        %v727 = vpop.f32.mrb[0].mxu0
        %v728 = vpop.f32.mrb[0].mxu0
        %729 = vdwg.mxu0
        %v730 = vmul.f32 %v725, 0.35355338
        %v731 = vpack.c.bf16 %v662, %v662
        %v732 = vld [vmem:[#allocation14] sm:$0xf]
        %v733 = vld [vmem:[#allocation14 + $0x4] sm:$0xf]
        %v734 = vld [vmem:[#allocation14 + $0x8] sm:$0xf]
        %v735 = vld [vmem:[#allocation14 + $0xc] sm:$0xf]
        %v736 = vld [vmem:[#allocation16] sm:$0x1]
        %v738 = vlaneseq
        %v739 = vshrl.u32 %v738, 7
        %v740 = vsub.s32 0, %v739
        %v741 = vrot.slane %v736, %v740
        %v747 = vunpack.c.l.b16 %v732
        %v748 = vunpack.c.l.b16 %v733
        %v749 = vunpack.c.l.b16 %v734
        %v750 = vunpack.c.l.b16 %v735
        %v751 = vpack.c.b16 %v748, %v747
        %v752 = vpack.c.b16 %v750, %v749
        %v756 = vsel %vm604, %v731, 0
        %758 = vmatprep.subr.bf16.mxu0 0
        %759 = vmatpush1.bf16.msra.mxu0 %v751
        %760 = vmatprep.subr.bf16.mxu0 0
        %761 = vmatpush1.bf16.msra.mxu0 %v752
        %762 = vmatprep.subr.bf16.mxu0 0
        %763 = vmatpush1.bf16.msra.mxu0 0
        %764 = vmatprep.subr.bf16.mxu0 0
        %765 = vmatpush1.bf16.msra.mxu0 0
        %766 = vmatprep.subr.bf16.mxu0 0
        %767 = vmatpush1.bf16.msra.mxu0 0
        %768 = vmatprep.subr.bf16.mxu0 0
        %769 = vmatpush1.bf16.msra.mxu0 0
        %770 = vmatprep.subr.bf16.mxu0 0
        %771 = vmatpush1.bf16.msra.mxu0 0
        %772 = vmatprep.subr.bf16.mxu0 0
        %773 = vmatpush1.bf16.msra.mxu0 0
        %774 = vmatprep.subr.bf16.mxu0 0
        %775 = vmatpush1.bf16.msra.mxu0 0
        %776 = vmatprep.subr.bf16.mxu0 0
        %777 = vmatpush1.bf16.msra.mxu0 0
        %778 = vmatprep.subr.bf16.mxu0 0
        %779 = vmatpush1.bf16.msra.mxu0 0
        %780 = vmatprep.subr.bf16.mxu0 0
        %781 = vmatpush1.bf16.msra.mxu0 0
        %782 = vmatprep.subr.bf16.mxu0 0
        %783 = vmatpush1.bf16.msra.mxu0 0
        %784 = vmatprep.subr.bf16.mxu0 0
        %785 = vmatpush1.bf16.msra.mxu0 0
        %786 = vmatprep.subr.bf16.mxu0 0
        %787 = vmatpush1.bf16.msra.mxu0 0
        %788 = vmatprep.subr.bf16.mxu0 0
        %789 = vmatpush1.bf16.msra.mxu0 0
        %790 = vmatprep.mubr.bf16.mxu0 0
        %791 = vmatmul.mubr.bf16.gmra.mrb[0].mxu0 %v756
        %v792 = vpop.f32.mrb[0].mxu0
        %v793 = vadd.f32 %v741, %v792
        %v794 = vpop.f32.mrb[0].mxu0
        %v795 = vpop.f32.mrb[0].mxu0
        %v796 = vpop.f32.mrb[0].mxu0
        %797 = vdwg.mxu0
        %v798 = vld [vmem:[%s518] sm:$0xf]
        %v799 = vunpack.c.l.bf16 %v798
        %v800 = vpack.c.bf16 %v730, %v730
        %v801 = vpack.c.bf16 %v793, %v793
        %vm802 = vcmask 64512
        %v804 = vsel %vm802, %v800, 0
        %v807 = vsel %vm802, %v801, 0
        %809 = vmatprep.subr.bf16.mxu0 0
        %810 = vmatpush1.bf16.xpose.msra.mxu0 %v807
        %811 = vmatprep.subr.bf16.mxu0 0
        %812 = vmatpush1.bf16.xpose.msra.mxu0 0
        %813 = vmatprep.subr.bf16.mxu0 0
        %814 = vmatpush1.bf16.xpose.msra.mxu0 0
        %815 = vmatprep.subr.bf16.mxu0 0
        %816 = vmatpush1.bf16.xpose.msra.mxu0 0
        %817 = vmatprep.subr.bf16.mxu0 0
        %818 = vmatpush1.bf16.xpose.msra.mxu0 0
        %819 = vmatprep.subr.bf16.mxu0 0
        %820 = vmatpush1.bf16.xpose.msra.mxu0 0
        %821 = vmatprep.subr.bf16.mxu0 0
        %822 = vmatpush1.bf16.xpose.msra.mxu0 0
        %823 = vmatprep.subr.bf16.mxu0 0
        %824 = vmatpush1.bf16.xpose.msra.mxu0 0
        %825 = vmatprep.subr.bf16.mxu0 0
        %826 = vmatpush1.bf16.xpose.msra.mxu0 0
        %827 = vmatprep.subr.bf16.mxu0 0
        %828 = vmatpush1.bf16.xpose.msra.mxu0 0
        %829 = vmatprep.subr.bf16.mxu0 0
        %830 = vmatpush1.bf16.xpose.msra.mxu0 0
        %831 = vmatprep.subr.bf16.mxu0 0
        %832 = vmatpush1.bf16.xpose.msra.mxu0 0
        %833 = vmatprep.subr.bf16.mxu0 0
        %834 = vmatpush1.bf16.xpose.msra.mxu0 0
        %835 = vmatprep.subr.bf16.mxu0 0
        %836 = vmatpush1.bf16.xpose.msra.mxu0 0
        %837 = vmatprep.subr.bf16.mxu0 0
        %838 = vmatpush1.bf16.xpose.msra.mxu0 0
        %839 = vmatprep.subr.bf16.mxu0 0
        %840 = vmatpush1.bf16.xpose.msra.mxu0 0
        %841 = vmatprep.mubr.bf16.mxu0 0
        %842 = vmatmul.mubr.bf16.gmra.mrb[0].mxu0 %v804
        %v843 = vpop.f32.mrb[0].mxu0
        %v844 = vadd.f32 %v799, %v843
        %v845 = vpop.f32.mrb[0].mxu0
        %v846 = vpop.f32.mrb[0].mxu0
        %v847 = vpop.f32.mrb[0].mxu0
        %848 = vdwg.mxu0
        %v849 = vsel %vm802, %v844, -inf
        %850 = vmax.xlane.f32.xlu0 %v849
        %v851 = vpop.xlane.xlu0 %850
        %v852 = vsub.f32 %v844, %v851
        %v853 = vmul.f32 %v852, 1.442695
        %v854 = vpow.pop %v853
        %v855 = vsel %vm802, %v854, 0.0
        %856 = vadd.xlane.f32.xlu0 %v855
        %v857 = vpop.xlane.xlu0 %856
        %v858 = vrcp.pop %v857
        %v859 = vmul.f32 %v854, %v858
        %v860 = vpack.c.bf16 %v859, %v859
        %862 = vrot.lane.b32.xlu0 %v801, 96
        %v863 = vpop.permute.xlu0 %862
        %v865 = vsel %vm802, %v860, 0
        %vm867 = vcmask 1043456
        %v869 = vsel %vm867, %v863, 0
        %871 = vmatprep.subr.bf16.mxu0 0
        %872 = vmatpush1.bf16.msra.mxu0 %v869
        %873 = vmatprep.subr.bf16.mxu0 0
        %874 = vmatpush1.bf16.msra.mxu0 0
        %875 = vmatprep.subr.bf16.mxu0 0
        %876 = vmatpush1.bf16.msra.mxu0 0
        %877 = vmatprep.subr.bf16.mxu0 0
        %878 = vmatpush1.bf16.msra.mxu0 0
        %879 = vmatprep.subr.bf16.mxu0 0
        %880 = vmatpush1.bf16.msra.mxu0 0
        %881 = vmatprep.subr.bf16.mxu0 0
        %882 = vmatpush1.bf16.msra.mxu0 0
        %883 = vmatprep.subr.bf16.mxu0 0
        %884 = vmatpush1.bf16.msra.mxu0 0
        %885 = vmatprep.subr.bf16.mxu0 0
        %886 = vmatpush1.bf16.msra.mxu0 0
        %887 = vmatprep.subr.bf16.mxu0 0
        %888 = vmatpush1.bf16.msra.mxu0 0
        %889 = vmatprep.subr.bf16.mxu0 0
        %890 = vmatpush1.bf16.msra.mxu0 0
        %891 = vmatprep.subr.bf16.mxu0 0
        %892 = vmatpush1.bf16.msra.mxu0 0
        %893 = vmatprep.subr.bf16.mxu0 0
        %894 = vmatpush1.bf16.msra.mxu0 0
        %895 = vmatprep.subr.bf16.mxu0 0
        %896 = vmatpush1.bf16.msra.mxu0 0
        %897 = vmatprep.subr.bf16.mxu0 0
        %898 = vmatpush1.bf16.msra.mxu0 0
        %899 = vmatprep.subr.bf16.mxu0 0
        %900 = vmatpush1.bf16.msra.mxu0 0
        %901 = vmatprep.subr.bf16.mxu0 0
        %902 = vmatpush1.bf16.msra.mxu0 0
        %903 = vmatprep.mubr.bf16.mxu0 0
        %904 = vmatmul.mubr.bf16.gmra.mrb[0].mxu0 %v865
        %v905 = vpop.f32.mrb[0].mxu0
        %v906 = vadd.f32 0.0, %v905
        %v907 = vpop.f32.mrb[0].mxu0
        %v908 = vpop.f32.mrb[0].mxu0
        %v909 = vpop.f32.mrb[0].mxu0
        %910 = vdwg.mxu0
        %912 = vrot.lane.b32.xlu0 %v800, 120
        %v913 = vpop.permute.xlu0 %912
        %914 = vrot.lane.b32.xlu0 %v801, 120
        %v915 = vpop.permute.xlu0 %914
        %v917 = vsel %vm802, %v913, 0
        %v920 = vsel %vm802, %v915, 0
        %922 = vmatprep.subr.bf16.mxu0 0
        %923 = vmatpush1.bf16.xpose.msra.mxu0 %v920
        %924 = vmatprep.subr.bf16.mxu0 0
        %925 = vmatpush1.bf16.xpose.msra.mxu0 0
        %926 = vmatprep.subr.bf16.mxu0 0
        %927 = vmatpush1.bf16.xpose.msra.mxu0 0
        %928 = vmatprep.subr.bf16.mxu0 0
        %929 = vmatpush1.bf16.xpose.msra.mxu0 0
        %930 = vmatprep.subr.bf16.mxu0 0
        %931 = vmatpush1.bf16.xpose.msra.mxu0 0
        %932 = vmatprep.subr.bf16.mxu0 0
        %933 = vmatpush1.bf16.xpose.msra.mxu0 0
        %934 = vmatprep.subr.bf16.mxu0 0
        %935 = vmatpush1.bf16.xpose.msra.mxu0 0
        %936 = vmatprep.subr.bf16.mxu0 0
        %937 = vmatpush1.bf16.xpose.msra.mxu0 0
        %938 = vmatprep.subr.bf16.mxu0 0
        %939 = vmatpush1.bf16.xpose.msra.mxu0 0
        %940 = vmatprep.subr.bf16.mxu0 0
        %941 = vmatpush1.bf16.xpose.msra.mxu0 0
        %942 = vmatprep.subr.bf16.mxu0 0
        %943 = vmatpush1.bf16.xpose.msra.mxu0 0
        %944 = vmatprep.subr.bf16.mxu0 0
        %945 = vmatpush1.bf16.xpose.msra.mxu0 0
        %946 = vmatprep.subr.bf16.mxu0 0
        %947 = vmatpush1.bf16.xpose.msra.mxu0 0
        %948 = vmatprep.subr.bf16.mxu0 0
        %949 = vmatpush1.bf16.xpose.msra.mxu0 0
        %950 = vmatprep.subr.bf16.mxu0 0
        %951 = vmatpush1.bf16.xpose.msra.mxu0 0
        %952 = vmatprep.subr.bf16.mxu0 0
        %953 = vmatpush1.bf16.xpose.msra.mxu0 0
        %954 = vmatprep.mubr.bf16.mxu0 0
        %955 = vmatmul.mubr.bf16.gmra.mrb[0].mxu0 %v917
        %v956 = vpop.f32.mrb[0].mxu0
        %v957 = vadd.f32 %v799, %v956
        %v958 = vpop.f32.mrb[0].mxu0
        %v959 = vpop.f32.mrb[0].mxu0
        %v960 = vpop.f32.mrb[0].mxu0
        %961 = vdwg.mxu0
        %v962 = vsel %vm802, %v957, -inf
        %963 = vmax.xlane.f32.xlu0 %v962
        %v964 = vpop.xlane.xlu0 %963
        %v965 = vsub.f32 %v957, %v964
        %v966 = vmul.f32 %v965, 1.442695
        %v967 = vpow.pop %v966
        %v968 = vsel %vm802, %v967, 0.0
        %969 = vadd.xlane.f32.xlu0 %v968
        %v970 = vpop.xlane.xlu0 %969
        %v971 = vrcp.pop %v970
        %v972 = vmul.f32 %v967, %v971
        %v973 = vpack.c.bf16 %v972, %v972
        %974 = vrot.lane.b32.xlu0 %v801, 88
        %v975 = vpop.permute.xlu0 %974
        %v977 = vsel %vm802, %v973, 0
        %v980 = vsel %vm867, %v975, 0
        %982 = vmatprep.subr.bf16.mxu0 0
        %983 = vmatpush1.bf16.msra.mxu0 %v980
        %984 = vmatprep.subr.bf16.mxu0 0
        %985 = vmatpush1.bf16.msra.mxu0 0
        %986 = vmatprep.subr.bf16.mxu0 0
        %987 = vmatpush1.bf16.msra.mxu0 0
        %988 = vmatprep.subr.bf16.mxu0 0
        %989 = vmatpush1.bf16.msra.mxu0 0
        %990 = vmatprep.subr.bf16.mxu0 0
        %991 = vmatpush1.bf16.msra.mxu0 0
        %992 = vmatprep.subr.bf16.mxu0 0
        %993 = vmatpush1.bf16.msra.mxu0 0
        %994 = vmatprep.subr.bf16.mxu0 0
        %995 = vmatpush1.bf16.msra.mxu0 0
        %996 = vmatprep.subr.bf16.mxu0 0
        %997 = vmatpush1.bf16.msra.mxu0 0
        %998 = vmatprep.subr.bf16.mxu0 0
        %999 = vmatpush1.bf16.msra.mxu0 0
        %1000 = vmatprep.subr.bf16.mxu0 0
        %1001 = vmatpush1.bf16.msra.mxu0 0
        %1002 = vmatprep.subr.bf16.mxu0 0
        %1003 = vmatpush1.bf16.msra.mxu0 0
        %1004 = vmatprep.subr.bf16.mxu0 0
        %1005 = vmatpush1.bf16.msra.mxu0 0
        %1006 = vmatprep.subr.bf16.mxu0 0
        %1007 = vmatpush1.bf16.msra.mxu0 0
        %1008 = vmatprep.subr.bf16.mxu0 0
        %1009 = vmatpush1.bf16.msra.mxu0 0
        %1010 = vmatprep.subr.bf16.mxu0 0
        %1011 = vmatpush1.bf16.msra.mxu0 0
        %1012 = vmatprep.subr.bf16.mxu0 0
        %1013 = vmatpush1.bf16.msra.mxu0 0
        %1014 = vmatprep.mubr.bf16.mxu0 0
        %1015 = vmatmul.mubr.bf16.gmra.mrb[0].mxu0 %v977
        %v1016 = vpop.f32.mrb[0].mxu0
        %v1017 = vadd.f32 0.0, %v1016
        %v1018 = vpop.f32.mrb[0].mxu0
        %v1019 = vpop.f32.mrb[0].mxu0
        %v1020 = vpop.f32.mrb[0].mxu0
        %1021 = vdwg.mxu0
        %1022 = vrot.lane.b32.xlu0 %v800, 112
        %v1023 = vpop.permute.xlu0 %1022
        %1024 = vrot.lane.b32.xlu0 %v801, 112
        %v1025 = vpop.permute.xlu0 %1024
        %v1027 = vsel %vm802, %v1023, 0
        %v1030 = vsel %vm802, %v1025, 0
        %1032 = vmatprep.subr.bf16.mxu0 0
        %1033 = vmatpush1.bf16.xpose.msra.mxu0 %v1030
        %1034 = vmatprep.subr.bf16.mxu0 0
        %1035 = vmatpush1.bf16.xpose.msra.mxu0 0
        %1036 = vmatprep.subr.bf16.mxu0 0
        %1037 = vmatpush1.bf16.xpose.msra.mxu0 0
        %1038 = vmatprep.subr.bf16.mxu0 0
        %1039 = vmatpush1.bf16.xpose.msra.mxu0 0
        %1040 = vmatprep.subr.bf16.mxu0 0
        %1041 = vmatpush1.bf16.xpose.msra.mxu0 0
        %1042 = vmatprep.subr.bf16.mxu0 0
        %1043 = vmatpush1.bf16.xpose.msra.mxu0 0
        %1044 = vmatprep.subr.bf16.mxu0 0
        %1045 = vmatpush1.bf16.xpose.msra.mxu0 0
        %1046 = vmatprep.subr.bf16.mxu0 0
        %1047 = vmatpush1.bf16.xpose.msra.mxu0 0
        %1048 = vmatprep.subr.bf16.mxu0 0
        %1049 = vmatpush1.bf16.xpose.msra.mxu0 0
        %1050 = vmatprep.subr.bf16.mxu0 0
        %1051 = vmatpush1.bf16.xpose.msra.mxu0 0
        %1052 = vmatprep.subr.bf16.mxu0 0
        %1053 = vmatpush1.bf16.xpose.msra.mxu0 0
        %1054 = vmatprep.subr.bf16.mxu0 0
        %1055 = vmatpush1.bf16.xpose.msra.mxu0 0
        %1056 = vmatprep.subr.bf16.mxu0 0
        %1057 = vmatpush1.bf16.xpose.msra.mxu0 0
        %1058 = vmatprep.subr.bf16.mxu0 0
        %1059 = vmatpush1.bf16.xpose.msra.mxu0 0
        %1060 = vmatprep.subr.bf16.mxu0 0
        %1061 = vmatpush1.bf16.xpose.msra.mxu0 0
        %1062 = vmatprep.subr.bf16.mxu0 0
        %1063 = vmatpush1.bf16.xpose.msra.mxu0 0
        %1064 = vmatprep.mubr.bf16.mxu0 0
        %1065 = vmatmul.mubr.bf16.gmra.mrb[0].mxu0 %v1027
        %v1066 = vpop.f32.mrb[0].mxu0
        %v1067 = vadd.f32 %v799, %v1066
        %v1068 = vpop.f32.mrb[0].mxu0
        %v1069 = vpop.f32.mrb[0].mxu0
        %v1070 = vpop.f32.mrb[0].mxu0
        %1071 = vdwg.mxu0
        %v1072 = vsel %vm802, %v1067, -inf
        %1073 = vmax.xlane.f32.xlu0 %v1072
        %v1074 = vpop.xlane.xlu0 %1073
        %v1075 = vsub.f32 %v1067, %v1074
        %v1076 = vmul.f32 %v1075, 1.442695
        %v1077 = vpow.pop %v1076
        %v1078 = vsel %vm802, %v1077, 0.0
        %1079 = vadd.xlane.f32.xlu0 %v1078
        %v1080 = vpop.xlane.xlu0 %1079
        %v1081 = vrcp.pop %v1080
        %v1082 = vmul.f32 %v1077, %v1081
        %v1083 = vpack.c.bf16 %v1082, %v1082
        %1084 = vrot.lane.b32.xlu0 %v801, 80
        %v1085 = vpop.permute.xlu0 %1084
        %v1087 = vsel %vm802, %v1083, 0
        %v1090 = vsel %vm867, %v1085, 0
        %1092 = vmatprep.subr.bf16.mxu0 0
        %1093 = vmatpush1.bf16.msra.mxu0 %v1090
        %1094 = vmatprep.subr.bf16.mxu0 0
        %1095 = vmatpush1.bf16.msra.mxu0 0
        %1096 = vmatprep.subr.bf16.mxu0 0
        %1097 = vmatpush1.bf16.msra.mxu0 0
        %1098 = vmatprep.subr.bf16.mxu0 0
        %1099 = vmatpush1.bf16.msra.mxu0 0
        %1100 = vmatprep.subr.bf16.mxu0 0
        %1101 = vmatpush1.bf16.msra.mxu0 0
        %1102 = vmatprep.subr.bf16.mxu0 0
        %1103 = vmatpush1.bf16.msra.mxu0 0
        %1104 = vmatprep.subr.bf16.mxu0 0
        %1105 = vmatpush1.bf16.msra.mxu0 0
        %1106 = vmatprep.subr.bf16.mxu0 0
        %1107 = vmatpush1.bf16.msra.mxu0 0
        %1108 = vmatprep.subr.bf16.mxu0 0
        %1109 = vmatpush1.bf16.msra.mxu0 0
        %1110 = vmatprep.subr.bf16.mxu0 0
        %1111 = vmatpush1.bf16.msra.mxu0 0
        %1112 = vmatprep.subr.bf16.mxu0 0
        %1113 = vmatpush1.bf16.msra.mxu0 0
        %1114 = vmatprep.subr.bf16.mxu0 0
        %1115 = vmatpush1.bf16.msra.mxu0 0
        %1116 = vmatprep.subr.bf16.mxu0 0
        %1117 = vmatpush1.bf16.msra.mxu0 0
        %1118 = vmatprep.subr.bf16.mxu0 0
        %1119 = vmatpush1.bf16.msra.mxu0 0
        %1120 = vmatprep.subr.bf16.mxu0 0
        %1121 = vmatpush1.bf16.msra.mxu0 0
        %1122 = vmatprep.subr.bf16.mxu0 0
        %1123 = vmatpush1.bf16.msra.mxu0 0
        %1124 = vmatprep.mubr.bf16.mxu0 0
        %1125 = vmatmul.mubr.bf16.gmra.mrb[0].mxu0 %v1087
        %v1126 = vpop.f32.mrb[0].mxu0
        %v1127 = vadd.f32 0.0, %v1126
        %v1128 = vpop.f32.mrb[0].mxu0
        %v1129 = vpop.f32.mrb[0].mxu0
        %v1130 = vpop.f32.mrb[0].mxu0
        %1131 = vdwg.mxu0
        %1132 = vrot.lane.b32.xlu0 %v800, 104
        %v1133 = vpop.permute.xlu0 %1132
        %1134 = vrot.lane.b32.xlu0 %v801, 104
        %v1135 = vpop.permute.xlu0 %1134
        %v1137 = vsel %vm802, %v1133, 0
        %v1140 = vsel %vm802, %v1135, 0
        %1142 = vmatprep.subr.bf16.mxu0 0
        %1143 = vmatpush1.bf16.xpose.msra.mxu0 %v1140
        %1144 = vmatprep.subr.bf16.mxu0 0
        %1145 = vmatpush1.bf16.xpose.msra.mxu0 0
        %1146 = vmatprep.subr.bf16.mxu0 0
        %1147 = vmatpush1.bf16.xpose.msra.mxu0 0
        %1148 = vmatprep.subr.bf16.mxu0 0
        %1149 = vmatpush1.bf16.xpose.msra.mxu0 0
        %1150 = vmatprep.subr.bf16.mxu0 0
        %1151 = vmatpush1.bf16.xpose.msra.mxu0 0
        %1152 = vmatprep.subr.bf16.mxu0 0
        %1153 = vmatpush1.bf16.xpose.msra.mxu0 0
        %1154 = vmatprep.subr.bf16.mxu0 0
        %1155 = vmatpush1.bf16.xpose.msra.mxu0 0
        %1156 = vmatprep.subr.bf16.mxu0 0
        %1157 = vmatpush1.bf16.xpose.msra.mxu0 0
        %1158 = vmatprep.subr.bf16.mxu0 0
        %1159 = vmatpush1.bf16.xpose.msra.mxu0 0
        %1160 = vmatprep.subr.bf16.mxu0 0
        %1161 = vmatpush1.bf16.xpose.msra.mxu0 0
        %1162 = vmatprep.subr.bf16.mxu0 0
        %1163 = vmatpush1.bf16.xpose.msra.mxu0 0
        %1164 = vmatprep.subr.bf16.mxu0 0
        %1165 = vmatpush1.bf16.xpose.msra.mxu0 0
        %1166 = vmatprep.subr.bf16.mxu0 0
        %1167 = vmatpush1.bf16.xpose.msra.mxu0 0
        %1168 = vmatprep.subr.bf16.mxu0 0
        %1169 = vmatpush1.bf16.xpose.msra.mxu0 0
        %1170 = vmatprep.subr.bf16.mxu0 0
        %1171 = vmatpush1.bf16.xpose.msra.mxu0 0
        %1172 = vmatprep.subr.bf16.mxu0 0
        %1173 = vmatpush1.bf16.xpose.msra.mxu0 0
        %1174 = vmatprep.mubr.bf16.mxu0 0
        %1175 = vmatmul.mubr.bf16.gmra.mrb[0].mxu0 %v1137
        %v1176 = vpop.f32.mrb[0].mxu0
        %v1177 = vadd.f32 %v799, %v1176
        %v1178 = vpop.f32.mrb[0].mxu0
        %v1179 = vpop.f32.mrb[0].mxu0
        %v1180 = vpop.f32.mrb[0].mxu0
        %1181 = vdwg.mxu0
        %v1182 = vsel %vm802, %v1177, -inf
        %1183 = vmax.xlane.f32.xlu0 %v1182
        %v1184 = vpop.xlane.xlu0 %1183
        %v1185 = vsub.f32 %v1177, %v1184
        %v1186 = vmul.f32 %v1185, 1.442695
        %v1187 = vpow.pop %v1186
        %v1188 = vsel %vm802, %v1187, 0.0
        %1189 = vadd.xlane.f32.xlu0 %v1188
        %v1190 = vpop.xlane.xlu0 %1189
        %v1191 = vrcp.pop %v1190
        %v1192 = vmul.f32 %v1187, %v1191
        %v1193 = vpack.c.bf16 %v1192, %v1192
        %1194 = vrot.lane.b32.xlu0 %v801, 72
        %v1195 = vpop.permute.xlu0 %1194
        %v1197 = vsel %vm802, %v1193, 0
        %v1200 = vsel %vm867, %v1195, 0
        %1202 = vmatprep.subr.bf16.mxu0 0
        %1203 = vmatpush1.bf16.msra.mxu0 %v1200
        %1204 = vmatprep.subr.bf16.mxu0 0
        %1205 = vmatpush1.bf16.msra.mxu0 0
        %1206 = vmatprep.subr.bf16.mxu0 0
        %1207 = vmatpush1.bf16.msra.mxu0 0
        %1208 = vmatprep.subr.bf16.mxu0 0
        %1209 = vmatpush1.bf16.msra.mxu0 0
        %1210 = vmatprep.subr.bf16.mxu0 0
        %1211 = vmatpush1.bf16.msra.mxu0 0
        %1212 = vmatprep.subr.bf16.mxu0 0
        %1213 = vmatpush1.bf16.msra.mxu0 0
        %1214 = vmatprep.subr.bf16.mxu0 0
        %1215 = vmatpush1.bf16.msra.mxu0 0
        %1216 = vmatprep.subr.bf16.mxu0 0
        %1217 = vmatpush1.bf16.msra.mxu0 0
        %1218 = vmatprep.subr.bf16.mxu0 0
        %1219 = vmatpush1.bf16.msra.mxu0 0
        %1220 = vmatprep.subr.bf16.mxu0 0
        %1221 = vmatpush1.bf16.msra.mxu0 0
        %1222 = vmatprep.subr.bf16.mxu0 0
        %1223 = vmatpush1.bf16.msra.mxu0 0
        %1224 = vmatprep.subr.bf16.mxu0 0
        %1225 = vmatpush1.bf16.msra.mxu0 0
        %1226 = vmatprep.subr.bf16.mxu0 0
        %1227 = vmatpush1.bf16.msra.mxu0 0
        %1228 = vmatprep.subr.bf16.mxu0 0
        %1229 = vmatpush1.bf16.msra.mxu0 0
        %1230 = vmatprep.subr.bf16.mxu0 0
        %1231 = vmatpush1.bf16.msra.mxu0 0
        %1232 = vmatprep.subr.bf16.mxu0 0
        %1233 = vmatpush1.bf16.msra.mxu0 0
        %1234 = vmatprep.mubr.bf16.mxu0 0
        %1235 = vmatmul.mubr.bf16.gmra.mrb[0].mxu0 %v1197
        %v1236 = vpop.f32.mrb[0].mxu0
        %v1237 = vadd.f32 0.0, %v1236
        %v1238 = vpop.f32.mrb[0].mxu0
        %v1239 = vpop.f32.mrb[0].mxu0
        %v1240 = vpop.f32.mrb[0].mxu0
        %1241 = vdwg.mxu0
        %1243 = vrot.lane.b32.xlu0 %v1017, 8
        %v1244 = vpop.permute.xlu0 %1243
        %1247 = vrot.lane.b32.xlu0 %v1127, 16
        %v1248 = vpop.permute.xlu0 %1247
        %1251 = vrot.lane.b32.xlu0 %v1237, 24
        %v1252 = vpop.permute.xlu0 %1251
        %v1254 = vsel %vm802, %v906, %v1244
        %vm1255 = vcmask 130048
        %v1256 = vsel %vm1255, %v1254, %v1248
        %vm1257 = vcmask 195584
        %v1258 = vsel %vm1257, %v1256, %v1252
        %v1259 = vpack.c.bf16 %v1258, %v1258
        %v1260 = vld [vmem:[#allocation17] sm:$0xf]
        %v1261 = vld [vmem:[#allocation17 + $0x4] sm:$0xf]
        %v1262 = vld [vmem:[#allocation17 + $0x8] sm:$0xf]
        %v1263 = vld [vmem:[#allocation17 + $0xc] sm:$0xf]
        %v1264 = vld [vmem:[#allocation19] sm:$0x1]
        %v1266 = vlaneseq
        %v1267 = vshrl.u32 %v1266, 7
        %v1268 = vsub.s32 0, %v1267
        %v1269 = vrot.slane %v1264, %v1268
        %v1275 = vunpack.c.l.b16 %v1260
        %v1276 = vunpack.c.l.b16 %v1261
        %v1277 = vunpack.c.l.b16 %v1262
        %v1278 = vunpack.c.l.b16 %v1263
        %v1279 = vpack.c.b16 %v1276, %v1275
        %v1280 = vpack.c.b16 %v1278, %v1277
        %v1284 = vsel %vm604, %v1259, 0
        %1286 = vmatprep.subr.bf16.mxu0 0
        %1287 = vmatpush1.bf16.msra.mxu0 %v1279
        %1288 = vmatprep.subr.bf16.mxu0 0
        %1289 = vmatpush1.bf16.msra.mxu0 %v1280
        %1290 = vmatprep.subr.bf16.mxu0 0
        %1291 = vmatpush1.bf16.msra.mxu0 0
        %1292 = vmatprep.subr.bf16.mxu0 0
        %1293 = vmatpush1.bf16.msra.mxu0 0
        %1294 = vmatprep.subr.bf16.mxu0 0
        %1295 = vmatpush1.bf16.msra.mxu0 0
        %1296 = vmatprep.subr.bf16.mxu0 0
        %1297 = vmatpush1.bf16.msra.mxu0 0
        %1298 = vmatprep.subr.bf16.mxu0 0
        %1299 = vmatpush1.bf16.msra.mxu0 0
        %1300 = vmatprep.subr.bf16.mxu0 0
        %1301 = vmatpush1.bf16.msra.mxu0 0
        %1302 = vmatprep.subr.bf16.mxu0 0
        %1303 = vmatpush1.bf16.msra.mxu0 0
        %1304 = vmatprep.subr.bf16.mxu0 0
        %1305 = vmatpush1.bf16.msra.mxu0 0
        %1306 = vmatprep.subr.bf16.mxu0 0
        %1307 = vmatpush1.bf16.msra.mxu0 0
        %1308 = vmatprep.subr.bf16.mxu0 0
        %1309 = vmatpush1.bf16.msra.mxu0 0
        %1310 = vmatprep.subr.bf16.mxu0 0
        %1311 = vmatpush1.bf16.msra.mxu0 0
        %1312 = vmatprep.subr.bf16.mxu0 0
        %1313 = vmatpush1.bf16.msra.mxu0 0
        %1314 = vmatprep.subr.bf16.mxu0 0
        %1315 = vmatpush1.bf16.msra.mxu0 0
        %1316 = vmatprep.subr.bf16.mxu0 0
        %1317 = vmatpush1.bf16.msra.mxu0 0
        %1318 = vmatprep.mubr.bf16.mxu0 0
        %1319 = vmatmul.mubr.bf16.gmra.mrb[0].mxu0 %v1284
        %v1320 = vpop.f32.mrb[0].mxu0
        %v1321 = vadd.f32 %v1269, %v1320
        %v1322 = vpop.f32.mrb[0].mxu0
        %v1323 = vpop.f32.mrb[0].mxu0
        %v1324 = vpop.f32.mrb[0].mxu0
        %1325 = vdwg.mxu0
        %v1326 = vadd.f32 %v600, %v1321
        %1327 = vst.msk [vmem:[%s598] sm:$0xff] %vm604, %v1326
        %s1328 = sand.u32 %s307, 1
        %s1329 = scalar_lea.sflag [#allocation4], %s1328
        %s1330 = sand.u32 %s307, 1
        %s1331 = smul.addr %s1330, 8
        %s1332 = scalar_lea.vmem [#allocation20], %s1331
        // Predicated region
        $region109: #{_decoder_forward_jit.6} parent=63 // pred_check
          %p1333 = pneg %p317
        $region110: #{_decoder_forward_jit.6} parent=63 // pred_check_branch
          %1335 = sbr.rel (%p1333) target = $region112
        $region111: #{_decoder_forward_jit.6} parent=63 // pred_region
          %s1337 = ssub.s32 128, 128
          %1338 = vsyncadd %s1329, %s1337
          %s1339 = sadd.s32 %s40, %s39
          %s1340 = smul.addr %s1339, 128
          %s1341 = scalar_lea.hbm %s11, %s1340
          %s1343 = sshll.u32 %s1332, 4
          %s1344 = int_to_ptr.vmem [resolvable:$true] %s1343
          %1346 = dma.vmem_to_hbm [thread:$0]  %s1344, 128, %s1341, %s1329
        $region112: #{_decoder_forward_jit.6} parent=63 // pred_fallthru
          _
      $region64: #{_decoder_forward_jit.6} parent=5 // pred_fallthru
        _
      %p1347 = scmp.le.s32.totalorder 2, %s30
      // Predicated region
      $region113: #{_decoder_forward_jit.6} parent=5 // pred_check
        %p1348 = pneg %p1347
      $region114: #{_decoder_forward_jit.6} parent=5 // pred_check_branch
        %1350 = sbr.rel (%p1348) target = $region116
      $region115: #{_decoder_forward_jit.6} parent=5 // pred_region
        %s1351 = ssub.s32 %s30, 2
        // Predicated region
        $region117: #{_decoder_forward_jit.6} parent=115 // pred_check
          %p1352 = pneg %p323
        $region118: #{_decoder_forward_jit.6} parent=115 // pred_check_branch
          %1354 = sbr.rel (%p1352) target = $region120
        $region119: #{_decoder_forward_jit.6} parent=115 // pred_region
          %s1355 = sand.u32 %s308, 1
          %s1356 = scalar_lea.sflag [#allocation4], %s1355
          %s1357 = sand.u32 %s308, 1
          %s1358 = smul.addr %s1357, 8
          %s1359 = scalar_lea.vmem [#allocation20], %s1358
          %1360 = dma.done %s1356, 128
        $region120: #{_decoder_forward_jit.6} parent=115 // pred_fallthru
          _
      $region116: #{_decoder_forward_jit.6} parent=5 // pred_fallthru
        _
    $region6: #{_decoder_forward_jit.6} parent=1 // loop_footer
      %s34 = sadd.s32 1, %s30
    $region7: #{_decoder_forward_jit.6} parent=1 // loop_footer_branch
      %29 = sbr.rel target = $region3
    $region8: #{_decoder_forward_jit.6} parent=1 // loop_exit
      _
    %1361 = vsyncpa [#allocation3], 1
    %s1362 = scalar_lea.sflag [#allocation3], 1
    %1363 = vsyncpa %s1362, 1
    %1364 = vsyncpa [#allocation6], 1
    %s1365 = scalar_lea.sflag [#allocation6], 1
    %1366 = vsyncpa %s1365, 1
    %1367 = vsyncpa [#allocation9], 1
    %1368 = vsyncpa [#allocation12], 1
    %1369 = vsyncpa [#allocation15], 1
    %1370 = vsyncpa [#allocation18], 1
    %1371 = vsyncpa [#allocation4], 1
    %s1372 = scalar_lea.sflag [#allocation4], 1
    %1373 = vsyncpa %s1372, 1

</llo_original>
